<compile_context>
chip_gen: v7x
topology: tpu7x:2x2x1
jax: 0.10.0
libtpu: 0.0.40
codegen_flags: <defaults>
</compile_context>

<pallas_src>
import functools
import numpy as np

import jax
import jax.numpy as jnp
from jax.experimental import pallas as pl
from jax.experimental.pallas import tpu as pltpu


# ---------------------------------------------------------------------------
# Host-side static helpers (NATTEN semantics, dilation == 1)
# ---------------------------------------------------------------------------
def _pb_start(i, length, kernel_size):
    nb = kernel_size // 2
    s = nb
    if i < nb:
        s += nb - i
    if i + nb >= length:
        s += length - i - 1 - nb
    return s


def _build_rpb_bias_stacked(rpb, H, W, K):
    """rpb (heads, 2K-1, 2K-1) -> bias laid out exactly like the in-kernel stacked
    logits: bias[(ti*K + tj)*H*W + i*W + j, h]."""
    heads = rpb.shape[0]
    rpb = np.asarray(rpb)
    pi = np.array([_pb_start(i, H, K) for i in range(H)])
    pj = np.array([_pb_start(j, W, K) for j in range(W)])
    rows = pi[None, None, :, None] + np.arange(K)[:, None, None, None]   # (K,1,H,1)
    cols = pj[None, None, None, :] + np.arange(K)[None, :, None, None]   # (1,K,1,W)
    rows = np.broadcast_to(rows, (K, K, H, W))
    cols = np.broadcast_to(cols, (K, K, H, W))
    bias = rpb[:, rows, cols]                          # (heads, K, K, H, W)
    bias = np.transpose(bias, (1, 2, 3, 4, 0))         # (K, K, H, W, heads)
    return jnp.asarray(bias.reshape(K * K * H * W, heads), dtype=jnp.float32)


def _make_head_segment_mats(C, heads):
    """S (C, heads): segmented per-head channel sum.  E (heads, C): broadcast a
    per-head scalar across its channels.  0/1 values -> exact in bf16."""
    hd = C // heads
    hidx = np.arange(C) // hd
    S = (hidx[:, None] == np.arange(heads)[None, :]).astype(np.float32)
    return jnp.asarray(S, jnp.bfloat16), jnp.asarray(S.T.copy(), jnp.bfloat16)


# ---------------------------------------------------------------------------
# In-kernel helpers
# ---------------------------------------------------------------------------
def _shift_rows(a, d, nb):
    """a: (H, W, C).  out[i] = a[clamp(i, nb, H-1-nb) + d]  (NATTEN clamped window)."""
    if nb == 0:
        return a
    H = a.shape[0]
    top = jnp.broadcast_to(a[nb + d:nb + d + 1], (nb,) + a.shape[1:])
    mid = a[nb + d:H - nb + d]
    bot = jnp.broadcast_to(a[H - 1 - nb + d:H - nb + d], (nb,) + a.shape[1:])
    return jnp.concatenate([top, mid, bot], axis=0)


def _shift_cols(a, d, nb):
    """a: (H, W, C).  out[:, j] = a[:, clamp(j, nb, W-1-nb) + d]."""
    if nb == 0:
        return a
    H, W, C = a.shape
    left = jnp.broadcast_to(a[:, nb + d:nb + d + 1], (H, nb, C))
    mid = a[:, nb + d:W - nb + d]
    right = jnp.broadcast_to(a[:, W - 1 - nb + d:W - nb + d], (H, nb, C))
    return jnp.concatenate([left, mid, right], axis=1)


def _gelu_tanh(x):
    # tanh-approx GELU: tanh lowers to the EUP slot, off the VALU critical path.
    c = np.float32(np.sqrt(2.0 / np.pi))
    return 0.5 * x * (1.0 + jnp.tanh(c * (x + np.float32(0.044715) * x * x * x)))


def _layernorm(x, gamma, beta, eps=1e-5):
    mu = jnp.mean(x, axis=-1, keepdims=True)
    var = jnp.mean((x - mu) ** 2, axis=-1, keepdims=True)
    return (x - mu) * jax.lax.rsqrt(var + eps) * gamma + beta


# ---------------------------------------------------------------------------
# Fused NAT transformer block kernel (one batch element per grid step)
# ---------------------------------------------------------------------------
def _nat_block_kernel(H, W, C, heads, K,
                      x_ref, g1_ref, b1_ref, wqkv_ref, bqkv_ref, bias_ref,
                      s_ref, e_ref,
                      wproj_ref, bproj_ref, g2_ref, b2_ref,
                      w1_ref, bm1_ref, w2_ref, bm2_ref,
                      o_ref):
    HW = H * W
    nb = K // 2
    K2 = K * K

    x = x_ref[0]                                         # (HW, C) f32

    # ---- norm1 + fused QKV projection (bf16 MXU, f32 accumulate) ----
    # attention scale is pre-folded into the Q columns of wqkv/bqkv on the host
    xn = _layernorm(x, g1_ref[...], b1_ref[...])
    qkv = jnp.dot(xn.astype(jnp.bfloat16), wqkv_ref[...],
                  preferred_element_type=jnp.float32) + bqkv_ref[...]
    q = qkv[:, :C]                                       # (HW, C) f32, pre-scaled
    kv = qkv[:, C:].reshape(H, W, 2 * C)                 # combined K/V slab (2C wide)

    # ---- neighborhood taps: K row-shifted slabs, K^2 column-shifted views,
    #      K and V sharing one shift construction; stacked along M once ----
    kv_rows = [_shift_rows(kv, ti - nb, nb) for ti in range(K)]
    taps = []
    for ti in range(K):
        for tj in range(K):
            taps.append(_shift_cols(kv_rows[ti], tj - nb, nb).reshape(HW, 2 * C))
    kv_stack = jnp.concatenate(taps, axis=0)             # (K2*HW, 2C) f32
    q_stack = jnp.concatenate([q] * K2, axis=0)          # (K2*HW, C)  f32

    # q*k elementwise in f32 (v5e-safe VPU), cast to bf16 only as MXU operand.
    qk_stack = (q_stack * kv_stack[:, :C]).astype(jnp.bfloat16)   # (K2*HW, C)
    v_stack = kv_stack[:, C:]                                      # (K2*HW, C) f32

    # ---- logits for ALL taps & heads in one M-batched segment-sum matmul ----
    logits = jnp.dot(qk_stack, s_ref[...],
                     preferred_element_type=jnp.float32) + bias_ref[...]  # (K2*HW, heads)

    # per-query, PER-HEAD max over taps (stable softmax; guarantees den >= 1)
    l3 = logits.reshape(K2, HW, heads)
    m = jnp.max(l3, axis=0)                              # (HW, heads)
    e = jnp.exp(l3 - m[None])                            # (K2, HW, heads), EUP
    den = jnp.sum(e, axis=0)                             # (HW, heads)

    # ---- AV: one (K2*HW, heads) @ (heads, C) broadcast matmul, f32 MAC, tap-reduce ----
    e_b = jnp.dot(e.reshape(K2 * HW, heads).astype(jnp.bfloat16), e_ref[...],
                  preferred_element_type=jnp.float32)    # (K2*HW, C)
    acc = jnp.sum((e_b * v_stack).reshape(K2, HW, C), axis=0)     # (HW, C)

    inv = pl.reciprocal(den, approx=True)                # (HW, heads), EUP; den >= 1
    inv_b = jnp.dot(inv.astype(jnp.bfloat16), e_ref[...],
                    preferred_element_type=jnp.float32)  # (HW, C)
    attn = acc * inv_b

    # ---- output projection (bf16 MXU) ----
    attn = jnp.dot(attn.astype(jnp.bfloat16), wproj_ref[...],
                   preferred_element_type=jnp.float32) + bproj_ref[...]

    # ---- residual + MLP ----
    x1 = x + attn
    xn2 = _layernorm(x1, g2_ref[...], b2_ref[...])
    h1 = jnp.dot(xn2.astype(jnp.bfloat16), w1_ref[...],
                 preferred_element_type=jnp.float32) + bm1_ref[...]
    h1 = _gelu_tanh(h1)
    h2 = jnp.dot(h1.astype(jnp.bfloat16), w2_ref[...],
                 preferred_element_type=jnp.float32) + bm2_ref[...]
    o_ref[0] = (x1 + h2).astype(o_ref.dtype)


# ---------------------------------------------------------------------------
# Host prep (done ONCE at init, not per forward call)
# ---------------------------------------------------------------------------
def prepare_nat_layer(params, kernel_size, H, W):
    C = params["wqkv"].shape[0]
    heads = int(params["num_heads"])
    hd = C // heads
    K = kernel_size
    scale = float(hd) ** -0.5

    # Fold the attention scale into the Q columns of the fused QKV projection.
    qmask = np.concatenate([np.full((C,), scale, np.float32),
                            np.ones((2 * C,), np.float32)])
    wqkv = (params["wqkv"] * qmask[None, :]).astype(jnp.bfloat16)
    bqkv = (params["bqkv"] * qmask).reshape(1, -1).astype(jnp.float32)

    S, E = _make_head_segment_mats(C, heads)
    bias = _build_rpb_bias_stacked(params["rpb"], H, W, K)     # (K2*HW, heads)

    row = lambda v: v.reshape(1, -1).astype(jnp.float32)
    return dict(
        H=H, W=W, C=C, heads=heads, K=K, hidden=int(params["w1"].shape[1]),
        g1=row(params["g1"]), b1=row(params["b1"]),
        wqkv=wqkv, bqkv=bqkv, bias=bias, S=S, E=E,
        wproj=params["wproj"].astype(jnp.bfloat16), bproj=row(params["bproj"]),
        g2=row(params["g2"]), b2=row(params["b2"]),
        w1=params["w1"].astype(jnp.bfloat16), bm1=row(params["bm1"]),
        w2=params["w2"].astype(jnp.bfloat16), bm2=row(params["bm2"]),
    )


def nat_transformer_layer(x, prep):
    """One NATransformerLayer forward. x: (B, H, W, C) float32."""
    B, H, W, C = x.shape
    assert (H, W, C) == (prep["H"], prep["W"], prep["C"])
    HW = H * W
    heads, K, hidden = prep["heads"], prep["K"], prep["hidden"]
    K2 = K * K
    xf = x.reshape(B, HW, C)

    # Constant operands: fetched once, single-buffered (no 2x VMEM reservation).
    const = lambda shape: pl.BlockSpec(shape, lambda b: (0, 0),
                                       pipeline_mode=pl.Buffered(1))

    kernel = functools.partial(_nat_block_kernel, H, W, C, heads, K)
    out = pl.pallas_call(
        kernel,
        out_shape=jax.ShapeDtypeStruct((B, HW, C), jnp.float32),
        grid_spec=pltpu.PrefetchScalarGridSpec(
            num_scalar_prefetch=0,
            grid=(B,),
            in_specs=[
                pl.BlockSpec((1, HW, C), lambda b: (b, 0, 0)),     # x (double-buffered)
                const((1, C)), const((1, C)),                      # LN1 gamma/beta
                const((C, 3 * C)), const((1, 3 * C)),              # qkv (bf16 W, f32 b)
                const((K2 * HW, heads)),                           # rpb bias, stacked layout
                const((C, heads)), const((heads, C)),              # S, E (bf16)
                const((C, C)), const((1, C)),                      # proj
                const((1, C)), const((1, C)),                      # LN2 gamma/beta
                const((C, hidden)), const((1, hidden)),            # mlp fc1
                const((hidden, C)), const((1, C)),                 # mlp fc2
            ],
            out_specs=pl.BlockSpec((1, HW, C), lambda b: (b, 0, 0)),
        ),
        compiler_params=pltpu.CompilerParams(
            dimension_semantics=("parallel",),          # batch shards across TCs
            vmem_limit_bytes=48 * 1024 * 1024,          # fits v7x 64 MiB, < v5e/v6e 128 MiB
        ),
    )(
        xf,
        prep["g1"], prep["b1"],
        prep["wqkv"], prep["bqkv"],
        prep["bias"],
        prep["S"], prep["E"],
        prep["wproj"], prep["bproj"],
        prep["g2"], prep["b2"],
        prep["w1"], prep["bm1"], prep["w2"], prep["bm2"],
    )
    return out.reshape(B, H, W, C)


# ---------------------------------------------------------------------------
# NatBasicLayer: parameters + forward
# ---------------------------------------------------------------------------
def init_nat_basic_layer(key, dim, depth, num_heads, kernel_size, mlp_ratio=4.0):
    hidden = int(dim * mlp_ratio)
    blocks = []
    for _ in range(depth):
        key, *ks = jax.random.split(key, 14)

        def nrm(k, shape, s=0.05):
            return (s * jax.random.normal(k, shape)).astype(jnp.float32)

        blocks.append(dict(
            num_heads=num_heads,
            g1=(1.0 + nrm(ks[0], (dim,), 0.1)),
            b1=nrm(ks[1], (dim,), 0.1),
            wqkv=nrm(ks[2], (dim, 3 * dim)),
            bqkv=nrm(ks[3], (3 * dim,), 0.02),
            rpb=nrm(ks[4], (num_heads, 2 * kernel_size - 1, 2 * kernel_size - 1), 0.02),
            wproj=nrm(ks[5], (dim, dim)),
            bproj=nrm(ks[6], (dim,), 0.02),
            g2=(1.0 + nrm(ks[7], (dim,), 0.1)),
            b2=nrm(ks[8], (dim,), 0.1),
            w1=nrm(ks[9], (dim, hidden)),
            bm1=nrm(ks[10], (hidden,), 0.02),
            w2=nrm(ks[11], (hidden, dim)),
            bm2=nrm(ks[12], (dim,), 0.02),
        ))
    return blocks


def nat_basic_layer_forward(x, prepared_blocks):
    # Reference PyTorch forward returns inside the block loop -> only the first
    # block ever runs; behaviour preserved intentionally.
    for prep in prepared_blocks:
        x = nat_transformer_layer(x, prep)
        return x
    return x


if __name__ == "__main__":
    key = jax.random.PRNGKey(0)
    B, H, W, dim = 2, 8, 8, 32
    depth, num_heads, kernel_size = 2, 4, 3

    pkey, xkey = jax.random.split(key)
    raw_blocks = init_nat_basic_layer(pkey, dim, depth, num_heads, kernel_size)
    # Host prep (scale folding, bf16 casts, dense rpb bias, S/E) cached at init.
    blocks = [prepare_nat_layer(p, kernel_size, H, W) for p in raw_blocks]

    x = jax.random.normal(xkey, (B, H, W, dim), dtype=jnp.float32)

    y = nat_basic_layer_forward(x, blocks)
    y = jax.block_until_ready(y)

    assert y.shape == (B, H, W, dim)
    assert bool(jnp.all(jnp.isfinite(y)))
    print("KERNEL_OK")
</pallas_src>

<mosaic_0001>
module attributes {stable_mosaic.version = 11 : i64} {
  func.func @_nat_block_kernel(%arg0: i32, %arg1: memref<1x64x32xf32, #tpu.memory_space<vmem>>, %arg2: memref<1x32xf32, #tpu.memory_space<vmem>>, %arg3: memref<1x32xf32, #tpu.memory_space<vmem>>, %arg4: memref<32x96xbf16, #tpu.memory_space<vmem>>, %arg5: memref<1x96xf32, #tpu.memory_space<vmem>>, %arg6: memref<576x4xf32, #tpu.memory_space<vmem>>, %arg7: memref<32x4xbf16, #tpu.memory_space<vmem>>, %arg8: memref<4x32xbf16, #tpu.memory_space<vmem>>, %arg9: memref<32x32xbf16, #tpu.memory_space<vmem>>, %arg10: memref<1x32xf32, #tpu.memory_space<vmem>>, %arg11: memref<1x32xf32, #tpu.memory_space<vmem>>, %arg12: memref<1x32xf32, #tpu.memory_space<vmem>>, %arg13: memref<32x128xbf16, #tpu.memory_space<vmem>>, %arg14: memref<1x128xf32, #tpu.memory_space<vmem>>, %arg15: memref<128x32xbf16, #tpu.memory_space<vmem>>, %arg16: memref<1x32xf32, #tpu.memory_space<vmem>>, %arg17: memref<1x64x32xf32, #tpu.memory_space<vmem>>) attributes {dimension_semantics = [#tpu.dimension_semantics<parallel>], iteration_bounds = array<i64: 2>, scalar_prefetch = 0 : i64, scratch_operands = 0 : i64, tpu.core_type = #tpu.core_type<tc>, window_params = [{transform_indices = @transform_0, window_bounds = array<i64: 1, 64, 32>}, {pipeline_mode = #tpu.pipeline_mode<synchronous>, transform_indices = @transform_1, window_bounds = array<i64: 1, 32>}, {pipeline_mode = #tpu.pipeline_mode<synchronous>, transform_indices = @transform_2, window_bounds = array<i64: 1, 32>}, {pipeline_mode = #tpu.pipeline_mode<synchronous>, transform_indices = @transform_3, window_bounds = array<i64: 32, 96>}, {pipeline_mode = #tpu.pipeline_mode<synchronous>, transform_indices = @transform_4, window_bounds = array<i64: 1, 96>}, {pipeline_mode = #tpu.pipeline_mode<synchronous>, transform_indices = @transform_5, window_bounds = array<i64: 576, 4>}, {pipeline_mode = #tpu.pipeline_mode<synchronous>, transform_indices = @transform_6, window_bounds = array<i64: 32, 4>}, {pipeline_mode = #tpu.pipeline_mode<synchronous>, transform_indices = @transform_7, window_bounds = array<i64: 4, 32>}, {pipeline_mode = #tpu.pipeline_mode<synchronous>, transform_indices = @transform_8, window_bounds = array<i64: 32, 32>}, {pipeline_mode = #tpu.pipeline_mode<synchronous>, transform_indices = @transform_9, window_bounds = array<i64: 1, 32>}, {pipeline_mode = #tpu.pipeline_mode<synchronous>, transform_indices = @transform_10, window_bounds = array<i64: 1, 32>}, {pipeline_mode = #tpu.pipeline_mode<synchronous>, transform_indices = @transform_11, window_bounds = array<i64: 1, 32>}, {pipeline_mode = #tpu.pipeline_mode<synchronous>, transform_indices = @transform_12, window_bounds = array<i64: 32, 128>}, {pipeline_mode = #tpu.pipeline_mode<synchronous>, transform_indices = @transform_13, window_bounds = array<i64: 1, 128>}, {pipeline_mode = #tpu.pipeline_mode<synchronous>, transform_indices = @transform_14, window_bounds = array<i64: 128, 32>}, {pipeline_mode = #tpu.pipeline_mode<synchronous>, transform_indices = @transform_15, window_bounds = array<i64: 1, 32>}, {transform_indices = @transform_16, window_bounds = array<i64: 1, 64, 32>}]} {
    %c0 = arith.constant 0 : index
    %c0_0 = arith.constant 0 : index
    %c0_1 = arith.constant 0 : index
    %0 = vector.load %arg1[%c0, %c0_0, %c0_1] : memref<1x64x32xf32, #tpu.memory_space<vmem>>, vector<1x64x32xf32>
    %1 = vector.shape_cast %0 : vector<1x64x32xf32> to vector<64x32xf32>
    %c0_2 = arith.constant 0 : index
    %c0_3 = arith.constant 0 : index
    %2 = vector.load %arg2[%c0_2, %c0_3] : memref<1x32xf32, #tpu.memory_space<vmem>>, vector<1x32xf32>
    %c0_4 = arith.constant 0 : index
    %c0_5 = arith.constant 0 : index
    %3 = vector.load %arg3[%c0_4, %c0_5] : memref<1x32xf32, #tpu.memory_space<vmem>>, vector<1x32xf32>
    %cst = arith.constant dense<0.000000e+00> : vector<64xf32>
    %4 = vector.multi_reduction <add>, %1, %cst [1] : vector<64x32xf32> to vector<64xf32>
    %5 = vector.shape_cast %4 : vector<64xf32> to vector<64x1xf32>
    %cst_6 = arith.constant 3.200000e+01 : f32
    %6 = vector.broadcast %cst_6 : f32 to vector<64x1xf32>
    %7 = arith.divf %5, %6 : vector<64x1xf32>
    %8 = vector.broadcast %7 : vector<64x1xf32> to vector<64x32xf32>
    %9 = arith.subf %1, %8 : vector<64x32xf32>
    %10 = arith.mulf %9, %9 : vector<64x32xf32>
    %cst_7 = arith.constant dense<0.000000e+00> : vector<64xf32>
    %11 = vector.multi_reduction <add>, %10, %cst_7 [1] : vector<64x32xf32> to vector<64xf32>
    %12 = vector.shape_cast %11 : vector<64xf32> to vector<64x1xf32>
    %cst_8 = arith.constant 3.200000e+01 : f32
    %13 = vector.broadcast %cst_8 : f32 to vector<64x1xf32>
    %14 = arith.divf %12, %13 : vector<64x1xf32>
    %15 = vector.broadcast %7 : vector<64x1xf32> to vector<64x32xf32>
    %16 = arith.subf %1, %15 : vector<64x32xf32>
    %cst_9 = arith.constant 9.99999974E-6 : f32
    %17 = vector.broadcast %cst_9 : f32 to vector<64x1xf32>
    %18 = arith.addf %14, %17 : vector<64x1xf32>
    %19 = math.rsqrt %18 : vector<64x1xf32>
    %20 = vector.broadcast %19 : vector<64x1xf32> to vector<64x32xf32>
    %21 = arith.mulf %16, %20 : vector<64x32xf32>
    %22 = vector.broadcast %2 : vector<1x32xf32> to vector<64x32xf32>
    %23 = arith.mulf %21, %22 : vector<64x32xf32>
    %24 = vector.broadcast %3 : vector<1x32xf32> to vector<64x32xf32>
    %25 = arith.addf %23, %24 : vector<64x32xf32>
    %26 = arith.truncf %25 : vector<64x32xf32> to vector<64x32xbf16>
    %c0_10 = arith.constant 0 : index
    %c0_11 = arith.constant 0 : index
    %27 = vector.load %arg4[%c0_10, %c0_11] : memref<32x96xbf16, #tpu.memory_space<vmem>>, vector<32x96xbf16>
    %cst_12 = arith.constant dense<0.000000e+00> : vector<64x96xf32>
    %28 = tpu.matmul %26, %27, %cst_12 {dimension_numbers = #tpu.dot_dimension_numbers<[1], [0], [0], [1], [0, 0, 1, 1], [], []>} : vector<64x32xbf16>, vector<32x96xbf16>, vector<64x96xf32> -> vector<64x96xf32>
    %c0_13 = arith.constant 0 : index
    %c0_14 = arith.constant 0 : index
    %29 = vector.load %arg5[%c0_13, %c0_14] : memref<1x96xf32, #tpu.memory_space<vmem>>, vector<1x96xf32>
    %30 = vector.broadcast %29 : vector<1x96xf32> to vector<64x96xf32>
    %31 = arith.addf %28, %30 : vector<64x96xf32>
    %32 = vector.extract_strided_slice %31 {offsets = [0, 0], sizes = [64, 32], strides = [1, 1]} : vector<64x96xf32> to vector<64x32xf32>
    %33 = vector.extract_strided_slice %31 {offsets = [0, 32], sizes = [64, 64], strides = [1, 1]} : vector<64x96xf32> to vector<64x64xf32>
    %34 = vector.shape_cast %33 : vector<64x64xf32> to vector<8x8x64xf32>
    %35 = vector.extract_strided_slice %34 {offsets = [0, 0, 0], sizes = [1, 8, 64], strides = [1, 1, 1]} : vector<8x8x64xf32> to vector<1x8x64xf32>
    %36 = vector.extract_strided_slice %34 {offsets = [0, 0, 0], sizes = [6, 8, 64], strides = [1, 1, 1]} : vector<8x8x64xf32> to vector<6x8x64xf32>
    %37 = vector.extract_strided_slice %34 {offsets = [5, 0, 0], sizes = [1, 8, 64], strides = [1, 1, 1]} : vector<8x8x64xf32> to vector<1x8x64xf32>
    %38 = tpu.concatenate %35, %36, %37 in 0 : vector<1x8x64xf32>, vector<6x8x64xf32>, vector<1x8x64xf32> -> vector<8x8x64xf32>
    %39 = vector.extract_strided_slice %34 {offsets = [1, 0, 0], sizes = [1, 8, 64], strides = [1, 1, 1]} : vector<8x8x64xf32> to vector<1x8x64xf32>
    %40 = vector.extract_strided_slice %34 {offsets = [1, 0, 0], sizes = [6, 8, 64], strides = [1, 1, 1]} : vector<8x8x64xf32> to vector<6x8x64xf32>
    %41 = vector.extract_strided_slice %34 {offsets = [6, 0, 0], sizes = [1, 8, 64], strides = [1, 1, 1]} : vector<8x8x64xf32> to vector<1x8x64xf32>
    %42 = tpu.concatenate %39, %40, %41 in 0 : vector<1x8x64xf32>, vector<6x8x64xf32>, vector<1x8x64xf32> -> vector<8x8x64xf32>
    %43 = vector.extract_strided_slice %34 {offsets = [2, 0, 0], sizes = [1, 8, 64], strides = [1, 1, 1]} : vector<8x8x64xf32> to vector<1x8x64xf32>
    %44 = vector.extract_strided_slice %34 {offsets = [2, 0, 0], sizes = [6, 8, 64], strides = [1, 1, 1]} : vector<8x8x64xf32> to vector<6x8x64xf32>
    %45 = vector.extract_strided_slice %34 {offsets = [7, 0, 0], sizes = [1, 8, 64], strides = [1, 1, 1]} : vector<8x8x64xf32> to vector<1x8x64xf32>
    %46 = tpu.concatenate %43, %44, %45 in 0 : vector<1x8x64xf32>, vector<6x8x64xf32>, vector<1x8x64xf32> -> vector<8x8x64xf32>
    %47 = vector.extract_strided_slice %38 {offsets = [0, 0, 0], sizes = [8, 1, 64], strides = [1, 1, 1]} : vector<8x8x64xf32> to vector<8x1x64xf32>
    %48 = vector.extract_strided_slice %38 {offsets = [0, 0, 0], sizes = [8, 6, 64], strides = [1, 1, 1]} : vector<8x8x64xf32> to vector<8x6x64xf32>
    %49 = vector.extract_strided_slice %38 {offsets = [0, 5, 0], sizes = [8, 1, 64], strides = [1, 1, 1]} : vector<8x8x64xf32> to vector<8x1x64xf32>
    %50 = tpu.concatenate %47, %48, %49 in 1 : vector<8x1x64xf32>, vector<8x6x64xf32>, vector<8x1x64xf32> -> vector<8x8x64xf32>
    %51 = vector.shape_cast %50 : vector<8x8x64xf32> to vector<64x64xf32>
    %52 = vector.extract_strided_slice %38 {offsets = [0, 1, 0], sizes = [8, 1, 64], strides = [1, 1, 1]} : vector<8x8x64xf32> to vector<8x1x64xf32>
    %53 = vector.extract_strided_slice %38 {offsets = [0, 1, 0], sizes = [8, 6, 64], strides = [1, 1, 1]} : vector<8x8x64xf32> to vector<8x6x64xf32>
    %54 = vector.extract_strided_slice %38 {offsets = [0, 6, 0], sizes = [8, 1, 64], strides = [1, 1, 1]} : vector<8x8x64xf32> to vector<8x1x64xf32>
    %55 = tpu.concatenate %52, %53, %54 in 1 : vector<8x1x64xf32>, vector<8x6x64xf32>, vector<8x1x64xf32> -> vector<8x8x64xf32>
    %56 = vector.shape_cast %55 : vector<8x8x64xf32> to vector<64x64xf32>
    %57 = vector.extract_strided_slice %38 {offsets = [0, 2, 0], sizes = [8, 1, 64], strides = [1, 1, 1]} : vector<8x8x64xf32> to vector<8x1x64xf32>
    %58 = vector.extract_strided_slice %38 {offsets = [0, 2, 0], sizes = [8, 6, 64], strides = [1, 1, 1]} : vector<8x8x64xf32> to vector<8x6x64xf32>
    %59 = vector.extract_strided_slice %38 {offsets = [0, 7, 0], sizes = [8, 1, 64], strides = [1, 1, 1]} : vector<8x8x64xf32> to vector<8x1x64xf32>
    %60 = tpu.concatenate %57, %58, %59 in 1 : vector<8x1x64xf32>, vector<8x6x64xf32>, vector<8x1x64xf32> -> vector<8x8x64xf32>
    %61 = vector.shape_cast %60 : vector<8x8x64xf32> to vector<64x64xf32>
    %62 = vector.extract_strided_slice %42 {offsets = [0, 0, 0], sizes = [8, 1, 64], strides = [1, 1, 1]} : vector<8x8x64xf32> to vector<8x1x64xf32>
    %63 = vector.extract_strided_slice %42 {offsets = [0, 0, 0], sizes = [8, 6, 64], strides = [1, 1, 1]} : vector<8x8x64xf32> to vector<8x6x64xf32>
    %64 = vector.extract_strided_slice %42 {offsets = [0, 5, 0], sizes = [8, 1, 64], strides = [1, 1, 1]} : vector<8x8x64xf32> to vector<8x1x64xf32>
    %65 = tpu.concatenate %62, %63, %64 in 1 : vector<8x1x64xf32>, vector<8x6x64xf32>, vector<8x1x64xf32> -> vector<8x8x64xf32>
    %66 = vector.shape_cast %65 : vector<8x8x64xf32> to vector<64x64xf32>
    %67 = vector.extract_strided_slice %42 {offsets = [0, 1, 0], sizes = [8, 1, 64], strides = [1, 1, 1]} : vector<8x8x64xf32> to vector<8x1x64xf32>
    %68 = vector.extract_strided_slice %42 {offsets = [0, 1, 0], sizes = [8, 6, 64], strides = [1, 1, 1]} : vector<8x8x64xf32> to vector<8x6x64xf32>
    %69 = vector.extract_strided_slice %42 {offsets = [0, 6, 0], sizes = [8, 1, 64], strides = [1, 1, 1]} : vector<8x8x64xf32> to vector<8x1x64xf32>
    %70 = tpu.concatenate %67, %68, %69 in 1 : vector<8x1x64xf32>, vector<8x6x64xf32>, vector<8x1x64xf32> -> vector<8x8x64xf32>
    %71 = vector.shape_cast %70 : vector<8x8x64xf32> to vector<64x64xf32>
    %72 = vector.extract_strided_slice %42 {offsets = [0, 2, 0], sizes = [8, 1, 64], strides = [1, 1, 1]} : vector<8x8x64xf32> to vector<8x1x64xf32>
    %73 = vector.extract_strided_slice %42 {offsets = [0, 2, 0], sizes = [8, 6, 64], strides = [1, 1, 1]} : vector<8x8x64xf32> to vector<8x6x64xf32>
    %74 = vector.extract_strided_slice %42 {offsets = [0, 7, 0], sizes = [8, 1, 64], strides = [1, 1, 1]} : vector<8x8x64xf32> to vector<8x1x64xf32>
    %75 = tpu.concatenate %72, %73, %74 in 1 : vector<8x1x64xf32>, vector<8x6x64xf32>, vector<8x1x64xf32> -> vector<8x8x64xf32>
    %76 = vector.shape_cast %75 : vector<8x8x64xf32> to vector<64x64xf32>
    %77 = vector.extract_strided_slice %46 {offsets = [0, 0, 0], sizes = [8, 1, 64], strides = [1, 1, 1]} : vector<8x8x64xf32> to vector<8x1x64xf32>
    %78 = vector.extract_strided_slice %46 {offsets = [0, 0, 0], sizes = [8, 6, 64], strides = [1, 1, 1]} : vector<8x8x64xf32> to vector<8x6x64xf32>
    %79 = vector.extract_strided_slice %46 {offsets = [0, 5, 0], sizes = [8, 1, 64], strides = [1, 1, 1]} : vector<8x8x64xf32> to vector<8x1x64xf32>
    %80 = tpu.concatenate %77, %78, %79 in 1 : vector<8x1x64xf32>, vector<8x6x64xf32>, vector<8x1x64xf32> -> vector<8x8x64xf32>
    %81 = vector.shape_cast %80 : vector<8x8x64xf32> to vector<64x64xf32>
    %82 = vector.extract_strided_slice %46 {offsets = [0, 1, 0], sizes = [8, 1, 64], strides = [1, 1, 1]} : vector<8x8x64xf32> to vector<8x1x64xf32>
    %83 = vector.extract_strided_slice %46 {offsets = [0, 1, 0], sizes = [8, 6, 64], strides = [1, 1, 1]} : vector<8x8x64xf32> to vector<8x6x64xf32>
    %84 = vector.extract_strided_slice %46 {offsets = [0, 6, 0], sizes = [8, 1, 64], strides = [1, 1, 1]} : vector<8x8x64xf32> to vector<8x1x64xf32>
    %85 = tpu.concatenate %82, %83, %84 in 1 : vector<8x1x64xf32>, vector<8x6x64xf32>, vector<8x1x64xf32> -> vector<8x8x64xf32>
    %86 = vector.shape_cast %85 : vector<8x8x64xf32> to vector<64x64xf32>
    %87 = vector.extract_strided_slice %46 {offsets = [0, 2, 0], sizes = [8, 1, 64], strides = [1, 1, 1]} : vector<8x8x64xf32> to vector<8x1x64xf32>
    %88 = vector.extract_strided_slice %46 {offsets = [0, 2, 0], sizes = [8, 6, 64], strides = [1, 1, 1]} : vector<8x8x64xf32> to vector<8x6x64xf32>
    %89 = vector.extract_strided_slice %46 {offsets = [0, 7, 0], sizes = [8, 1, 64], strides = [1, 1, 1]} : vector<8x8x64xf32> to vector<8x1x64xf32>
    %90 = tpu.concatenate %87, %88, %89 in 1 : vector<8x1x64xf32>, vector<8x6x64xf32>, vector<8x1x64xf32> -> vector<8x8x64xf32>
    %91 = vector.shape_cast %90 : vector<8x8x64xf32> to vector<64x64xf32>
    %92 = tpu.concatenate %51, %56, %61, %66, %71, %76, %81, %86, %91 in 0 : vector<64x64xf32>, vector<64x64xf32>, vector<64x64xf32>, vector<64x64xf32>, vector<64x64xf32>, vector<64x64xf32>, vector<64x64xf32>, vector<64x64xf32>, vector<64x64xf32> -> vector<576x64xf32>
    %93 = tpu.concatenate %32, %32, %32, %32, %32, %32, %32, %32, %32 in 0 : vector<64x32xf32>, vector<64x32xf32>, vector<64x32xf32>, vector<64x32xf32>, vector<64x32xf32>, vector<64x32xf32>, vector<64x32xf32>, vector<64x32xf32>, vector<64x32xf32> -> vector<576x32xf32>
    %94 = vector.extract_strided_slice %92 {offsets = [0, 0], sizes = [576, 32], strides = [1, 1]} : vector<576x64xf32> to vector<576x32xf32>
    %95 = arith.mulf %93, %94 : vector<576x32xf32>
    %96 = arith.truncf %95 : vector<576x32xf32> to vector<576x32xbf16>
    %97 = vector.extract_strided_slice %92 {offsets = [0, 32], sizes = [576, 32], strides = [1, 1]} : vector<576x64xf32> to vector<576x32xf32>
    %c0_15 = arith.constant 0 : index
    %c0_16 = arith.constant 0 : index
    %98 = vector.load %arg7[%c0_15, %c0_16] : memref<32x4xbf16, #tpu.memory_space<vmem>>, vector<32x4xbf16>
    %cst_17 = arith.constant dense<0.000000e+00> : vector<576x4xf32>
    %99 = tpu.matmul %96, %98, %cst_17 {dimension_numbers = #tpu.dot_dimension_numbers<[1], [0], [0], [1], [0, 0, 1, 1], [], []>} : vector<576x32xbf16>, vector<32x4xbf16>, vector<576x4xf32> -> vector<576x4xf32>
    %c0_18 = arith.constant 0 : index
    %c0_19 = arith.constant 0 : index
    %100 = vector.load %arg6[%c0_18, %c0_19] : memref<576x4xf32, #tpu.memory_space<vmem>>, vector<576x4xf32>
    %101 = arith.addf %99, %100 : vector<576x4xf32>
    %102 = vector.shape_cast %101 : vector<576x4xf32> to vector<9x64x4xf32>
    %cst_20 = arith.constant dense<0xFF800000> : vector<64x4xf32>
    %103 = vector.multi_reduction <maximumf>, %102, %cst_20 [0] : vector<9x64x4xf32> to vector<64x4xf32>
    %104 = vector.shape_cast %103 : vector<64x4xf32> to vector<1x64x4xf32>
    %105 = vector.broadcast %104 : vector<1x64x4xf32> to vector<9x64x4xf32>
    %106 = arith.subf %102, %105 : vector<9x64x4xf32>
    %107 = math.exp %106 : vector<9x64x4xf32>
    %cst_21 = arith.constant dense<0.000000e+00> : vector<64x4xf32>
    %108 = vector.multi_reduction <add>, %107, %cst_21 [0] : vector<9x64x4xf32> to vector<64x4xf32>
    %109 = vector.shape_cast %107 : vector<9x64x4xf32> to vector<576x4xf32>
    %110 = arith.truncf %109 : vector<576x4xf32> to vector<576x4xbf16>
    %c0_22 = arith.constant 0 : index
    %c0_23 = arith.constant 0 : index
    %111 = vector.load %arg8[%c0_22, %c0_23] : memref<4x32xbf16, #tpu.memory_space<vmem>>, vector<4x32xbf16>
    %cst_24 = arith.constant dense<0.000000e+00> : vector<576x32xf32>
    %112 = tpu.matmul %110, %111, %cst_24 {dimension_numbers = #tpu.dot_dimension_numbers<[1], [0], [0], [1], [0, 0, 1, 1], [], []>} : vector<576x4xbf16>, vector<4x32xbf16>, vector<576x32xf32> -> vector<576x32xf32>
    %113 = arith.mulf %112, %97 : vector<576x32xf32>
    %114 = vector.shape_cast %113 : vector<576x32xf32> to vector<9x64x32xf32>
    %cst_25 = arith.constant dense<0.000000e+00> : vector<64x32xf32>
    %115 = vector.multi_reduction <add>, %114, %cst_25 [0] : vector<9x64x32xf32> to vector<64x32xf32>
    %116 = tpu.reciprocal %108 {approx = true} : vector<64x4xf32> -> vector<64x4xf32>
    %117 = arith.truncf %116 : vector<64x4xf32> to vector<64x4xbf16>
    %c0_26 = arith.constant 0 : index
    %c0_27 = arith.constant 0 : index
    %118 = vector.load %arg8[%c0_26, %c0_27] : memref<4x32xbf16, #tpu.memory_space<vmem>>, vector<4x32xbf16>
    %cst_28 = arith.constant dense<0.000000e+00> : vector<64x32xf32>
    %119 = tpu.matmul %117, %118, %cst_28 {dimension_numbers = #tpu.dot_dimension_numbers<[1], [0], [0], [1], [0, 0, 1, 1], [], []>} : vector<64x4xbf16>, vector<4x32xbf16>, vector<64x32xf32> -> vector<64x32xf32>
    %120 = arith.mulf %115, %119 : vector<64x32xf32>
    %121 = arith.truncf %120 : vector<64x32xf32> to vector<64x32xbf16>
    %c0_29 = arith.constant 0 : index
    %c0_30 = arith.constant 0 : index
    %122 = vector.load %arg9[%c0_29, %c0_30] : memref<32x32xbf16, #tpu.memory_space<vmem>>, vector<32x32xbf16>
    %cst_31 = arith.constant dense<0.000000e+00> : vector<64x32xf32>
    %123 = tpu.matmul %121, %122, %cst_31 {dimension_numbers = #tpu.dot_dimension_numbers<[1], [0], [0], [1], [0, 0, 1, 1], [], []>} : vector<64x32xbf16>, vector<32x32xbf16>, vector<64x32xf32> -> vector<64x32xf32>
    %c0_32 = arith.constant 0 : index
    %c0_33 = arith.constant 0 : index
    %124 = vector.load %arg10[%c0_32, %c0_33] : memref<1x32xf32, #tpu.memory_space<vmem>>, vector<1x32xf32>
    %125 = vector.broadcast %124 : vector<1x32xf32> to vector<64x32xf32>
    %126 = arith.addf %123, %125 : vector<64x32xf32>
    %127 = arith.addf %1, %126 : vector<64x32xf32>
    %c0_34 = arith.constant 0 : index
    %c0_35 = arith.constant 0 : index
    %128 = vector.load %arg11[%c0_34, %c0_35] : memref<1x32xf32, #tpu.memory_space<vmem>>, vector<1x32xf32>
    %c0_36 = arith.constant 0 : index
    %c0_37 = arith.constant 0 : index
    %129 = vector.load %arg12[%c0_36, %c0_37] : memref<1x32xf32, #tpu.memory_space<vmem>>, vector<1x32xf32>
    %cst_38 = arith.constant dense<0.000000e+00> : vector<64xf32>
    %130 = vector.multi_reduction <add>, %127, %cst_38 [1] : vector<64x32xf32> to vector<64xf32>
    %131 = vector.shape_cast %130 : vector<64xf32> to vector<64x1xf32>
    %cst_39 = arith.constant 3.200000e+01 : f32
    %132 = vector.broadcast %cst_39 : f32 to vector<64x1xf32>
    %133 = arith.divf %131, %132 : vector<64x1xf32>
    %134 = vector.broadcast %133 : vector<64x1xf32> to vector<64x32xf32>
    %135 = arith.subf %127, %134 : vector<64x32xf32>
    %136 = arith.mulf %135, %135 : vector<64x32xf32>
    %cst_40 = arith.constant dense<0.000000e+00> : vector<64xf32>
    %137 = vector.multi_reduction <add>, %136, %cst_40 [1] : vector<64x32xf32> to vector<64xf32>
    %138 = vector.shape_cast %137 : vector<64xf32> to vector<64x1xf32>
    %cst_41 = arith.constant 3.200000e+01 : f32
    %139 = vector.broadcast %cst_41 : f32 to vector<64x1xf32>
    %140 = arith.divf %138, %139 : vector<64x1xf32>
    %141 = vector.broadcast %133 : vector<64x1xf32> to vector<64x32xf32>
    %142 = arith.subf %127, %141 : vector<64x32xf32>
    %cst_42 = arith.constant 9.99999974E-6 : f32
    %143 = vector.broadcast %cst_42 : f32 to vector<64x1xf32>
    %144 = arith.addf %140, %143 : vector<64x1xf32>
    %145 = math.rsqrt %144 : vector<64x1xf32>
    %146 = vector.broadcast %145 : vector<64x1xf32> to vector<64x32xf32>
    %147 = arith.mulf %142, %146 : vector<64x32xf32>
    %148 = vector.broadcast %128 : vector<1x32xf32> to vector<64x32xf32>
    %149 = arith.mulf %147, %148 : vector<64x32xf32>
    %150 = vector.broadcast %129 : vector<1x32xf32> to vector<64x32xf32>
    %151 = arith.addf %149, %150 : vector<64x32xf32>
    %152 = arith.truncf %151 : vector<64x32xf32> to vector<64x32xbf16>
    %c0_43 = arith.constant 0 : index
    %c0_44 = arith.constant 0 : index
    %153 = vector.load %arg13[%c0_43, %c0_44] : memref<32x128xbf16, #tpu.memory_space<vmem>>, vector<32x128xbf16>
    %cst_45 = arith.constant dense<0.000000e+00> : vector<64x128xf32>
    %154 = tpu.matmul %152, %153, %cst_45 {dimension_numbers = #tpu.dot_dimension_numbers<[1], [0], [0], [1], [0, 0, 1, 1], [], []>} : vector<64x32xbf16>, vector<32x128xbf16>, vector<64x128xf32> -> vector<64x128xf32>
    %c0_46 = arith.constant 0 : index
    %c0_47 = arith.constant 0 : index
    %155 = vector.load %arg14[%c0_46, %c0_47] : memref<1x128xf32, #tpu.memory_space<vmem>>, vector<1x128xf32>
    %156 = vector.broadcast %155 : vector<1x128xf32> to vector<64x128xf32>
    %157 = arith.addf %154, %156 : vector<64x128xf32>
    %cst_48 = arith.constant 5.000000e-01 : f32
    %158 = vector.broadcast %cst_48 : f32 to vector<64x128xf32>
    %159 = arith.mulf %158, %157 : vector<64x128xf32>
    %cst_49 = arith.constant 4.471500e-02 : f32
    %160 = vector.broadcast %cst_49 : f32 to vector<64x128xf32>
    %161 = arith.mulf %160, %157 : vector<64x128xf32>
    %162 = arith.mulf %161, %157 : vector<64x128xf32>
    %163 = arith.mulf %162, %157 : vector<64x128xf32>
    %164 = arith.addf %157, %163 : vector<64x128xf32>
    %cst_50 = arith.constant 0.797884583 : f32
    %165 = vector.broadcast %cst_50 : f32 to vector<64x128xf32>
    %166 = arith.mulf %165, %164 : vector<64x128xf32>
    %167 = math.tanh %166 : vector<64x128xf32>
    %cst_51 = arith.constant 1.000000e+00 : f32
    %168 = vector.broadcast %cst_51 : f32 to vector<64x128xf32>
    %169 = arith.addf %168, %167 : vector<64x128xf32>
    %170 = arith.mulf %159, %169 : vector<64x128xf32>
    %171 = arith.truncf %170 : vector<64x128xf32> to vector<64x128xbf16>
    %c0_52 = arith.constant 0 : index
    %c0_53 = arith.constant 0 : index
    %172 = vector.load %arg15[%c0_52, %c0_53] : memref<128x32xbf16, #tpu.memory_space<vmem>>, vector<128x32xbf16>
    %cst_54 = arith.constant dense<0.000000e+00> : vector<64x32xf32>
    %173 = tpu.matmul %171, %172, %cst_54 {dimension_numbers = #tpu.dot_dimension_numbers<[1], [0], [0], [1], [0, 0, 1, 1], [], []>} : vector<64x128xbf16>, vector<128x32xbf16>, vector<64x32xf32> -> vector<64x32xf32>
    %c0_55 = arith.constant 0 : index
    %c0_56 = arith.constant 0 : index
    %174 = vector.load %arg16[%c0_55, %c0_56] : memref<1x32xf32, #tpu.memory_space<vmem>>, vector<1x32xf32>
    %175 = vector.broadcast %174 : vector<1x32xf32> to vector<64x32xf32>
    %176 = arith.addf %173, %175 : vector<64x32xf32>
    %177 = arith.addf %127, %176 : vector<64x32xf32>
    %c0_57 = arith.constant 0 : index
    %c0_58 = arith.constant 0 : index
    %c0_59 = arith.constant 0 : index
    %178 = vector.load %arg17[%c0_57, %c0_58, %c0_59] : memref<1x64x32xf32, #tpu.memory_space<vmem>>, vector<1x64x32xf32>
    %179 = vector.shape_cast %178 : vector<1x64x32xf32> to vector<64x32xf32>
    %180 = vector.shape_cast %177 : vector<64x32xf32> to vector<1x64x32xf32>
    tpu.vector_store %arg17[%c0_57, %c0_58, %c0_59], %180 {strides = array<i32>} : memref<1x64x32xf32, #tpu.memory_space<vmem>>, vector<1x64x32xf32>,
    return
  }
  func.func @transform_0(%arg0: i32) -> (i32, i32, i32) {
    %c0_i32 = arith.constant 0 : i32
    %c0_i32_0 = arith.constant 0 : i32
    %c0_i32_1 = arith.constant 0 : i32
    return %arg0, %c0_i32, %c0_i32_0 : i32, i32, i32
  }
  func.func @transform_1(%arg0: i32) -> (i32, i32) {
    %c0_i32 = arith.constant 0 : i32
    %c0_i32_0 = arith.constant 0 : i32
    %c0_i32_1 = arith.constant 0 : i32
    return %c0_i32, %c0_i32_0 : i32, i32
  }
  func.func @transform_2(%arg0: i32) -> (i32, i32) {
    %c0_i32 = arith.constant 0 : i32
    %c0_i32_0 = arith.constant 0 : i32
    %c0_i32_1 = arith.constant 0 : i32
    return %c0_i32, %c0_i32_0 : i32, i32
  }
  func.func @transform_3(%arg0: i32) -> (i32, i32) {
    %c0_i32 = arith.constant 0 : i32
    %c0_i32_0 = arith.constant 0 : i32
    %c0_i32_1 = arith.constant 0 : i32
    return %c0_i32, %c0_i32_0 : i32, i32
  }
  func.func @transform_4(%arg0: i32) -> (i32, i32) {
    %c0_i32 = arith.constant 0 : i32
    %c0_i32_0 = arith.constant 0 : i32
    %c0_i32_1 = arith.constant 0 : i32
    return %c0_i32, %c0_i32_0 : i32, i32
  }
  func.func @transform_5(%arg0: i32) -> (i32, i32) {
    %c0_i32 = arith.constant 0 : i32
    %c0_i32_0 = arith.constant 0 : i32
    %c0_i32_1 = arith.constant 0 : i32
    return %c0_i32, %c0_i32_0 : i32, i32
  }
  func.func @transform_6(%arg0: i32) -> (i32, i32) {
    %c0_i32 = arith.constant 0 : i32
    %c0_i32_0 = arith.constant 0 : i32
    %c0_i32_1 = arith.constant 0 : i32
    return %c0_i32, %c0_i32_0 : i32, i32
  }
  func.func @transform_7(%arg0: i32) -> (i32, i32) {
    %c0_i32 = arith.constant 0 : i32
    %c0_i32_0 = arith.constant 0 : i32
    %c0_i32_1 = arith.constant 0 : i32
    return %c0_i32, %c0_i32_0 : i32, i32
  }
  func.func @transform_8(%arg0: i32) -> (i32, i32) {
    %c0_i32 = arith.constant 0 : i32
    %c0_i32_0 = arith.constant 0 : i32
    %c0_i32_1 = arith.constant 0 : i32
    return %c0_i32, %c0_i32_0 : i32, i32
  }
  func.func @transform_9(%arg0: i32) -> (i32, i32) {
    %c0_i32 = arith.constant 0 : i32
    %c0_i32_0 = arith.constant 0 : i32
    %c0_i32_1 = arith.constant 0 : i32
    return %c0_i32, %c0_i32_0 : i32, i32
  }
  func.func @transform_10(%arg0: i32) -> (i32, i32) {
    %c0_i32 = arith.constant 0 : i32
    %c0_i32_0 = arith.constant 0 : i32
    %c0_i32_1 = arith.constant 0 : i32
    return %c0_i32, %c0_i32_0 : i32, i32
  }
  func.func @transform_11(%arg0: i32) -> (i32, i32) {
    %c0_i32 = arith.constant 0 : i32
    %c0_i32_0 = arith.constant 0 : i32
    %c0_i32_1 = arith.constant 0 : i32
    return %c0_i32, %c0_i32_0 : i32, i32
  }
  func.func @transform_12(%arg0: i32) -> (i32, i32) {
    %c0_i32 = arith.constant 0 : i32
    %c0_i32_0 = arith.constant 0 : i32
    %c0_i32_1 = arith.constant 0 : i32
    return %c0_i32, %c0_i32_0 : i32, i32
  }
  func.func @transform_13(%arg0: i32) -> (i32, i32) {
    %c0_i32 = arith.constant 0 : i32
    %c0_i32_0 = arith.constant 0 : i32
    %c0_i32_1 = arith.constant 0 : i32
    return %c0_i32, %c0_i32_0 : i32, i32
  }
  func.func @transform_14(%arg0: i32) -> (i32, i32) {
    %c0_i32 = arith.constant 0 : i32
    %c0_i32_0 = arith.constant 0 : i32
    %c0_i32_1 = arith.constant 0 : i32
    return %c0_i32, %c0_i32_0 : i32, i32
  }
  func.func @transform_15(%arg0: i32) -> (i32, i32) {
    %c0_i32 = arith.constant 0 : i32
    %c0_i32_0 = arith.constant 0 : i32
    %c0_i32_1 = arith.constant 0 : i32
    return %c0_i32, %c0_i32_0 : i32, i32
  }
  func.func @transform_16(%arg0: i32) -> (i32, i32, i32) {
    %c0_i32 = arith.constant 0 : i32
    %c0_i32_0 = arith.constant 0 : i32
    %c0_i32_1 = arith.constant 0 : i32
    return %arg0, %c0_i32, %c0_i32_0 : i32, i32, i32
  }
}

</mosaic_0001>

<llo_original>
// kernel: tpu_custom_call.1
$region0: #{tpu_custom_call.1}
  #allocation0 [shape = 'u32[]', space=smem, size = 0x4, offset = 0x4, fixed_abs, tag = 'smem constant byte address 0x4 - core index']
  #allocation1 [shape = 'u32[144,128]{1,0:T(1,128)}', space=vmem, size = 0x12000, scoped, tag = 'internal scratch']
  %s0 = inlined_call_operand.vmem [shape: f32[2,64,32], index: 0, kind: input, shape index: {}]
  %s1 = inlined_call_operand.vmem [shape: f32[1,32], index: 1, kind: input, shape index: {}]
  %s2 = inlined_call_operand.vmem [shape: f32[1,32], index: 2, kind: input, shape index: {}]
  %s3 = inlined_call_operand.vmem [shape: bf16[32,96], index: 3, kind: input, shape index: {}]
  %s4 = inlined_call_operand.vmem [shape: f32[1,96], index: 4, kind: input, shape index: {}]
  %s5 = inlined_call_operand.vmem [shape: f32[576,4], index: 5, kind: input, shape index: {}]
  %s6 = inlined_call_operand.vmem [shape: bf16[32,4], index: 6, kind: input, shape index: {}]
  %s7 = inlined_call_operand.vmem [shape: bf16[4,32], index: 7, kind: input, shape index: {}]
  %s8 = inlined_call_operand.vmem [shape: bf16[32,32], index: 8, kind: input, shape index: {}]
  %s9 = inlined_call_operand.vmem [shape: f32[1,32], index: 9, kind: input, shape index: {}]
  %s10 = inlined_call_operand.vmem [shape: f32[1,32], index: 10, kind: input, shape index: {}]
  %s11 = inlined_call_operand.vmem [shape: f32[1,32], index: 11, kind: input, shape index: {}]
  %s12 = inlined_call_operand.vmem [shape: bf16[32,128], index: 12, kind: input, shape index: {}]
  %s13 = inlined_call_operand.vmem [shape: f32[1,128], index: 13, kind: input, shape index: {}]
  %s14 = inlined_call_operand.vmem [shape: bf16[128,32], index: 14, kind: input, shape index: {}]
  %s15 = inlined_call_operand.vmem [shape: f32[1,32], index: 15, kind: input, shape index: {}]
  %s16 = inlined_call_operand.vmem [shape: f32[2,64,32], index: 16, kind: output, shape index: {}]
  %s17 = sld [smem:[#allocation0]]
  $region97: #{tpu_custom_call.1} parent=0
    _
  %s19 = ssub.s32 1, %s17
  %s20 = scalar_select 0, %s19, %s17
  loop: start=0, step=1, limit=4
  $region2: #{tpu_custom_call.1} parent=0 // loop_pre_header
    _
  $region3: #{tpu_custom_call.1} parent=0 // loop_header
    %s22 = sphi 0, %s26
    %p23 = scmp.ge.s32.totalorder %s22, 4
    %s32 = sphi 0, %s34
    %s35 = sphi 0, %s32
    %s36 = sphi 0, %s35
    %s52 = sphi 0, %s36
    %s56 = sphi 0, %s56
    %s58 = sphi 0, %s56
    %s59 = sphi 0, %s58
    %s73 = sphi 0, %s59
    %s77 = sphi 0, %s77
    %s79 = sphi 0, %s77
    %s80 = sphi 0, %s79
    %s94 = sphi 0, %s80
    %s98 = sphi 0, %s98
    %s100 = sphi 0, %s98
    %s101 = sphi 0, %s100
    %s115 = sphi 0, %s101
    %s119 = sphi 0, %s119
    %s121 = sphi 0, %s119
    %s122 = sphi 0, %s121
    %s136 = sphi 0, %s122
    %s140 = sphi 0, %s140
    %s142 = sphi 0, %s140
    %s143 = sphi 0, %s142
    %s157 = sphi 0, %s143
    %s161 = sphi 0, %s161
    %s163 = sphi 0, %s161
    %s164 = sphi 0, %s163
    %s178 = sphi 0, %s164
    %s182 = sphi 0, %s182
    %s184 = sphi 0, %s182
    %s185 = sphi 0, %s184
    %s199 = sphi 0, %s185
    %s203 = sphi 0, %s203
    %s205 = sphi 0, %s203
    %s206 = sphi 0, %s205
    %s220 = sphi 0, %s206
    %s224 = sphi 0, %s224
    %s226 = sphi 0, %s224
    %s227 = sphi 0, %s226
    %s241 = sphi 0, %s227
    %s245 = sphi 0, %s245
    %s247 = sphi 0, %s245
    %s248 = sphi 0, %s247
    %s262 = sphi 0, %s248
    %s266 = sphi 0, %s266
    %s268 = sphi 0, %s266
    %s269 = sphi 0, %s268
    %s283 = sphi 0, %s269
    %s287 = sphi 0, %s287
    %s289 = sphi 0, %s287
    %s290 = sphi 0, %s289
    %s304 = sphi 0, %s290
    %s308 = sphi 0, %s308
    %s310 = sphi 0, %s308
    %s311 = sphi 0, %s310
    %s325 = sphi 0, %s311
    %s329 = sphi 0, %s329
    %s331 = sphi 0, %s329
    %s332 = sphi 0, %s331
    %s346 = sphi 0, %s332
    %s350 = sphi 0, %s350
    %s352 = sphi 0, %s350
    %s353 = sphi 0, %s352
    %s367 = sphi 0, %s353
    %s373 = sphi 0, %s375
    %s376 = sphi 0, %s373
    %s377 = sphi 0, %s376
    %s393 = sphi 0, %s377
  $region4: #{tpu_custom_call.1} parent=0 // loop_header_branch
    %25 = sbr.rel (%p23) target = $region8
  $region5: #{tpu_custom_call.1} parent=0 // loop_body
    %s27 = ssub.s32 %s22, 1
    %s28 = ssub.s32 %s22, 2
    %s29 = sadd.s32 %s22, 1
    %s30 = ssub.s32 %s22, %s29
    %p31 = scmp.eq.s32.totalorder %s30, 0
    %s33 = sadd.s32 %s32, 1
    %s34 = scalar_select %p31, %s32, %s33
    %p37 = pneg %p31
    %p38 = scmp.eq.s32.totalorder %s22, 1
    %p39 = por %p37, %p38
    %p40 = scmp.ne.s32.totalorder %s32, %s35
    %p41 = scmp.eq.s32.totalorder %s22, 0
    %p42 = por %p40, %p41
    %p43 = scmp.ne.s32.totalorder %s32, %s35
    %p44 = scmp.eq.s32.totalorder %s27, 1
    %p45 = por %p43, %p44
    %p46 = scmp.ne.s32.totalorder %s35, %s36
    %p47 = scmp.eq.s32.totalorder %s27, 0
    %p48 = por %p46, %p47
    %p49 = scmp.ne.s32.totalorder %s35, %s36
    %p50 = scmp.eq.s32.totalorder %s28, 1
    %p51 = por %p49, %p50
    %p53 = scmp.ne.s32.totalorder %s36, %s52
    %p54 = scmp.eq.s32.totalorder %s28, 0
    %p55 = por %p53, %p54
    %s57 = sadd.s32 %s56, 1
    %p60 = scmp.eq.s32.totalorder %s22, 1
    %p61 = scmp.ne.s32.totalorder %s56, %s58
    %p62 = scmp.eq.s32.totalorder %s22, 0
    %p63 = por %p61, %p62
    %p64 = scmp.ne.s32.totalorder %s56, %s58
    %p65 = scmp.eq.s32.totalorder %s27, 1
    %p66 = por %p64, %p65
    %p67 = scmp.ne.s32.totalorder %s58, %s59
    %p68 = scmp.eq.s32.totalorder %s27, 0
    %p69 = por %p67, %p68
    %p70 = scmp.ne.s32.totalorder %s58, %s59
    %p71 = scmp.eq.s32.totalorder %s28, 1
    %p72 = por %p70, %p71
    %p74 = scmp.ne.s32.totalorder %s59, %s73
    %p75 = scmp.eq.s32.totalorder %s28, 0
    %p76 = por %p74, %p75
    %s78 = sadd.s32 %s77, 1
    %p81 = scmp.eq.s32.totalorder %s22, 1
    %p82 = scmp.ne.s32.totalorder %s77, %s79
    %p83 = scmp.eq.s32.totalorder %s22, 0
    %p84 = por %p82, %p83
    %p85 = scmp.ne.s32.totalorder %s77, %s79
    %p86 = scmp.eq.s32.totalorder %s27, 1
    %p87 = por %p85, %p86
    %p88 = scmp.ne.s32.totalorder %s79, %s80
    %p89 = scmp.eq.s32.totalorder %s27, 0
    %p90 = por %p88, %p89
    %p91 = scmp.ne.s32.totalorder %s79, %s80
    %p92 = scmp.eq.s32.totalorder %s28, 1
    %p93 = por %p91, %p92
    %p95 = scmp.ne.s32.totalorder %s80, %s94
    %p96 = scmp.eq.s32.totalorder %s28, 0
    %p97 = por %p95, %p96
    %s99 = sadd.s32 %s98, 1
    %p102 = scmp.eq.s32.totalorder %s22, 1
    %p103 = scmp.ne.s32.totalorder %s98, %s100
    %p104 = scmp.eq.s32.totalorder %s22, 0
    %p105 = por %p103, %p104
    %p106 = scmp.ne.s32.totalorder %s98, %s100
    %p107 = scmp.eq.s32.totalorder %s27, 1
    %p108 = por %p106, %p107
    %p109 = scmp.ne.s32.totalorder %s100, %s101
    %p110 = scmp.eq.s32.totalorder %s27, 0
    %p111 = por %p109, %p110
    %p112 = scmp.ne.s32.totalorder %s100, %s101
    %p113 = scmp.eq.s32.totalorder %s28, 1
    %p114 = por %p112, %p113
    %p116 = scmp.ne.s32.totalorder %s101, %s115
    %p117 = scmp.eq.s32.totalorder %s28, 0
    %p118 = por %p116, %p117
    %s120 = sadd.s32 %s119, 1
    %p123 = scmp.eq.s32.totalorder %s22, 1
    %p124 = scmp.ne.s32.totalorder %s119, %s121
    %p125 = scmp.eq.s32.totalorder %s22, 0
    %p126 = por %p124, %p125
    %p127 = scmp.ne.s32.totalorder %s119, %s121
    %p128 = scmp.eq.s32.totalorder %s27, 1
    %p129 = por %p127, %p128
    %p130 = scmp.ne.s32.totalorder %s121, %s122
    %p131 = scmp.eq.s32.totalorder %s27, 0
    %p132 = por %p130, %p131
    %p133 = scmp.ne.s32.totalorder %s121, %s122
    %p134 = scmp.eq.s32.totalorder %s28, 1
    %p135 = por %p133, %p134
    %p137 = scmp.ne.s32.totalorder %s122, %s136
    %p138 = scmp.eq.s32.totalorder %s28, 0
    %p139 = por %p137, %p138
    %s141 = sadd.s32 %s140, 1
    %p144 = scmp.eq.s32.totalorder %s22, 1
    %p145 = scmp.ne.s32.totalorder %s140, %s142
    %p146 = scmp.eq.s32.totalorder %s22, 0
    %p147 = por %p145, %p146
    %p148 = scmp.ne.s32.totalorder %s140, %s142
    %p149 = scmp.eq.s32.totalorder %s27, 1
    %p150 = por %p148, %p149
    %p151 = scmp.ne.s32.totalorder %s142, %s143
    %p152 = scmp.eq.s32.totalorder %s27, 0
    %p153 = por %p151, %p152
    %p154 = scmp.ne.s32.totalorder %s142, %s143
    %p155 = scmp.eq.s32.totalorder %s28, 1
    %p156 = por %p154, %p155
    %p158 = scmp.ne.s32.totalorder %s143, %s157
    %p159 = scmp.eq.s32.totalorder %s28, 0
    %p160 = por %p158, %p159
    %s162 = sadd.s32 %s161, 1
    %p165 = scmp.eq.s32.totalorder %s22, 1
    %p166 = scmp.ne.s32.totalorder %s161, %s163
    %p167 = scmp.eq.s32.totalorder %s22, 0
    %p168 = por %p166, %p167
    %p169 = scmp.ne.s32.totalorder %s161, %s163
    %p170 = scmp.eq.s32.totalorder %s27, 1
    %p171 = por %p169, %p170
    %p172 = scmp.ne.s32.totalorder %s163, %s164
    %p173 = scmp.eq.s32.totalorder %s27, 0
    %p174 = por %p172, %p173
    %p175 = scmp.ne.s32.totalorder %s163, %s164
    %p176 = scmp.eq.s32.totalorder %s28, 1
    %p177 = por %p175, %p176
    %p179 = scmp.ne.s32.totalorder %s164, %s178
    %p180 = scmp.eq.s32.totalorder %s28, 0
    %p181 = por %p179, %p180
    %s183 = sadd.s32 %s182, 1
    %p186 = scmp.eq.s32.totalorder %s22, 1
    %p187 = scmp.ne.s32.totalorder %s182, %s184
    %p188 = scmp.eq.s32.totalorder %s22, 0
    %p189 = por %p187, %p188
    %p190 = scmp.ne.s32.totalorder %s182, %s184
    %p191 = scmp.eq.s32.totalorder %s27, 1
    %p192 = por %p190, %p191
    %p193 = scmp.ne.s32.totalorder %s184, %s185
    %p194 = scmp.eq.s32.totalorder %s27, 0
    %p195 = por %p193, %p194
    %p196 = scmp.ne.s32.totalorder %s184, %s185
    %p197 = scmp.eq.s32.totalorder %s28, 1
    %p198 = por %p196, %p197
    %p200 = scmp.ne.s32.totalorder %s185, %s199
    %p201 = scmp.eq.s32.totalorder %s28, 0
    %p202 = por %p200, %p201
    %s204 = sadd.s32 %s203, 1
    %p207 = scmp.eq.s32.totalorder %s22, 1
    %p208 = scmp.ne.s32.totalorder %s203, %s205
    %p209 = scmp.eq.s32.totalorder %s22, 0
    %p210 = por %p208, %p209
    %p211 = scmp.ne.s32.totalorder %s203, %s205
    %p212 = scmp.eq.s32.totalorder %s27, 1
    %p213 = por %p211, %p212
    %p214 = scmp.ne.s32.totalorder %s205, %s206
    %p215 = scmp.eq.s32.totalorder %s27, 0
    %p216 = por %p214, %p215
    %p217 = scmp.ne.s32.totalorder %s205, %s206
    %p218 = scmp.eq.s32.totalorder %s28, 1
    %p219 = por %p217, %p218
    %p221 = scmp.ne.s32.totalorder %s206, %s220
    %p222 = scmp.eq.s32.totalorder %s28, 0
    %p223 = por %p221, %p222
    %s225 = sadd.s32 %s224, 1
    %p228 = scmp.eq.s32.totalorder %s22, 1
    %p229 = scmp.ne.s32.totalorder %s224, %s226
    %p230 = scmp.eq.s32.totalorder %s22, 0
    %p231 = por %p229, %p230
    %p232 = scmp.ne.s32.totalorder %s224, %s226
    %p233 = scmp.eq.s32.totalorder %s27, 1
    %p234 = por %p232, %p233
    %p235 = scmp.ne.s32.totalorder %s226, %s227
    %p236 = scmp.eq.s32.totalorder %s27, 0
    %p237 = por %p235, %p236
    %p238 = scmp.ne.s32.totalorder %s226, %s227
    %p239 = scmp.eq.s32.totalorder %s28, 1
    %p240 = por %p238, %p239
    %p242 = scmp.ne.s32.totalorder %s227, %s241
    %p243 = scmp.eq.s32.totalorder %s28, 0
    %p244 = por %p242, %p243
    %s246 = sadd.s32 %s245, 1
    %p249 = scmp.eq.s32.totalorder %s22, 1
    %p250 = scmp.ne.s32.totalorder %s245, %s247
    %p251 = scmp.eq.s32.totalorder %s22, 0
    %p252 = por %p250, %p251
    %p253 = scmp.ne.s32.totalorder %s245, %s247
    %p254 = scmp.eq.s32.totalorder %s27, 1
    %p255 = por %p253, %p254
    %p256 = scmp.ne.s32.totalorder %s247, %s248
    %p257 = scmp.eq.s32.totalorder %s27, 0
    %p258 = por %p256, %p257
    %p259 = scmp.ne.s32.totalorder %s247, %s248
    %p260 = scmp.eq.s32.totalorder %s28, 1
    %p261 = por %p259, %p260
    %p263 = scmp.ne.s32.totalorder %s248, %s262
    %p264 = scmp.eq.s32.totalorder %s28, 0
    %p265 = por %p263, %p264
    %s267 = sadd.s32 %s266, 1
    %p270 = scmp.eq.s32.totalorder %s22, 1
    %p271 = scmp.ne.s32.totalorder %s266, %s268
    %p272 = scmp.eq.s32.totalorder %s22, 0
    %p273 = por %p271, %p272
    %p274 = scmp.ne.s32.totalorder %s266, %s268
    %p275 = scmp.eq.s32.totalorder %s27, 1
    %p276 = por %p274, %p275
    %p277 = scmp.ne.s32.totalorder %s268, %s269
    %p278 = scmp.eq.s32.totalorder %s27, 0
    %p279 = por %p277, %p278
    %p280 = scmp.ne.s32.totalorder %s268, %s269
    %p281 = scmp.eq.s32.totalorder %s28, 1
    %p282 = por %p280, %p281
    %p284 = scmp.ne.s32.totalorder %s269, %s283
    %p285 = scmp.eq.s32.totalorder %s28, 0
    %p286 = por %p284, %p285
    %s288 = sadd.s32 %s287, 1
    %p291 = scmp.eq.s32.totalorder %s22, 1
    %p292 = scmp.ne.s32.totalorder %s287, %s289
    %p293 = scmp.eq.s32.totalorder %s22, 0
    %p294 = por %p292, %p293
    %p295 = scmp.ne.s32.totalorder %s287, %s289
    %p296 = scmp.eq.s32.totalorder %s27, 1
    %p297 = por %p295, %p296
    %p298 = scmp.ne.s32.totalorder %s289, %s290
    %p299 = scmp.eq.s32.totalorder %s27, 0
    %p300 = por %p298, %p299
    %p301 = scmp.ne.s32.totalorder %s289, %s290
    %p302 = scmp.eq.s32.totalorder %s28, 1
    %p303 = por %p301, %p302
    %p305 = scmp.ne.s32.totalorder %s290, %s304
    %p306 = scmp.eq.s32.totalorder %s28, 0
    %p307 = por %p305, %p306
    %s309 = sadd.s32 %s308, 1
    %p312 = scmp.eq.s32.totalorder %s22, 1
    %p313 = scmp.ne.s32.totalorder %s308, %s310
    %p314 = scmp.eq.s32.totalorder %s22, 0
    %p315 = por %p313, %p314
    %p316 = scmp.ne.s32.totalorder %s308, %s310
    %p317 = scmp.eq.s32.totalorder %s27, 1
    %p318 = por %p316, %p317
    %p319 = scmp.ne.s32.totalorder %s310, %s311
    %p320 = scmp.eq.s32.totalorder %s27, 0
    %p321 = por %p319, %p320
    %p322 = scmp.ne.s32.totalorder %s310, %s311
    %p323 = scmp.eq.s32.totalorder %s28, 1
    %p324 = por %p322, %p323
    %p326 = scmp.ne.s32.totalorder %s311, %s325
    %p327 = scmp.eq.s32.totalorder %s28, 0
    %p328 = por %p326, %p327
    %s330 = sadd.s32 %s329, 1
    %p333 = scmp.eq.s32.totalorder %s22, 1
    %p334 = scmp.ne.s32.totalorder %s329, %s331
    %p335 = scmp.eq.s32.totalorder %s22, 0
    %p336 = por %p334, %p335
    %p337 = scmp.ne.s32.totalorder %s329, %s331
    %p338 = scmp.eq.s32.totalorder %s27, 1
    %p339 = por %p337, %p338
    %p340 = scmp.ne.s32.totalorder %s331, %s332
    %p341 = scmp.eq.s32.totalorder %s27, 0
    %p342 = por %p340, %p341
    %p343 = scmp.ne.s32.totalorder %s331, %s332
    %p344 = scmp.eq.s32.totalorder %s28, 1
    %p345 = por %p343, %p344
    %p347 = scmp.ne.s32.totalorder %s332, %s346
    %p348 = scmp.eq.s32.totalorder %s28, 0
    %p349 = por %p347, %p348
    %s351 = sadd.s32 %s350, 1
    %p354 = scmp.eq.s32.totalorder %s22, 1
    %p355 = scmp.ne.s32.totalorder %s350, %s352
    %p356 = scmp.eq.s32.totalorder %s22, 0
    %p357 = por %p355, %p356
    %p358 = scmp.ne.s32.totalorder %s350, %s352
    %p359 = scmp.eq.s32.totalorder %s27, 1
    %p360 = por %p358, %p359
    %p361 = scmp.ne.s32.totalorder %s352, %s353
    %p362 = scmp.eq.s32.totalorder %s27, 0
    %p363 = por %p361, %p362
    %p364 = scmp.ne.s32.totalorder %s352, %s353
    %p365 = scmp.eq.s32.totalorder %s28, 1
    %p366 = por %p364, %p365
    %p368 = scmp.ne.s32.totalorder %s353, %s367
    %p369 = scmp.eq.s32.totalorder %s28, 0
    %p370 = por %p368, %p369
    %s371 = ssub.s32 %s22, %s29
    %p372 = scmp.eq.s32.totalorder %s371, 0
    %s374 = sadd.s32 %s373, 1
    %s375 = scalar_select %p372, %s373, %s374
    %p378 = pneg %p372
    %p379 = scmp.eq.s32.totalorder %s22, 1
    %p380 = por %p378, %p379
    %p381 = scmp.ne.s32.totalorder %s373, %s376
    %p382 = scmp.eq.s32.totalorder %s22, 0
    %p383 = por %p381, %p382
    %p384 = scmp.ne.s32.totalorder %s373, %s376
    %p385 = scmp.eq.s32.totalorder %s27, 1
    %p386 = por %p384, %p385
    %p387 = scmp.ne.s32.totalorder %s376, %s377
    %p388 = scmp.eq.s32.totalorder %s27, 0
    %p389 = por %p387, %p388
    %p390 = scmp.ne.s32.totalorder %s376, %s377
    %p391 = scmp.eq.s32.totalorder %s28, 1
    %p392 = por %p390, %p391
    %p394 = scmp.ne.s32.totalorder %s377, %s393
    %p395 = scmp.eq.s32.totalorder %s28, 0
    %p396 = por %p394, %p395
    %p397 = scmp.le.s32.totalorder 1, %s22
    %p398 = scmp.lt.s32.totalorder %s22, 3
    %p399 = pnand %p397, %p398
    %p400 = pneg %p399
    // Predicated region
    $region9: #{tpu_custom_call.1} parent=5 // pred_check
      _
    $region10: #{tpu_custom_call.1} parent=5 // pred_check_branch
      %402 = sbr.rel (%p399) target = $region12
    $region11: #{tpu_custom_call.1} parent=5 // pred_region
      %s403 = ssub.s32 %s22, 1
      // Predicated region
      $region13: #{tpu_custom_call.1} parent=11 // pred_check
        %p404 = pneg %p69
      $region14: #{tpu_custom_call.1} parent=11 // pred_check_branch
        %406 = sbr.rel (%p404) target = $region16
      $region15: #{tpu_custom_call.1} parent=11 // pred_region
        _
      $region16: #{tpu_custom_call.1} parent=11 // pred_fallthru
        _
      // Predicated region
      $region17: #{tpu_custom_call.1} parent=11 // pred_check
        %p407 = pneg %p90
      $region18: #{tpu_custom_call.1} parent=11 // pred_check_branch
        %409 = sbr.rel (%p407) target = $region20
      $region19: #{tpu_custom_call.1} parent=11 // pred_region
        _
      $region20: #{tpu_custom_call.1} parent=11 // pred_fallthru
        _
      // Predicated region
      $region21: #{tpu_custom_call.1} parent=11 // pred_check
        %p410 = pneg %p111
      $region22: #{tpu_custom_call.1} parent=11 // pred_check_branch
        %412 = sbr.rel (%p410) target = $region24
      $region23: #{tpu_custom_call.1} parent=11 // pred_region
        _
      $region24: #{tpu_custom_call.1} parent=11 // pred_fallthru
        _
      // Predicated region
      $region25: #{tpu_custom_call.1} parent=11 // pred_check
        %p413 = pneg %p132
      $region26: #{tpu_custom_call.1} parent=11 // pred_check_branch
        %415 = sbr.rel (%p413) target = $region28
      $region27: #{tpu_custom_call.1} parent=11 // pred_region
        _
      $region28: #{tpu_custom_call.1} parent=11 // pred_fallthru
        _
      // Predicated region
      $region29: #{tpu_custom_call.1} parent=11 // pred_check
        %p416 = pneg %p153
      $region30: #{tpu_custom_call.1} parent=11 // pred_check_branch
        %418 = sbr.rel (%p416) target = $region32
      $region31: #{tpu_custom_call.1} parent=11 // pred_region
        _
      $region32: #{tpu_custom_call.1} parent=11 // pred_fallthru
        _
      // Predicated region
      $region33: #{tpu_custom_call.1} parent=11 // pred_check
        %p419 = pneg %p174
      $region34: #{tpu_custom_call.1} parent=11 // pred_check_branch
        %421 = sbr.rel (%p419) target = $region36
      $region35: #{tpu_custom_call.1} parent=11 // pred_region
        _
      $region36: #{tpu_custom_call.1} parent=11 // pred_fallthru
        _
      // Predicated region
      $region37: #{tpu_custom_call.1} parent=11 // pred_check
        %p422 = pneg %p195
      $region38: #{tpu_custom_call.1} parent=11 // pred_check_branch
        %424 = sbr.rel (%p422) target = $region40
      $region39: #{tpu_custom_call.1} parent=11 // pred_region
        _
      $region40: #{tpu_custom_call.1} parent=11 // pred_fallthru
        _
      // Predicated region
      $region41: #{tpu_custom_call.1} parent=11 // pred_check
        %p425 = pneg %p216
      $region42: #{tpu_custom_call.1} parent=11 // pred_check_branch
        %427 = sbr.rel (%p425) target = $region44
      $region43: #{tpu_custom_call.1} parent=11 // pred_region
        _
      $region44: #{tpu_custom_call.1} parent=11 // pred_fallthru
        _
      // Predicated region
      $region45: #{tpu_custom_call.1} parent=11 // pred_check
        %p428 = pneg %p237
      $region46: #{tpu_custom_call.1} parent=11 // pred_check_branch
        %430 = sbr.rel (%p428) target = $region48
      $region47: #{tpu_custom_call.1} parent=11 // pred_region
        _
      $region48: #{tpu_custom_call.1} parent=11 // pred_fallthru
        _
      // Predicated region
      $region49: #{tpu_custom_call.1} parent=11 // pred_check
        %p431 = pneg %p258
      $region50: #{tpu_custom_call.1} parent=11 // pred_check_branch
        %433 = sbr.rel (%p431) target = $region52
      $region51: #{tpu_custom_call.1} parent=11 // pred_region
        _
      $region52: #{tpu_custom_call.1} parent=11 // pred_fallthru
        _
      // Predicated region
      $region53: #{tpu_custom_call.1} parent=11 // pred_check
        %p434 = pneg %p279
      $region54: #{tpu_custom_call.1} parent=11 // pred_check_branch
        %436 = sbr.rel (%p434) target = $region56
      $region55: #{tpu_custom_call.1} parent=11 // pred_region
        _
      $region56: #{tpu_custom_call.1} parent=11 // pred_fallthru
        _
      // Predicated region
      $region57: #{tpu_custom_call.1} parent=11 // pred_check
        %p437 = pneg %p300
      $region58: #{tpu_custom_call.1} parent=11 // pred_check_branch
        %439 = sbr.rel (%p437) target = $region60
      $region59: #{tpu_custom_call.1} parent=11 // pred_region
        _
      $region60: #{tpu_custom_call.1} parent=11 // pred_fallthru
        _
      // Predicated region
      $region61: #{tpu_custom_call.1} parent=11 // pred_check
        %p440 = pneg %p321
      $region62: #{tpu_custom_call.1} parent=11 // pred_check_branch
        %442 = sbr.rel (%p440) target = $region64
      $region63: #{tpu_custom_call.1} parent=11 // pred_region
        _
      $region64: #{tpu_custom_call.1} parent=11 // pred_fallthru
        _
      // Predicated region
      $region65: #{tpu_custom_call.1} parent=11 // pred_check
        %p443 = pneg %p342
      $region66: #{tpu_custom_call.1} parent=11 // pred_check_branch
        %445 = sbr.rel (%p443) target = $region68
      $region67: #{tpu_custom_call.1} parent=11 // pred_region
        _
      $region68: #{tpu_custom_call.1} parent=11 // pred_fallthru
        _
      // Predicated region
      $region69: #{tpu_custom_call.1} parent=11 // pred_check
        %p446 = pneg %p363
      $region70: #{tpu_custom_call.1} parent=11 // pred_check_branch
        %448 = sbr.rel (%p446) target = $region72
      $region71: #{tpu_custom_call.1} parent=11 // pred_region
        _
      $region72: #{tpu_custom_call.1} parent=11 // pred_fallthru
        _
    $region12: #{tpu_custom_call.1} parent=5 // pred_fallthru
      _
    %p449 = scmp.lt.s32.totalorder %s22, 2
    // Predicated region
    $region73: #{tpu_custom_call.1} parent=5 // pred_check
      %p450 = pneg %p449
    $region74: #{tpu_custom_call.1} parent=5 // pred_check_branch
      %452 = sbr.rel (%p450) target = $region76
    $region75: #{tpu_custom_call.1} parent=5 // pred_region
      // Predicated region
      $region77: #{tpu_custom_call.1} parent=75 // pred_check
        %p453 = pneg %p42
      $region78: #{tpu_custom_call.1} parent=75 // pred_check_branch
        %455 = sbr.rel (%p453) target = $region80
      $region79: #{tpu_custom_call.1} parent=75 // pred_region
        %p456 = scmp.lt.s32.totalorder %s22, 1
        %s457 = scalar_select %p456, %s22, 1
        %s458 = smul.addr %s457, 8
        %s459 = smul.addr %s458, 8
        %s460 = scalar_lea.vmem %s0, %s459
      $region80: #{tpu_custom_call.1} parent=75 // pred_fallthru
        _
    $region76: #{tpu_custom_call.1} parent=5 // pred_fallthru
      _
    %p461 = scmp.le.s32.totalorder 1, %s22
    %p462 = scmp.lt.s32.totalorder %s22, 3
    %p463 = pnand %p461, %p462
    %p464 = pneg %p463
    // Predicated region
    $region81: #{tpu_custom_call.1} parent=5 // pred_check
      _
    $region82: #{tpu_custom_call.1} parent=5 // pred_check_branch
      %466 = sbr.rel (%p463) target = $region84
    $region83: #{tpu_custom_call.1} parent=5 // pred_region
      %s467 = ssub.s32 %s22, 1
      %p468 = scmp.lt.s32.totalorder %s27, 1
      %s469 = scalar_select %p468, %s27, 1
      %s470 = smul.addr %s469, 8
      %s471 = smul.addr %s470, 8
      %s472 = scalar_lea.vmem %s0, %s471
      %p473 = pneg %p48
      %p474 = pneg %p45
      %p475 = pneg %p69
      %p476 = pneg %p66
      %p477 = pneg %p90
      %p478 = pneg %p87
      %p479 = pneg %p111
      %p480 = pneg %p108
      %p481 = pneg %p132
      %p482 = pneg %p129
      %p483 = pneg %p153
      %p484 = pneg %p150
      %p485 = pneg %p174
      %p486 = pneg %p171
      %p487 = pneg %p195
      %p488 = pneg %p192
      %p489 = pneg %p216
      %p490 = pneg %p213
      %p491 = pneg %p237
      %p492 = pneg %p234
      %p493 = pneg %p258
      %p494 = pneg %p255
      %p495 = pneg %p279
      %p496 = pneg %p276
      %p497 = pneg %p300
      %p498 = pneg %p297
      %p499 = pneg %p321
      %p500 = pneg %p318
      %p501 = pneg %p342
      %p502 = pneg %p339
      %p503 = pneg %p363
      %p504 = pneg %p360
      %p505 = pneg %p389
      %p506 = pneg %p386
      %p507 = scmp.lt.s32.totalorder %s27, 1
      %s508 = scalar_select %p507, %s27, 1
      %s509 = smul.addr %s508, 8
      %s510 = smul.addr %s509, 8
      %s511 = scalar_lea.vmem %s16, %s510
      %p512 = scmp.lt.s32.totalorder %s27, 1
      %s513 = scalar_select %p512, %s27, 1
      %s514 = smul.addr %s513, 8
      %s515 = smul.addr %s514, 8
      %s516 = scalar_lea.vmem %s0, %s515
      %p517 = scmp.lt.s32.totalorder %s27, 1
      %s518 = scalar_select %p517, %s27, 1
      %s519 = smul.addr %s518, 8
      %s520 = smul.addr %s519, 8
      %s521 = scalar_lea.vmem %s16, %s520
      %v523 = vld [vmem:[%s516] sm:$0xff]
      %v524 = vld [vmem:[%s516 + $0x8] sm:$0xff]
      %v525 = vld [vmem:[%s516 + $0x10] sm:$0xff]
      %v526 = vld [vmem:[%s516 + $0x18] sm:$0xff]
      %v527 = vld [vmem:[%s516 + $0x20] sm:$0xff]
      %v528 = vld [vmem:[%s516 + $0x28] sm:$0xff]
      %v529 = vld [vmem:[%s516 + $0x30] sm:$0xff]
      %v530 = vld [vmem:[%s516 + $0x38] sm:$0xff]
      %v531 = vld [vmem:[%s1] sm:$0x1]
      %v532 = vld [vmem:[%s2] sm:$0x1]
      %vm533 = vcmask 261120
      %v534 = vsel %vm533, %v523, 0.0
      %535 = vadd.xlane.f32.xlu0 %v534
      %v536 = vpop.xlane.xlu0 %535
      %v537 = vsel %vm533, %v524, 0.0
      %538 = vadd.xlane.f32.xlu0 %v537
      %v539 = vpop.xlane.xlu0 %538
      %v540 = vsel %vm533, %v525, 0.0
      %541 = vadd.xlane.f32.xlu0 %v540
      %v542 = vpop.xlane.xlu0 %541
      %v543 = vsel %vm533, %v526, 0.0
      %544 = vadd.xlane.f32.xlu0 %v543
      %v545 = vpop.xlane.xlu0 %544
      %v546 = vsel %vm533, %v527, 0.0
      %547 = vadd.xlane.f32.xlu0 %v546
      %v548 = vpop.xlane.xlu0 %547
      %v549 = vsel %vm533, %v528, 0.0
      %550 = vadd.xlane.f32.xlu0 %v549
      %v551 = vpop.xlane.xlu0 %550
      %v552 = vsel %vm533, %v529, 0.0
      %553 = vadd.xlane.f32.xlu0 %v552
      %v554 = vpop.xlane.xlu0 %553
      %v555 = vsel %vm533, %v530, 0.0
      %556 = vadd.xlane.f32.xlu0 %v555
      %v557 = vpop.xlane.xlu0 %556
      %v558 = vrcp.pop 32.0
      %v559 = vmul.f32 %v536, %v558
      %v560 = vmul.f32 %v539, %v558
      %v561 = vmul.f32 %v542, %v558
      %v562 = vmul.f32 %v545, %v558
      %v563 = vmul.f32 %v548, %v558
      %v564 = vmul.f32 %v551, %v558
      %v565 = vmul.f32 %v554, %v558
      %v566 = vmul.f32 %v557, %v558
      %v567 = vsub.f32 %v523, %v559
      %v568 = vsub.f32 %v524, %v560
      %v569 = vsub.f32 %v525, %v561
      %v570 = vsub.f32 %v526, %v562
      %v571 = vsub.f32 %v527, %v563
      %v572 = vsub.f32 %v528, %v564
      %v573 = vsub.f32 %v529, %v565
      %v574 = vsub.f32 %v530, %v566
      %v575 = vmul.f32 %v567, %v567
      %v576 = vmul.f32 %v568, %v568
      %v577 = vmul.f32 %v569, %v569
      %v578 = vmul.f32 %v570, %v570
      %v579 = vmul.f32 %v571, %v571
      %v580 = vmul.f32 %v572, %v572
      %v581 = vmul.f32 %v573, %v573
      %v582 = vmul.f32 %v574, %v574
      %v583 = vsel %vm533, %v575, 0.0
      %584 = vadd.xlane.f32.xlu0 %v583
      %v585 = vpop.xlane.xlu0 %584
      %v586 = vsel %vm533, %v576, 0.0
      %587 = vadd.xlane.f32.xlu0 %v586
      %v588 = vpop.xlane.xlu0 %587
      %v589 = vsel %vm533, %v577, 0.0
      %590 = vadd.xlane.f32.xlu0 %v589
      %v591 = vpop.xlane.xlu0 %590
      %v592 = vsel %vm533, %v578, 0.0
      %593 = vadd.xlane.f32.xlu0 %v592
      %v594 = vpop.xlane.xlu0 %593
      %v595 = vsel %vm533, %v579, 0.0
      %596 = vadd.xlane.f32.xlu0 %v595
      %v597 = vpop.xlane.xlu0 %596
      %v598 = vsel %vm533, %v580, 0.0
      %599 = vadd.xlane.f32.xlu0 %v598
      %v600 = vpop.xlane.xlu0 %599
      %v601 = vsel %vm533, %v581, 0.0
      %602 = vadd.xlane.f32.xlu0 %v601
      %v603 = vpop.xlane.xlu0 %602
      %v604 = vsel %vm533, %v582, 0.0
      %605 = vadd.xlane.f32.xlu0 %v604
      %v606 = vpop.xlane.xlu0 %605
      %v607 = vmul.f32 %v585, %v558
      %v608 = vmul.f32 %v588, %v558
      %v609 = vmul.f32 %v591, %v558
      %v610 = vmul.f32 %v594, %v558
      %v611 = vmul.f32 %v597, %v558
      %v612 = vmul.f32 %v600, %v558
      %v613 = vmul.f32 %v603, %v558
      %v614 = vmul.f32 %v606, %v558
      %v615 = vadd.f32 %v607, 1e-05
      %v616 = vadd.f32 %v608, 1e-05
      %v617 = vadd.f32 %v609, 1e-05
      %v618 = vadd.f32 %v610, 1e-05
      %v619 = vadd.f32 %v611, 1e-05
      %v620 = vadd.f32 %v612, 1e-05
      %v621 = vadd.f32 %v613, 1e-05
      %v622 = vadd.f32 %v614, 1e-05
      %v623 = vrsqrt.pop %v615
      %v624 = vrsqrt.pop %v616
      %v625 = vrsqrt.pop %v617
      %v626 = vrsqrt.pop %v618
      %v627 = vrsqrt.pop %v619
      %v628 = vrsqrt.pop %v620
      %v629 = vrsqrt.pop %v621
      %v630 = vrsqrt.pop %v622
      %v631 = vmul.f32 %v567, %v623
      %v632 = vmul.f32 %v568, %v624
      %v633 = vmul.f32 %v569, %v625
      %v634 = vmul.f32 %v570, %v626
      %v635 = vmul.f32 %v571, %v627
      %v636 = vmul.f32 %v572, %v628
      %v637 = vmul.f32 %v573, %v629
      %v638 = vmul.f32 %v574, %v630
      %v640 = vlaneseq
      %v641 = vshrl.u32 %v640, 7
      %v642 = vsub.s32 0, %v641
      %v643 = vrot.slane %v531, %v642
      %v645 = vmul.f32 %v631, %v643
      %v646 = vmul.f32 %v632, %v643
      %v647 = vmul.f32 %v633, %v643
      %v648 = vmul.f32 %v634, %v643
      %v649 = vmul.f32 %v635, %v643
      %v650 = vmul.f32 %v636, %v643
      %v651 = vmul.f32 %v637, %v643
      %v652 = vmul.f32 %v638, %v643
      %v654 = vlaneseq
      %v655 = vshrl.u32 %v654, 7
      %v656 = vsub.s32 0, %v655
      %v657 = vrot.slane %v532, %v656
      %v659 = vadd.f32 %v645, %v657
      %v660 = vadd.f32 %v646, %v657
      %v661 = vadd.f32 %v647, %v657
      %v662 = vadd.f32 %v648, %v657
      %v663 = vadd.f32 %v649, %v657
      %v664 = vadd.f32 %v650, %v657
      %v665 = vadd.f32 %v651, %v657
      %v666 = vadd.f32 %v652, %v657
      %v667 = vpack.c.bf16 %v660, %v659
      %v668 = vpack.c.bf16 %v662, %v661
      %v669 = vpack.c.bf16 %v664, %v663
      %v670 = vpack.c.bf16 %v666, %v665
      %v671 = vld [vmem:[%s3] sm:$0xf]
      %v672 = vld [vmem:[%s3 + $0x4] sm:$0xf]
      %v673 = vld [vmem:[%s3 + $0x8] sm:$0xf]
      %v674 = vld [vmem:[%s3 + $0xc] sm:$0xf]
      %v675 = vld [vmem:[%s4] sm:$0x1]
      %v677 = vlaneseq
      %v678 = vshrl.u32 %v677, 7
      %v679 = vsub.s32 0, %v678
      %v680 = vrot.slane %v675, %v679
      %v686 = vunpack.c.l.b16 %v671
      %v687 = vunpack.c.l.b16 %v672
      %v688 = vunpack.c.l.b16 %v673
      %v689 = vunpack.c.l.b16 %v674
      %v690 = vpack.c.b16 %v687, %v686
      %v691 = vpack.c.b16 %v689, %v688
      %v695 = vsel %vm533, %v667, 0
      %v698 = vsel %vm533, %v668, 0
      %v701 = vsel %vm533, %v669, 0
      %v704 = vsel %vm533, %v670, 0
      %706 = vmatprep.subr.bf16.mxu0 0
      %707 = vmatpush1.bf16.msra.mxu0 %v690
      %708 = vmatprep.subr.bf16.mxu0 0
      %709 = vmatpush1.bf16.msra.mxu0 %v691
      %710 = vmatprep.subr.bf16.mxu0 0
      %711 = vmatpush1.bf16.msra.mxu0 0
      %712 = vmatprep.subr.bf16.mxu0 0
      %713 = vmatpush1.bf16.msra.mxu0 0
      %714 = vmatprep.subr.bf16.mxu0 0
      %715 = vmatpush1.bf16.msra.mxu0 0
      %716 = vmatprep.subr.bf16.mxu0 0
      %717 = vmatpush1.bf16.msra.mxu0 0
      %718 = vmatprep.subr.bf16.mxu0 0
      %719 = vmatpush1.bf16.msra.mxu0 0
      %720 = vmatprep.subr.bf16.mxu0 0
      %721 = vmatpush1.bf16.msra.mxu0 0
      %722 = vmatprep.subr.bf16.mxu0 0
      %723 = vmatpush1.bf16.msra.mxu0 0
      %724 = vmatprep.subr.bf16.mxu0 0
      %725 = vmatpush1.bf16.msra.mxu0 0
      %726 = vmatprep.subr.bf16.mxu0 0
      %727 = vmatpush1.bf16.msra.mxu0 0
      %728 = vmatprep.subr.bf16.mxu0 0
      %729 = vmatpush1.bf16.msra.mxu0 0
      %730 = vmatprep.subr.bf16.mxu0 0
      %731 = vmatpush1.bf16.msra.mxu0 0
      %732 = vmatprep.subr.bf16.mxu0 0
      %733 = vmatpush1.bf16.msra.mxu0 0
      %734 = vmatprep.subr.bf16.mxu0 0
      %735 = vmatpush1.bf16.msra.mxu0 0
      %736 = vmatprep.subr.bf16.mxu0 0
      %737 = vmatpush1.bf16.msra.mxu0 0
      %738 = vmatprep.mubr.bf16.mxu0 0
      %739 = vmatmul.mubr.bf16.gmra.mrb[0].mxu0 %v695
      %v740 = vpop.f32.mrb[0].mxu0
      %v741 = vadd.f32 %v680, %v740
      %v742 = vpop.f32.mrb[0].mxu0
      %v743 = vpop.f32.mrb[0].mxu0
      %v744 = vadd.f32 %v680, %v743
      %v745 = vpop.f32.mrb[0].mxu0
      %746 = vmatprep.mubr.bf16.mxu0 0
      %747 = vmatmul.mubr.bf16.gmra.mrb[0].mxu0 %v698
      %v748 = vpop.f32.mrb[0].mxu0
      %v749 = vadd.f32 %v680, %v748
      %v750 = vpop.f32.mrb[0].mxu0
      %v751 = vpop.f32.mrb[0].mxu0
      %v752 = vadd.f32 %v680, %v751
      %v753 = vpop.f32.mrb[0].mxu0
      %754 = vmatprep.mubr.bf16.mxu0 0
      %755 = vmatmul.mubr.bf16.gmra.mrb[0].mxu0 %v701
      %v756 = vpop.f32.mrb[0].mxu0
      %v757 = vadd.f32 %v680, %v756
      %v758 = vpop.f32.mrb[0].mxu0
      %v759 = vpop.f32.mrb[0].mxu0
      %v760 = vadd.f32 %v680, %v759
      %v761 = vpop.f32.mrb[0].mxu0
      %762 = vmatprep.mubr.bf16.mxu0 0
      %763 = vmatmul.mubr.bf16.gmra.mrb[0].mxu0 %v704
      %v764 = vpop.f32.mrb[0].mxu0
      %v765 = vadd.f32 %v680, %v764
      %v766 = vpop.f32.mrb[0].mxu0
      %v767 = vpop.f32.mrb[0].mxu0
      %v768 = vadd.f32 %v680, %v767
      %v769 = vpop.f32.mrb[0].mxu0
      %770 = vdwg.mxu0
      %v777 = vrot.slane %v741, 7
      %v778 = vrot.slane %v744, 7
      %v779 = vrot.slane %v749, 7
      %v780 = vrot.slane %v752, 7
      %v781 = vrot.slane %v757, 7
      %v782 = vrot.slane %v760, 7
      %v789 = vrot.slane %v741, 6
      %v790 = vrot.slane %v744, 6
      %v791 = vrot.slane %v749, 6
      %v792 = vrot.slane %v752, 6
      %v793 = vrot.slane %v757, 6
      %v794 = vrot.slane %v760, 6
      %vm801 = vcmask 1040384
      %v802 = vsel %vm801, %v741, %v777
      %v803 = vsel %vm801, %v744, %v778
      %v804 = vsel %vm801, %v749, %v779
      %v805 = vsel %vm801, %v752, %v780
      %v806 = vsel %vm801, %v757, %v781
      %v807 = vsel %vm801, %v760, %v782
      %vm808 = vcmask 1046528
      %v809 = vsel %vm808, %v802, %v789
      %v810 = vsel %vm808, %v803, %v790
      %v811 = vsel %vm808, %v804, %v791
      %v812 = vsel %vm808, %v805, %v792
      %v813 = vsel %vm808, %v806, %v793
      %v814 = vsel %vm808, %v807, %v794
      %v815 = vrot.slane %v741, 1
      %v816 = vrot.slane %v744, 1
      %v817 = vrot.slane %v749, 1
      %v818 = vrot.slane %v752, 1
      %v819 = vrot.slane %v757, 1
      %v820 = vrot.slane %v760, 1
      %v827 = vsel %vm801, %v815, %v741
      %v828 = vsel %vm801, %v816, %v744
      %v829 = vsel %vm801, %v817, %v749
      %v830 = vsel %vm801, %v818, %v752
      %v831 = vsel %vm801, %v819, %v757
      %v832 = vsel %vm801, %v820, %v760
      %v833 = vsel %vm808, %v827, %v777
      %v834 = vsel %vm808, %v828, %v778
      %v835 = vsel %vm808, %v829, %v779
      %v836 = vsel %vm808, %v830, %v780
      %v837 = vsel %vm808, %v831, %v781
      %v838 = vsel %vm808, %v832, %v782
      %v839 = vrot.slane %v741, 2
      %v840 = vrot.slane %v744, 2
      %v841 = vrot.slane %v749, 2
      %v842 = vrot.slane %v752, 2
      %v843 = vrot.slane %v757, 2
      %v844 = vrot.slane %v760, 2
      %v851 = vsel %vm801, %v839, %v815
      %v852 = vsel %vm801, %v840, %v816
      %v853 = vsel %vm801, %v841, %v817
      %v854 = vsel %vm801, %v842, %v818
      %v855 = vsel %vm801, %v843, %v819
      %v856 = vsel %vm801, %v844, %v820
      %v857 = vsel %vm808, %v851, %v741
      %v858 = vsel %vm808, %v852, %v744
      %v859 = vsel %vm808, %v853, %v749
      %v860 = vsel %vm808, %v854, %v752
      %v861 = vsel %vm808, %v855, %v757
      %v862 = vsel %vm808, %v856, %v760
      %v864 = vrot.slane %v765, 7
      %v866 = vrot.slane %v765, 6
      %v868 = vsel %vm801, %v765, %v864
      %v869 = vsel %vm808, %v868, %v866
      %v870 = vrot.slane %v765, 1
      %v872 = vsel %vm801, %v870, %v765
      %v873 = vsel %vm808, %v872, %v864
      %v874 = vrot.slane %v765, 2
      %v876 = vsel %vm801, %v874, %v870
      %v877 = vsel %vm808, %v876, %v765
      %v879 = vrot.slane %v768, 7
      %v881 = vrot.slane %v768, 6
      %v883 = vsel %vm801, %v768, %v879
      %v884 = vsel %vm808, %v883, %v881
      %v885 = vrot.slane %v768, 1
      %v887 = vsel %vm801, %v885, %v768
      %v888 = vsel %vm808, %v887, %v879
      %v889 = vrot.slane %v768, 2
      %v891 = vsel %vm801, %v889, %v885
      %v892 = vsel %vm808, %v891, %v768
      %917 = vrot.lane.b32.xlu0 %v809, 96
      %v918 = vpop.permute.xlu0 %917
      %919 = vrot.lane.b32.xlu0 %v810, 96
      %v920 = vpop.permute.xlu0 %919
      %921 = vrot.lane.b32.xlu0 %v811, 96
      %v922 = vpop.permute.xlu0 %921
      %923 = vrot.lane.b32.xlu0 %v812, 96
      %v924 = vpop.permute.xlu0 %923
      %925 = vrot.lane.b32.xlu0 %v813, 96
      %v926 = vpop.permute.xlu0 %925
      %927 = vrot.lane.b32.xlu0 %v814, 96
      %v928 = vpop.permute.xlu0 %927
      %929 = vrot.lane.b32.xlu0 %v833, 96
      %v930 = vpop.permute.xlu0 %929
      %931 = vrot.lane.b32.xlu0 %v834, 96
      %v932 = vpop.permute.xlu0 %931
      %933 = vrot.lane.b32.xlu0 %v835, 96
      %v934 = vpop.permute.xlu0 %933
      %935 = vrot.lane.b32.xlu0 %v836, 96
      %v936 = vpop.permute.xlu0 %935
      %937 = vrot.lane.b32.xlu0 %v837, 96
      %v938 = vpop.permute.xlu0 %937
      %939 = vrot.lane.b32.xlu0 %v838, 96
      %v940 = vpop.permute.xlu0 %939
      %941 = vrot.lane.b32.xlu0 %v857, 96
      %v942 = vpop.permute.xlu0 %941
      %943 = vrot.lane.b32.xlu0 %v858, 96
      %v944 = vpop.permute.xlu0 %943
      %945 = vrot.lane.b32.xlu0 %v859, 96
      %v946 = vpop.permute.xlu0 %945
      %947 = vrot.lane.b32.xlu0 %v860, 96
      %v948 = vpop.permute.xlu0 %947
      %949 = vrot.lane.b32.xlu0 %v861, 96
      %v950 = vpop.permute.xlu0 %949
      %951 = vrot.lane.b32.xlu0 %v862, 96
      %v952 = vpop.permute.xlu0 %951
      %953 = vrot.lane.b32.xlu0 %v869, 96
      %v954 = vpop.permute.xlu0 %953
      %955 = vrot.lane.b32.xlu0 %v873, 96
      %v956 = vpop.permute.xlu0 %955
      %957 = vrot.lane.b32.xlu0 %v877, 96
      %v958 = vpop.permute.xlu0 %957
      %959 = vrot.lane.b32.xlu0 %v884, 96
      %v960 = vpop.permute.xlu0 %959
      %961 = vrot.lane.b32.xlu0 %v888, 96
      %v962 = vpop.permute.xlu0 %961
      %963 = vrot.lane.b32.xlu0 %v892, 96
      %v964 = vpop.permute.xlu0 %963
      %v989 = vmul.f32 %v741, %v918
      %v990 = vmul.f32 %v744, %v918
      %v991 = vmul.f32 %v749, %v920
      %v992 = vmul.f32 %v752, %v922
      %v993 = vmul.f32 %v757, %v924
      %v994 = vmul.f32 %v760, %v926
      %v995 = vmul.f32 %v765, %v928
      %v996 = vmul.f32 %v768, %v928
      %v997 = vmul.f32 %v741, %v930
      %v998 = vmul.f32 %v744, %v930
      %v999 = vmul.f32 %v749, %v932
      %v1000 = vmul.f32 %v752, %v934
      %v1001 = vmul.f32 %v757, %v936
      %v1002 = vmul.f32 %v760, %v938
      %v1003 = vmul.f32 %v765, %v940
      %v1004 = vmul.f32 %v768, %v940
      %v1005 = vmul.f32 %v741, %v942
      %v1006 = vmul.f32 %v744, %v942
      %v1007 = vmul.f32 %v749, %v944
      %v1008 = vmul.f32 %v752, %v946
      %v1009 = vmul.f32 %v757, %v948
      %v1010 = vmul.f32 %v760, %v950
      %v1011 = vmul.f32 %v765, %v952
      %v1012 = vmul.f32 %v768, %v952
      %v1013 = vmul.f32 %v741, %v920
      %v1014 = vmul.f32 %v744, %v920
      %v1015 = vmul.f32 %v749, %v922
      %v1016 = vmul.f32 %v752, %v924
      %v1017 = vmul.f32 %v757, %v926
      %v1018 = vmul.f32 %v760, %v928
      %v1019 = vmul.f32 %v765, %v954
      %v1020 = vmul.f32 %v768, %v954
      %v1021 = vmul.f32 %v741, %v932
      %v1022 = vmul.f32 %v744, %v932
      %v1023 = vmul.f32 %v749, %v934
      %v1024 = vmul.f32 %v752, %v936
      %v1025 = vmul.f32 %v757, %v938
      %v1026 = vmul.f32 %v760, %v940
      %v1027 = vmul.f32 %v765, %v956
      %v1028 = vmul.f32 %v768, %v956
      %v1029 = vmul.f32 %v741, %v944
      %v1030 = vmul.f32 %v744, %v944
      %v1031 = vmul.f32 %v749, %v946
      %v1032 = vmul.f32 %v752, %v948
      %v1033 = vmul.f32 %v757, %v950
      %v1034 = vmul.f32 %v760, %v952
      %v1035 = vmul.f32 %v765, %v958
      %v1036 = vmul.f32 %v768, %v958
      %v1037 = vmul.f32 %v741, %v922
      %v1038 = vmul.f32 %v744, %v922
      %v1039 = vmul.f32 %v749, %v924
      %v1040 = vmul.f32 %v752, %v926
      %v1041 = vmul.f32 %v757, %v928
      %v1042 = vmul.f32 %v760, %v954
      %v1043 = vmul.f32 %v765, %v960
      %v1044 = vmul.f32 %v768, %v960
      %v1045 = vmul.f32 %v741, %v934
      %v1046 = vmul.f32 %v744, %v934
      %v1047 = vmul.f32 %v749, %v936
      %v1048 = vmul.f32 %v752, %v938
      %v1049 = vmul.f32 %v757, %v940
      %v1050 = vmul.f32 %v760, %v956
      %v1051 = vmul.f32 %v765, %v962
      %v1052 = vmul.f32 %v768, %v962
      %v1053 = vmul.f32 %v741, %v946
      %v1054 = vmul.f32 %v744, %v946
      %v1055 = vmul.f32 %v749, %v948
      %v1056 = vmul.f32 %v752, %v950
      %v1057 = vmul.f32 %v757, %v952
      %v1058 = vmul.f32 %v760, %v958
      %v1059 = vmul.f32 %v765, %v964
      %v1060 = vmul.f32 %v768, %v964
      %v1061 = vpack.c.bf16 %v990, %v989
      %v1062 = vpack.c.bf16 %v992, %v991
      %v1063 = vpack.c.bf16 %v994, %v993
      %v1064 = vpack.c.bf16 %v996, %v995
      %v1065 = vpack.c.bf16 %v998, %v997
      %v1066 = vpack.c.bf16 %v1000, %v999
      %v1067 = vpack.c.bf16 %v1002, %v1001
      %v1068 = vpack.c.bf16 %v1004, %v1003
      %v1069 = vpack.c.bf16 %v1006, %v1005
      %v1070 = vpack.c.bf16 %v1008, %v1007
      %v1071 = vpack.c.bf16 %v1010, %v1009
      %v1072 = vpack.c.bf16 %v1012, %v1011
      %v1073 = vpack.c.bf16 %v1014, %v1013
      %v1074 = vpack.c.bf16 %v1016, %v1015
      %v1075 = vpack.c.bf16 %v1018, %v1017
      %v1076 = vpack.c.bf16 %v1020, %v1019
      %v1077 = vpack.c.bf16 %v1022, %v1021
      %v1078 = vpack.c.bf16 %v1024, %v1023
      %v1079 = vpack.c.bf16 %v1026, %v1025
      %v1080 = vpack.c.bf16 %v1028, %v1027
      %v1081 = vpack.c.bf16 %v1030, %v1029
      %v1082 = vpack.c.bf16 %v1032, %v1031
      %v1083 = vpack.c.bf16 %v1034, %v1033
      %v1084 = vpack.c.bf16 %v1036, %v1035
      %v1085 = vpack.c.bf16 %v1038, %v1037
      %v1086 = vpack.c.bf16 %v1040, %v1039
      %v1087 = vpack.c.bf16 %v1042, %v1041
      %v1088 = vpack.c.bf16 %v1044, %v1043
      %v1089 = vpack.c.bf16 %v1046, %v1045
      %v1090 = vpack.c.bf16 %v1048, %v1047
      %v1091 = vpack.c.bf16 %v1050, %v1049
      %v1092 = vpack.c.bf16 %v1052, %v1051
      %v1093 = vpack.c.bf16 %v1054, %v1053
      %v1094 = vpack.c.bf16 %v1056, %v1055
      %v1095 = vpack.c.bf16 %v1058, %v1057
      %v1096 = vpack.c.bf16 %v1060, %v1059
      %v1097 = vld [vmem:[%s6] sm:$0xf]
      %v1098 = vld [vmem:[%s6 + $0x4] sm:$0xf]
      %v1099 = vld [vmem:[%s6 + $0x8] sm:$0xf]
      %v1100 = vld [vmem:[%s6 + $0xc] sm:$0xf]
      %v1101 = vld [vmem:[%s5] sm:$0xff]
      %v1102 = vld [vmem:[%s5 + $0x8] sm:$0xff]
      %v1103 = vld [vmem:[%s5 + $0x10] sm:$0xff]
      %v1104 = vld [vmem:[%s5 + $0x18] sm:$0xff]
      %v1105 = vld [vmem:[%s5 + $0x20] sm:$0xff]
      %v1106 = vld [vmem:[%s5 + $0x28] sm:$0xff]
      %v1107 = vld [vmem:[%s5 + $0x30] sm:$0xff]
      %v1108 = vld [vmem:[%s5 + $0x38] sm:$0xff]
      %v1109 = vld [vmem:[%s5 + $0x40] sm:$0xff]
      %v1110 = vld [vmem:[%s5 + $0x48] sm:$0xff]
      %v1111 = vld [vmem:[%s5 + $0x50] sm:$0xff]
      %v1112 = vld [vmem:[%s5 + $0x58] sm:$0xff]
      %v1113 = vld [vmem:[%s5 + $0x60] sm:$0xff]
      %v1114 = vld [vmem:[%s5 + $0x68] sm:$0xff]
      %v1115 = vld [vmem:[%s5 + $0x70] sm:$0xff]
      %v1116 = vld [vmem:[%s5 + $0x78] sm:$0xff]
      %v1117 = vld [vmem:[%s5 + $0x80] sm:$0xff]
      %v1118 = vld [vmem:[%s5 + $0x88] sm:$0xff]
      %v1119 = vld [vmem:[%s5 + $0x90] sm:$0xff]
      %v1120 = vld [vmem:[%s5 + $0x98] sm:$0xff]
      %v1121 = vld [vmem:[%s5 + $0xa0] sm:$0xff]
      %v1122 = vld [vmem:[%s5 + $0xa8] sm:$0xff]
      %v1123 = vld [vmem:[%s5 + $0xb0] sm:$0xff]
      %v1124 = vld [vmem:[%s5 + $0xb8] sm:$0xff]
      %v1125 = vld [vmem:[%s5 + $0xc0] sm:$0xff]
      %v1126 = vld [vmem:[%s5 + $0xc8] sm:$0xff]
      %v1127 = vld [vmem:[%s5 + $0xd0] sm:$0xff]
      %v1128 = vld [vmem:[%s5 + $0xd8] sm:$0xff]
      %v1129 = vld [vmem:[%s5 + $0xe0] sm:$0xff]
      %v1130 = vld [vmem:[%s5 + $0xe8] sm:$0xff]
      %v1131 = vld [vmem:[%s5 + $0xf0] sm:$0xff]
      %v1132 = vld [vmem:[%s5 + $0xf8] sm:$0xff]
      %v1133 = vld [vmem:[%s5 + $0x100] sm:$0xff]
      %v1134 = vld [vmem:[%s5 + $0x108] sm:$0xff]
      %v1135 = vld [vmem:[%s5 + $0x110] sm:$0xff]
      %v1136 = vld [vmem:[%s5 + $0x118] sm:$0xff]
      %v1137 = vld [vmem:[%s5 + $0x120] sm:$0xff]
      %v1138 = vld [vmem:[%s5 + $0x128] sm:$0xff]
      %v1139 = vld [vmem:[%s5 + $0x130] sm:$0xff]
      %v1140 = vld [vmem:[%s5 + $0x138] sm:$0xff]
      %v1141 = vld [vmem:[%s5 + $0x140] sm:$0xff]
      %v1142 = vld [vmem:[%s5 + $0x148] sm:$0xff]
      %v1143 = vld [vmem:[%s5 + $0x150] sm:$0xff]
      %v1144 = vld [vmem:[%s5 + $0x158] sm:$0xff]
      %v1145 = vld [vmem:[%s5 + $0x160] sm:$0xff]
      %v1146 = vld [vmem:[%s5 + $0x168] sm:$0xff]
      %v1147 = vld [vmem:[%s5 + $0x170] sm:$0xff]
      %v1148 = vld [vmem:[%s5 + $0x178] sm:$0xff]
      %v1149 = vld [vmem:[%s5 + $0x180] sm:$0xff]
      %v1150 = vld [vmem:[%s5 + $0x188] sm:$0xff]
      %v1151 = vld [vmem:[%s5 + $0x190] sm:$0xff]
      %v1152 = vld [vmem:[%s5 + $0x198] sm:$0xff]
      %v1153 = vld [vmem:[%s5 + $0x1a0] sm:$0xff]
      %v1154 = vld [vmem:[%s5 + $0x1a8] sm:$0xff]
      %v1155 = vld [vmem:[%s5 + $0x1b0] sm:$0xff]
      %v1156 = vld [vmem:[%s5 + $0x1b8] sm:$0xff]
      %v1157 = vld [vmem:[%s5 + $0x1c0] sm:$0xff]
      %v1158 = vld [vmem:[%s5 + $0x1c8] sm:$0xff]
      %v1159 = vld [vmem:[%s5 + $0x1d0] sm:$0xff]
      %v1160 = vld [vmem:[%s5 + $0x1d8] sm:$0xff]
      %v1161 = vld [vmem:[%s5 + $0x1e0] sm:$0xff]
      %v1162 = vld [vmem:[%s5 + $0x1e8] sm:$0xff]
      %v1163 = vld [vmem:[%s5 + $0x1f0] sm:$0xff]
      %v1164 = vld [vmem:[%s5 + $0x1f8] sm:$0xff]
      %v1165 = vld [vmem:[%s5 + $0x200] sm:$0xff]
      %v1166 = vld [vmem:[%s5 + $0x208] sm:$0xff]
      %v1167 = vld [vmem:[%s5 + $0x210] sm:$0xff]
      %v1168 = vld [vmem:[%s5 + $0x218] sm:$0xff]
      %v1169 = vld [vmem:[%s5 + $0x220] sm:$0xff]
      %v1170 = vld [vmem:[%s5 + $0x228] sm:$0xff]
      %v1171 = vld [vmem:[%s5 + $0x230] sm:$0xff]
      %v1172 = vld [vmem:[%s5 + $0x238] sm:$0xff]
      %v1177 = vunpack.c.l.b16 %v1097
      %v1178 = vunpack.c.l.b16 %v1098
      %v1179 = vunpack.c.l.b16 %v1099
      %v1180 = vunpack.c.l.b16 %v1100
      %v1181 = vpack.c.b16 %v1178, %v1177
      %v1182 = vpack.c.b16 %v1180, %v1179
      %v1186 = vsel %vm533, %v1061, 0
      %v1189 = vsel %vm533, %v1062, 0
      %v1192 = vsel %vm533, %v1063, 0
      %v1195 = vsel %vm533, %v1064, 0
      %v1198 = vsel %vm533, %v1065, 0
      %v1201 = vsel %vm533, %v1066, 0
      %v1204 = vsel %vm533, %v1067, 0
      %v1207 = vsel %vm533, %v1068, 0
      %v1210 = vsel %vm533, %v1069, 0
      %v1213 = vsel %vm533, %v1070, 0
      %v1216 = vsel %vm533, %v1071, 0
      %v1219 = vsel %vm533, %v1072, 0
      %v1222 = vsel %vm533, %v1073, 0
      %v1225 = vsel %vm533, %v1074, 0
      %v1228 = vsel %vm533, %v1075, 0
      %v1231 = vsel %vm533, %v1076, 0
      %v1234 = vsel %vm533, %v1077, 0
      %v1237 = vsel %vm533, %v1078, 0
      %v1240 = vsel %vm533, %v1079, 0
      %v1243 = vsel %vm533, %v1080, 0
      %v1246 = vsel %vm533, %v1081, 0
      %v1249 = vsel %vm533, %v1082, 0
      %v1252 = vsel %vm533, %v1083, 0
      %v1255 = vsel %vm533, %v1084, 0
      %v1258 = vsel %vm533, %v1085, 0
      %v1261 = vsel %vm533, %v1086, 0
      %v1264 = vsel %vm533, %v1087, 0
      %v1267 = vsel %vm533, %v1088, 0
      %v1270 = vsel %vm533, %v1089, 0
      %v1273 = vsel %vm533, %v1090, 0
      %v1276 = vsel %vm533, %v1091, 0
      %v1279 = vsel %vm533, %v1092, 0
      %v1282 = vsel %vm533, %v1093, 0
      %v1285 = vsel %vm533, %v1094, 0
      %v1288 = vsel %vm533, %v1095, 0
      %v1291 = vsel %vm533, %v1096, 0
      %1293 = vmatprep.subr.bf16.mxu0 0
      %1294 = vmatpush1.bf16.msra.mxu0 %v1181
      %1295 = vmatprep.subr.bf16.mxu0 0
      %1296 = vmatpush1.bf16.msra.mxu0 %v1182
      %1297 = vmatprep.subr.bf16.mxu0 0
      %1298 = vmatpush1.bf16.msra.mxu0 0
      %1299 = vmatprep.subr.bf16.mxu0 0
      %1300 = vmatpush1.bf16.msra.mxu0 0
      %1301 = vmatprep.subr.bf16.mxu0 0
      %1302 = vmatpush1.bf16.msra.mxu0 0
      %1303 = vmatprep.subr.bf16.mxu0 0
      %1304 = vmatpush1.bf16.msra.mxu0 0
      %1305 = vmatprep.subr.bf16.mxu0 0
      %1306 = vmatpush1.bf16.msra.mxu0 0
      %1307 = vmatprep.subr.bf16.mxu0 0
      %1308 = vmatpush1.bf16.msra.mxu0 0
      %1309 = vmatprep.subr.bf16.mxu0 0
      %1310 = vmatpush1.bf16.msra.mxu0 0
      %1311 = vmatprep.subr.bf16.mxu0 0
      %1312 = vmatpush1.bf16.msra.mxu0 0
      %1313 = vmatprep.subr.bf16.mxu0 0
      %1314 = vmatpush1.bf16.msra.mxu0 0
      %1315 = vmatprep.subr.bf16.mxu0 0
      %1316 = vmatpush1.bf16.msra.mxu0 0
      %1317 = vmatprep.subr.bf16.mxu0 0
      %1318 = vmatpush1.bf16.msra.mxu0 0
      %1319 = vmatprep.subr.bf16.mxu0 0
      %1320 = vmatpush1.bf16.msra.mxu0 0
      %1321 = vmatprep.subr.bf16.mxu0 0
      %1322 = vmatpush1.bf16.msra.mxu0 0
      %1323 = vmatprep.subr.bf16.mxu0 0
      %1324 = vmatpush1.bf16.msra.mxu0 0
      %1325 = vmatprep.mubr.bf16.mxu0 0
      %1326 = vmatmul.mubr.bf16.gmra.mrb[0].mxu0 %v1186
      %v1327 = vpop.f32.mrb[0].mxu0
      %v1328 = vadd.f32 %v1101, %v1327
      %v1329 = vpop.f32.mrb[0].mxu0
      %v1330 = vpop.f32.mrb[0].mxu0
      %v1331 = vadd.f32 %v1102, %v1330
      %v1332 = vpop.f32.mrb[0].mxu0
      %1333 = vmatprep.mubr.bf16.mxu0 0
      %1334 = vmatmul.mubr.bf16.gmra.mrb[0].mxu0 %v1189
      %v1335 = vpop.f32.mrb[0].mxu0
      %v1336 = vadd.f32 %v1103, %v1335
      %v1337 = vpop.f32.mrb[0].mxu0
      %v1338 = vpop.f32.mrb[0].mxu0
      %v1339 = vadd.f32 %v1104, %v1338
      %v1340 = vpop.f32.mrb[0].mxu0
      %1341 = vmatprep.mubr.bf16.mxu0 0
      %1342 = vmatmul.mubr.bf16.gmra.mrb[0].mxu0 %v1192
      %v1343 = vpop.f32.mrb[0].mxu0
      %v1344 = vadd.f32 %v1105, %v1343
      %v1345 = vpop.f32.mrb[0].mxu0
      %v1346 = vpop.f32.mrb[0].mxu0
      %v1347 = vadd.f32 %v1106, %v1346
      %v1348 = vpop.f32.mrb[0].mxu0
      %1349 = vmatprep.mubr.bf16.mxu0 0
      %1350 = vmatmul.mubr.bf16.gmra.mrb[0].mxu0 %v1195
      %v1351 = vpop.f32.mrb[0].mxu0
      %v1352 = vadd.f32 %v1107, %v1351
      %v1353 = vpop.f32.mrb[0].mxu0
      %v1354 = vpop.f32.mrb[0].mxu0
      %v1355 = vadd.f32 %v1108, %v1354
      %v1356 = vpop.f32.mrb[0].mxu0
      %1357 = vmatprep.mubr.bf16.mxu0 0
      %1358 = vmatmul.mubr.bf16.gmra.mrb[0].mxu0 %v1198
      %v1359 = vpop.f32.mrb[0].mxu0
      %v1360 = vadd.f32 %v1109, %v1359
      %v1361 = vpop.f32.mrb[0].mxu0
      %v1362 = vpop.f32.mrb[0].mxu0
      %v1363 = vadd.f32 %v1110, %v1362
      %v1364 = vpop.f32.mrb[0].mxu0
      %1365 = vmatprep.mubr.bf16.mxu0 0
      %1366 = vmatmul.mubr.bf16.gmra.mrb[0].mxu0 %v1201
      %v1367 = vpop.f32.mrb[0].mxu0
      %v1368 = vadd.f32 %v1111, %v1367
      %v1369 = vpop.f32.mrb[0].mxu0
      %v1370 = vpop.f32.mrb[0].mxu0
      %v1371 = vadd.f32 %v1112, %v1370
      %v1372 = vpop.f32.mrb[0].mxu0
      %1373 = vmatprep.mubr.bf16.mxu0 0
      %1374 = vmatmul.mubr.bf16.gmra.mrb[0].mxu0 %v1204
      %v1375 = vpop.f32.mrb[0].mxu0
      %v1376 = vadd.f32 %v1113, %v1375
      %v1377 = vpop.f32.mrb[0].mxu0
      %v1378 = vpop.f32.mrb[0].mxu0
      %v1379 = vadd.f32 %v1114, %v1378
      %v1380 = vpop.f32.mrb[0].mxu0
      %1381 = vmatprep.mubr.bf16.mxu0 0
      %1382 = vmatmul.mubr.bf16.gmra.mrb[0].mxu0 %v1207
      %v1383 = vpop.f32.mrb[0].mxu0
      %v1384 = vadd.f32 %v1115, %v1383
      %v1385 = vpop.f32.mrb[0].mxu0
      %v1386 = vpop.f32.mrb[0].mxu0
      %v1387 = vadd.f32 %v1116, %v1386
      %v1388 = vpop.f32.mrb[0].mxu0
      %1389 = vmatprep.mubr.bf16.mxu0 0
      %1390 = vmatmul.mubr.bf16.gmra.mrb[0].mxu0 %v1210
      %v1391 = vpop.f32.mrb[0].mxu0
      %v1392 = vadd.f32 %v1117, %v1391
      %v1393 = vpop.f32.mrb[0].mxu0
      %v1394 = vpop.f32.mrb[0].mxu0
      %v1395 = vadd.f32 %v1118, %v1394
      %v1396 = vpop.f32.mrb[0].mxu0
      %1397 = vmatprep.mubr.bf16.mxu0 0
      %1398 = vmatmul.mubr.bf16.gmra.mrb[0].mxu0 %v1213
      %v1399 = vpop.f32.mrb[0].mxu0
      %v1400 = vadd.f32 %v1119, %v1399
      %v1401 = vpop.f32.mrb[0].mxu0
      %v1402 = vpop.f32.mrb[0].mxu0
      %v1403 = vadd.f32 %v1120, %v1402
      %v1404 = vpop.f32.mrb[0].mxu0
      %1405 = vmatprep.mubr.bf16.mxu0 0
      %1406 = vmatmul.mubr.bf16.gmra.mrb[0].mxu0 %v1216
      %v1407 = vpop.f32.mrb[0].mxu0
      %v1408 = vadd.f32 %v1121, %v1407
      %v1409 = vpop.f32.mrb[0].mxu0
      %v1410 = vpop.f32.mrb[0].mxu0
      %v1411 = vadd.f32 %v1122, %v1410
      %v1412 = vpop.f32.mrb[0].mxu0
      %1413 = vmatprep.mubr.bf16.mxu0 0
      %1414 = vmatmul.mubr.bf16.gmra.mrb[0].mxu0 %v1219
      %v1415 = vpop.f32.mrb[0].mxu0
      %v1416 = vadd.f32 %v1123, %v1415
      %v1417 = vpop.f32.mrb[0].mxu0
      %v1418 = vpop.f32.mrb[0].mxu0
      %v1419 = vadd.f32 %v1124, %v1418
      %v1420 = vpop.f32.mrb[0].mxu0
      %1421 = vmatprep.mubr.bf16.mxu0 0
      %1422 = vmatmul.mubr.bf16.gmra.mrb[0].mxu0 %v1222
      %v1423 = vpop.f32.mrb[0].mxu0
      %v1424 = vadd.f32 %v1125, %v1423
      %v1425 = vpop.f32.mrb[0].mxu0
      %v1426 = vpop.f32.mrb[0].mxu0
      %v1427 = vadd.f32 %v1126, %v1426
      %v1428 = vpop.f32.mrb[0].mxu0
      %1429 = vmatprep.mubr.bf16.mxu0 0
      %1430 = vmatmul.mubr.bf16.gmra.mrb[0].mxu0 %v1225
      %v1431 = vpop.f32.mrb[0].mxu0
      %v1432 = vadd.f32 %v1127, %v1431
      %v1433 = vpop.f32.mrb[0].mxu0
      %v1434 = vpop.f32.mrb[0].mxu0
      %v1435 = vadd.f32 %v1128, %v1434
      %v1436 = vpop.f32.mrb[0].mxu0
      %1437 = vmatprep.mubr.bf16.mxu0 0
      %1438 = vmatmul.mubr.bf16.gmra.mrb[0].mxu0 %v1228
      %v1439 = vpop.f32.mrb[0].mxu0
      %v1440 = vadd.f32 %v1129, %v1439
      %v1441 = vpop.f32.mrb[0].mxu0
      %v1442 = vpop.f32.mrb[0].mxu0
      %v1443 = vadd.f32 %v1130, %v1442
      %v1444 = vpop.f32.mrb[0].mxu0
      %1445 = vmatprep.mubr.bf16.mxu0 0
      %1446 = vmatmul.mubr.bf16.gmra.mrb[0].mxu0 %v1231
      %v1447 = vpop.f32.mrb[0].mxu0
      %v1448 = vadd.f32 %v1131, %v1447
      %v1449 = vpop.f32.mrb[0].mxu0
      %v1450 = vpop.f32.mrb[0].mxu0
      %v1451 = vadd.f32 %v1132, %v1450
      %v1452 = vpop.f32.mrb[0].mxu0
      %1453 = vmatprep.mubr.bf16.mxu0 0
      %1454 = vmatmul.mubr.bf16.gmra.mrb[0].mxu0 %v1234
      %v1455 = vpop.f32.mrb[0].mxu0
      %v1456 = vadd.f32 %v1133, %v1455
      %v1457 = vpop.f32.mrb[0].mxu0
      %v1458 = vpop.f32.mrb[0].mxu0
      %v1459 = vadd.f32 %v1134, %v1458
      %v1460 = vpop.f32.mrb[0].mxu0
      %1461 = vmatprep.mubr.bf16.mxu0 0
      %1462 = vmatmul.mubr.bf16.gmra.mrb[0].mxu0 %v1237
      %v1463 = vpop.f32.mrb[0].mxu0
      %v1464 = vadd.f32 %v1135, %v1463
      %v1465 = vpop.f32.mrb[0].mxu0
      %v1466 = vpop.f32.mrb[0].mxu0
      %v1467 = vadd.f32 %v1136, %v1466
      %v1468 = vpop.f32.mrb[0].mxu0
      %1469 = vmatprep.mubr.bf16.mxu0 0
      %1470 = vmatmul.mubr.bf16.gmra.mrb[0].mxu0 %v1240
      %v1471 = vpop.f32.mrb[0].mxu0
      %v1472 = vadd.f32 %v1137, %v1471
      %v1473 = vpop.f32.mrb[0].mxu0
      %v1474 = vpop.f32.mrb[0].mxu0
      %v1475 = vadd.f32 %v1138, %v1474
      %v1476 = vpop.f32.mrb[0].mxu0
      %1477 = vmatprep.mubr.bf16.mxu0 0
      %1478 = vmatmul.mubr.bf16.gmra.mrb[0].mxu0 %v1243
      %v1479 = vpop.f32.mrb[0].mxu0
      %v1480 = vadd.f32 %v1139, %v1479
      %v1481 = vpop.f32.mrb[0].mxu0
      %v1482 = vpop.f32.mrb[0].mxu0
      %v1483 = vadd.f32 %v1140, %v1482
      %v1484 = vpop.f32.mrb[0].mxu0
      %1485 = vmatprep.mubr.bf16.mxu0 0
      %1486 = vmatmul.mubr.bf16.gmra.mrb[0].mxu0 %v1246
      %v1487 = vpop.f32.mrb[0].mxu0
      %v1488 = vadd.f32 %v1141, %v1487
      %v1489 = vpop.f32.mrb[0].mxu0
      %v1490 = vpop.f32.mrb[0].mxu0
      %v1491 = vadd.f32 %v1142, %v1490
      %v1492 = vpop.f32.mrb[0].mxu0
      %1493 = vmatprep.mubr.bf16.mxu0 0
      %1494 = vmatmul.mubr.bf16.gmra.mrb[0].mxu0 %v1249
      %v1495 = vpop.f32.mrb[0].mxu0
      %v1496 = vadd.f32 %v1143, %v1495
      %v1497 = vpop.f32.mrb[0].mxu0
      %v1498 = vpop.f32.mrb[0].mxu0
      %v1499 = vadd.f32 %v1144, %v1498
      %v1500 = vpop.f32.mrb[0].mxu0
      %1501 = vmatprep.mubr.bf16.mxu0 0
      %1502 = vmatmul.mubr.bf16.gmra.mrb[0].mxu0 %v1252
      %v1503 = vpop.f32.mrb[0].mxu0
      %v1504 = vadd.f32 %v1145, %v1503
      %v1505 = vpop.f32.mrb[0].mxu0
      %v1506 = vpop.f32.mrb[0].mxu0
      %v1507 = vadd.f32 %v1146, %v1506
      %v1508 = vpop.f32.mrb[0].mxu0
      %1509 = vmatprep.mubr.bf16.mxu0 0
      %1510 = vmatmul.mubr.bf16.gmra.mrb[0].mxu0 %v1255
      %v1511 = vpop.f32.mrb[0].mxu0
      %v1512 = vadd.f32 %v1147, %v1511
      %v1513 = vpop.f32.mrb[0].mxu0
      %v1514 = vpop.f32.mrb[0].mxu0
      %v1515 = vadd.f32 %v1148, %v1514
      %v1516 = vpop.f32.mrb[0].mxu0
      %1517 = vmatprep.mubr.bf16.mxu0 0
      %1518 = vmatmul.mubr.bf16.gmra.mrb[0].mxu0 %v1258
      %v1519 = vpop.f32.mrb[0].mxu0
      %v1520 = vadd.f32 %v1149, %v1519
      %v1521 = vpop.f32.mrb[0].mxu0
      %v1522 = vpop.f32.mrb[0].mxu0
      %v1523 = vadd.f32 %v1150, %v1522
      %v1524 = vpop.f32.mrb[0].mxu0
      %1525 = vmatprep.mubr.bf16.mxu0 0
      %1526 = vmatmul.mubr.bf16.gmra.mrb[0].mxu0 %v1261
      %v1527 = vpop.f32.mrb[0].mxu0
      %v1528 = vadd.f32 %v1151, %v1527
      %v1529 = vpop.f32.mrb[0].mxu0
      %v1530 = vpop.f32.mrb[0].mxu0
      %v1531 = vadd.f32 %v1152, %v1530
      %v1532 = vpop.f32.mrb[0].mxu0
      %1533 = vmatprep.mubr.bf16.mxu0 0
      %1534 = vmatmul.mubr.bf16.gmra.mrb[0].mxu0 %v1264
      %v1535 = vpop.f32.mrb[0].mxu0
      %v1536 = vadd.f32 %v1153, %v1535
      %v1537 = vpop.f32.mrb[0].mxu0
      %v1538 = vpop.f32.mrb[0].mxu0
      %v1539 = vadd.f32 %v1154, %v1538
      %v1540 = vpop.f32.mrb[0].mxu0
      %1541 = vmatprep.mubr.bf16.mxu0 0
      %1542 = vmatmul.mubr.bf16.gmra.mrb[0].mxu0 %v1267
      %v1543 = vpop.f32.mrb[0].mxu0
      %v1544 = vadd.f32 %v1155, %v1543
      %v1545 = vpop.f32.mrb[0].mxu0
      %v1546 = vpop.f32.mrb[0].mxu0
      %v1547 = vadd.f32 %v1156, %v1546
      %v1548 = vpop.f32.mrb[0].mxu0
      %1549 = vmatprep.mubr.bf16.mxu0 0
      %1550 = vmatmul.mubr.bf16.gmra.mrb[0].mxu0 %v1270
      %v1551 = vpop.f32.mrb[0].mxu0
      %v1552 = vadd.f32 %v1157, %v1551
      %v1553 = vpop.f32.mrb[0].mxu0
      %v1554 = vpop.f32.mrb[0].mxu0
      %v1555 = vadd.f32 %v1158, %v1554
      %v1556 = vpop.f32.mrb[0].mxu0
      %1557 = vmatprep.mubr.bf16.mxu0 0
      %1558 = vmatmul.mubr.bf16.gmra.mrb[0].mxu0 %v1273
      %v1559 = vpop.f32.mrb[0].mxu0
      %v1560 = vadd.f32 %v1159, %v1559
      %v1561 = vpop.f32.mrb[0].mxu0
      %v1562 = vpop.f32.mrb[0].mxu0
      %v1563 = vadd.f32 %v1160, %v1562
      %v1564 = vpop.f32.mrb[0].mxu0
      %1565 = vmatprep.mubr.bf16.mxu0 0
      %1566 = vmatmul.mubr.bf16.gmra.mrb[0].mxu0 %v1276
      %v1567 = vpop.f32.mrb[0].mxu0
      %v1568 = vadd.f32 %v1161, %v1567
      %v1569 = vpop.f32.mrb[0].mxu0
      %v1570 = vpop.f32.mrb[0].mxu0
      %v1571 = vadd.f32 %v1162, %v1570
      %v1572 = vpop.f32.mrb[0].mxu0
      %1573 = vmatprep.mubr.bf16.mxu0 0
      %1574 = vmatmul.mubr.bf16.gmra.mrb[0].mxu0 %v1279
      %v1575 = vpop.f32.mrb[0].mxu0
      %v1576 = vadd.f32 %v1163, %v1575
      %v1577 = vpop.f32.mrb[0].mxu0
      %v1578 = vpop.f32.mrb[0].mxu0
      %v1579 = vadd.f32 %v1164, %v1578
      %v1580 = vpop.f32.mrb[0].mxu0
      %1581 = vmatprep.mubr.bf16.mxu0 0
      %1582 = vmatmul.mubr.bf16.gmra.mrb[0].mxu0 %v1282
      %v1583 = vpop.f32.mrb[0].mxu0
      %v1584 = vadd.f32 %v1165, %v1583
      %v1585 = vpop.f32.mrb[0].mxu0
      %v1586 = vpop.f32.mrb[0].mxu0
      %v1587 = vadd.f32 %v1166, %v1586
      %v1588 = vpop.f32.mrb[0].mxu0
      %1589 = vmatprep.mubr.bf16.mxu0 0
      %1590 = vmatmul.mubr.bf16.gmra.mrb[0].mxu0 %v1285
      %v1591 = vpop.f32.mrb[0].mxu0
      %v1592 = vadd.f32 %v1167, %v1591
      %v1593 = vpop.f32.mrb[0].mxu0
      %v1594 = vpop.f32.mrb[0].mxu0
      %v1595 = vadd.f32 %v1168, %v1594
      %v1596 = vpop.f32.mrb[0].mxu0
      %1597 = vmatprep.mubr.bf16.mxu0 0
      %1598 = vmatmul.mubr.bf16.gmra.mrb[0].mxu0 %v1288
      %v1599 = vpop.f32.mrb[0].mxu0
      %v1600 = vadd.f32 %v1169, %v1599
      %v1601 = vpop.f32.mrb[0].mxu0
      %v1602 = vpop.f32.mrb[0].mxu0
      %v1603 = vadd.f32 %v1170, %v1602
      %v1604 = vpop.f32.mrb[0].mxu0
      %1605 = vmatprep.mubr.bf16.mxu0 0
      %1606 = vmatmul.mubr.bf16.gmra.mrb[0].mxu0 %v1291
      %v1607 = vpop.f32.mrb[0].mxu0
      %v1608 = vadd.f32 %v1171, %v1607
      %v1609 = vpop.f32.mrb[0].mxu0
      %v1610 = vpop.f32.mrb[0].mxu0
      %v1611 = vadd.f32 %v1172, %v1610
      %v1612 = vpop.f32.mrb[0].mxu0
      %1613 = vdwg.mxu0
      %vm1614 = vcmask 31744
      %v1615 = vsel %vm1614, %v1328, -inf
      %v1616 = vsel %vm1614, %v1360, -inf
      %v1617 = vmax.f32 %v1615, %v1616
      %v1618 = vsel %vm1614, %v1392, -inf
      %v1619 = vmax.f32 %v1617, %v1618
      %v1620 = vsel %vm1614, %v1424, -inf
      %v1621 = vmax.f32 %v1619, %v1620
      %v1622 = vsel %vm1614, %v1456, -inf
      %v1623 = vmax.f32 %v1621, %v1622
      %v1624 = vsel %vm1614, %v1488, -inf
      %v1625 = vmax.f32 %v1623, %v1624
      %v1626 = vsel %vm1614, %v1520, -inf
      %v1627 = vmax.f32 %v1625, %v1626
      %v1628 = vsel %vm1614, %v1552, -inf
      %v1629 = vmax.f32 %v1627, %v1628
      %v1630 = vsel %vm1614, %v1584, -inf
      %v1631 = vmax.f32 %v1629, %v1630
      %v1632 = vsel %vm1614, %v1331, -inf
      %v1633 = vsel %vm1614, %v1363, -inf
      %v1634 = vmax.f32 %v1632, %v1633
      %v1635 = vsel %vm1614, %v1395, -inf
      %v1636 = vmax.f32 %v1634, %v1635
      %v1637 = vsel %vm1614, %v1427, -inf
      %v1638 = vmax.f32 %v1636, %v1637
      %v1639 = vsel %vm1614, %v1459, -inf
      %v1640 = vmax.f32 %v1638, %v1639
      %v1641 = vsel %vm1614, %v1491, -inf
      %v1642 = vmax.f32 %v1640, %v1641
      %v1643 = vsel %vm1614, %v1523, -inf
      %v1644 = vmax.f32 %v1642, %v1643
      %v1645 = vsel %vm1614, %v1555, -inf
      %v1646 = vmax.f32 %v1644, %v1645
      %v1647 = vsel %vm1614, %v1587, -inf
      %v1648 = vmax.f32 %v1646, %v1647
      %v1649 = vsel %vm1614, %v1336, -inf
      %v1650 = vsel %vm1614, %v1368, -inf
      %v1651 = vmax.f32 %v1649, %v1650
      %v1652 = vsel %vm1614, %v1400, -inf
      %v1653 = vmax.f32 %v1651, %v1652
      %v1654 = vsel %vm1614, %v1432, -inf
      %v1655 = vmax.f32 %v1653, %v1654
      %v1656 = vsel %vm1614, %v1464, -inf
      %v1657 = vmax.f32 %v1655, %v1656
      %v1658 = vsel %vm1614, %v1496, -inf
      %v1659 = vmax.f32 %v1657, %v1658
      %v1660 = vsel %vm1614, %v1528, -inf
      %v1661 = vmax.f32 %v1659, %v1660
      %v1662 = vsel %vm1614, %v1560, -inf
      %v1663 = vmax.f32 %v1661, %v1662
      %v1664 = vsel %vm1614, %v1592, -inf
      %v1665 = vmax.f32 %v1663, %v1664
      %v1666 = vsel %vm1614, %v1339, -inf
      %v1667 = vsel %vm1614, %v1371, -inf
      %v1668 = vmax.f32 %v1666, %v1667
      %v1669 = vsel %vm1614, %v1403, -inf
      %v1670 = vmax.f32 %v1668, %v1669
      %v1671 = vsel %vm1614, %v1435, -inf
      %v1672 = vmax.f32 %v1670, %v1671
      %v1673 = vsel %vm1614, %v1467, -inf
      %v1674 = vmax.f32 %v1672, %v1673
      %v1675 = vsel %vm1614, %v1499, -inf
      %v1676 = vmax.f32 %v1674, %v1675
      %v1677 = vsel %vm1614, %v1531, -inf
      %v1678 = vmax.f32 %v1676, %v1677
      %v1679 = vsel %vm1614, %v1563, -inf
      %v1680 = vmax.f32 %v1678, %v1679
      %v1681 = vsel %vm1614, %v1595, -inf
      %v1682 = vmax.f32 %v1680, %v1681
      %v1683 = vsel %vm1614, %v1344, -inf
      %v1684 = vsel %vm1614, %v1376, -inf
      %v1685 = vmax.f32 %v1683, %v1684
      %v1686 = vsel %vm1614, %v1408, -inf
      %v1687 = vmax.f32 %v1685, %v1686
      %v1688 = vsel %vm1614, %v1440, -inf
      %v1689 = vmax.f32 %v1687, %v1688
      %v1690 = vsel %vm1614, %v1472, -inf
      %v1691 = vmax.f32 %v1689, %v1690
      %v1692 = vsel %vm1614, %v1504, -inf
      %v1693 = vmax.f32 %v1691, %v1692
      %v1694 = vsel %vm1614, %v1536, -inf
      %v1695 = vmax.f32 %v1693, %v1694
      %v1696 = vsel %vm1614, %v1568, -inf
      %v1697 = vmax.f32 %v1695, %v1696
      %v1698 = vsel %vm1614, %v1600, -inf
      %v1699 = vmax.f32 %v1697, %v1698
      %v1700 = vsel %vm1614, %v1347, -inf
      %v1701 = vsel %vm1614, %v1379, -inf
      %v1702 = vmax.f32 %v1700, %v1701
      %v1703 = vsel %vm1614, %v1411, -inf
      %v1704 = vmax.f32 %v1702, %v1703
      %v1705 = vsel %vm1614, %v1443, -inf
      %v1706 = vmax.f32 %v1704, %v1705
      %v1707 = vsel %vm1614, %v1475, -inf
      %v1708 = vmax.f32 %v1706, %v1707
      %v1709 = vsel %vm1614, %v1507, -inf
      %v1710 = vmax.f32 %v1708, %v1709
      %v1711 = vsel %vm1614, %v1539, -inf
      %v1712 = vmax.f32 %v1710, %v1711
      %v1713 = vsel %vm1614, %v1571, -inf
      %v1714 = vmax.f32 %v1712, %v1713
      %v1715 = vsel %vm1614, %v1603, -inf
      %v1716 = vmax.f32 %v1714, %v1715
      %v1717 = vsel %vm1614, %v1352, -inf
      %v1718 = vsel %vm1614, %v1384, -inf
      %v1719 = vmax.f32 %v1717, %v1718
      %v1720 = vsel %vm1614, %v1416, -inf
      %v1721 = vmax.f32 %v1719, %v1720
      %v1722 = vsel %vm1614, %v1448, -inf
      %v1723 = vmax.f32 %v1721, %v1722
      %v1724 = vsel %vm1614, %v1480, -inf
      %v1725 = vmax.f32 %v1723, %v1724
      %v1726 = vsel %vm1614, %v1512, -inf
      %v1727 = vmax.f32 %v1725, %v1726
      %v1728 = vsel %vm1614, %v1544, -inf
      %v1729 = vmax.f32 %v1727, %v1728
      %v1730 = vsel %vm1614, %v1576, -inf
      %v1731 = vmax.f32 %v1729, %v1730
      %v1732 = vsel %vm1614, %v1608, -inf
      %v1733 = vmax.f32 %v1731, %v1732
      %v1734 = vsel %vm1614, %v1355, -inf
      %v1735 = vsel %vm1614, %v1387, -inf
      %v1736 = vmax.f32 %v1734, %v1735
      %v1737 = vsel %vm1614, %v1419, -inf
      %v1738 = vmax.f32 %v1736, %v1737
      %v1739 = vsel %vm1614, %v1451, -inf
      %v1740 = vmax.f32 %v1738, %v1739
      %v1741 = vsel %vm1614, %v1483, -inf
      %v1742 = vmax.f32 %v1740, %v1741
      %v1743 = vsel %vm1614, %v1515, -inf
      %v1744 = vmax.f32 %v1742, %v1743
      %v1745 = vsel %vm1614, %v1547, -inf
      %v1746 = vmax.f32 %v1744, %v1745
      %v1747 = vsel %vm1614, %v1579, -inf
      %v1748 = vmax.f32 %v1746, %v1747
      %v1749 = vsel %vm1614, %v1611, -inf
      %v1750 = vmax.f32 %v1748, %v1749
      %v1751 = vsub.f32 %v1328, %v1631
      %v1752 = vsub.f32 %v1331, %v1648
      %v1753 = vsub.f32 %v1336, %v1665
      %v1754 = vsub.f32 %v1339, %v1682
      %v1755 = vsub.f32 %v1344, %v1699
      %v1756 = vsub.f32 %v1347, %v1716
      %v1757 = vsub.f32 %v1352, %v1733
      %v1758 = vsub.f32 %v1355, %v1750
      %v1759 = vsub.f32 %v1360, %v1631
      %v1760 = vsub.f32 %v1363, %v1648
      %v1761 = vsub.f32 %v1368, %v1665
      %v1762 = vsub.f32 %v1371, %v1682
      %v1763 = vsub.f32 %v1376, %v1699
      %v1764 = vsub.f32 %v1379, %v1716
      %v1765 = vsub.f32 %v1384, %v1733
      %v1766 = vsub.f32 %v1387, %v1750
      %v1767 = vsub.f32 %v1392, %v1631
      %v1768 = vsub.f32 %v1395, %v1648
      %v1769 = vsub.f32 %v1400, %v1665
      %v1770 = vsub.f32 %v1403, %v1682
      %v1771 = vsub.f32 %v1408, %v1699
      %v1772 = vsub.f32 %v1411, %v1716
      %v1773 = vsub.f32 %v1416, %v1733
      %v1774 = vsub.f32 %v1419, %v1750
      %v1775 = vsub.f32 %v1424, %v1631
      %v1776 = vsub.f32 %v1427, %v1648
      %v1777 = vsub.f32 %v1432, %v1665
      %v1778 = vsub.f32 %v1435, %v1682
      %v1779 = vsub.f32 %v1440, %v1699
      %v1780 = vsub.f32 %v1443, %v1716
      %v1781 = vsub.f32 %v1448, %v1733
      %v1782 = vsub.f32 %v1451, %v1750
      %v1783 = vsub.f32 %v1456, %v1631
      %v1784 = vsub.f32 %v1459, %v1648
      %v1785 = vsub.f32 %v1464, %v1665
      %v1786 = vsub.f32 %v1467, %v1682
      %v1787 = vsub.f32 %v1472, %v1699
      %v1788 = vsub.f32 %v1475, %v1716
      %v1789 = vsub.f32 %v1480, %v1733
      %v1790 = vsub.f32 %v1483, %v1750
      %v1791 = vsub.f32 %v1488, %v1631
      %v1792 = vsub.f32 %v1491, %v1648
      %v1793 = vsub.f32 %v1496, %v1665
      %v1794 = vsub.f32 %v1499, %v1682
      %v1795 = vsub.f32 %v1504, %v1699
      %v1796 = vsub.f32 %v1507, %v1716
      %v1797 = vsub.f32 %v1512, %v1733
      %v1798 = vsub.f32 %v1515, %v1750
      %v1799 = vsub.f32 %v1520, %v1631
      %v1800 = vsub.f32 %v1523, %v1648
      %v1801 = vsub.f32 %v1528, %v1665
      %v1802 = vsub.f32 %v1531, %v1682
      %v1803 = vsub.f32 %v1536, %v1699
      %v1804 = vsub.f32 %v1539, %v1716
      %v1805 = vsub.f32 %v1544, %v1733
      %v1806 = vsub.f32 %v1547, %v1750
      %v1807 = vsub.f32 %v1552, %v1631
      %v1808 = vsub.f32 %v1555, %v1648
      %v1809 = vsub.f32 %v1560, %v1665
      %v1810 = vsub.f32 %v1563, %v1682
      %v1811 = vsub.f32 %v1568, %v1699
      %v1812 = vsub.f32 %v1571, %v1716
      %v1813 = vsub.f32 %v1576, %v1733
      %v1814 = vsub.f32 %v1579, %v1750
      %v1815 = vsub.f32 %v1584, %v1631
      %v1816 = vsub.f32 %v1587, %v1648
      %v1817 = vsub.f32 %v1592, %v1665
      %v1818 = vsub.f32 %v1595, %v1682
      %v1819 = vsub.f32 %v1600, %v1699
      %v1820 = vsub.f32 %v1603, %v1716
      %v1821 = vsub.f32 %v1608, %v1733
      %v1822 = vsub.f32 %v1611, %v1750
      %v1823 = vmul.f32 %v1751, 1.442695
      %v1824 = vpow.pop %v1823
      %v1825 = vmul.f32 %v1752, 1.442695
      %v1826 = vpow.pop %v1825
      %v1827 = vmul.f32 %v1753, 1.442695
      %v1828 = vpow.pop %v1827
      %v1829 = vmul.f32 %v1754, 1.442695
      %v1830 = vpow.pop %v1829
      %v1831 = vmul.f32 %v1755, 1.442695
      %v1832 = vpow.pop %v1831
      %v1833 = vmul.f32 %v1756, 1.442695
      %v1834 = vpow.pop %v1833
      %v1835 = vmul.f32 %v1757, 1.442695
      %v1836 = vpow.pop %v1835
      %v1837 = vmul.f32 %v1758, 1.442695
      %v1838 = vpow.pop %v1837
      %v1839 = vmul.f32 %v1759, 1.442695
      %v1840 = vpow.pop %v1839
      %v1841 = vmul.f32 %v1760, 1.442695
      %v1842 = vpow.pop %v1841
      %v1843 = vmul.f32 %v1761, 1.442695
      %v1844 = vpow.pop %v1843
      %v1845 = vmul.f32 %v1762, 1.442695
      %v1846 = vpow.pop %v1845
      %v1847 = vmul.f32 %v1763, 1.442695
      %v1848 = vpow.pop %v1847
      %v1849 = vmul.f32 %v1764, 1.442695
      %v1850 = vpow.pop %v1849
      %v1851 = vmul.f32 %v1765, 1.442695
      %v1852 = vpow.pop %v1851
      %v1853 = vmul.f32 %v1766, 1.442695
      %v1854 = vpow.pop %v1853
      %v1855 = vmul.f32 %v1767, 1.442695
      %v1856 = vpow.pop %v1855
      %v1857 = vmul.f32 %v1768, 1.442695
      %v1858 = vpow.pop %v1857
      %v1859 = vmul.f32 %v1769, 1.442695
      %v1860 = vpow.pop %v1859
      %v1861 = vmul.f32 %v1770, 1.442695
      %v1862 = vpow.pop %v1861
      %v1863 = vmul.f32 %v1771, 1.442695
      %v1864 = vpow.pop %v1863
      %v1865 = vmul.f32 %v1772, 1.442695
      %v1866 = vpow.pop %v1865
      %v1867 = vmul.f32 %v1773, 1.442695
      %v1868 = vpow.pop %v1867
      %v1869 = vmul.f32 %v1774, 1.442695
      %v1870 = vpow.pop %v1869
      %v1871 = vmul.f32 %v1775, 1.442695
      %v1872 = vpow.pop %v1871
      %v1873 = vmul.f32 %v1776, 1.442695
      %v1874 = vpow.pop %v1873
      %v1875 = vmul.f32 %v1777, 1.442695
      %v1876 = vpow.pop %v1875
      %v1877 = vmul.f32 %v1778, 1.442695
      %v1878 = vpow.pop %v1877
      %v1879 = vmul.f32 %v1779, 1.442695
      %v1880 = vpow.pop %v1879
      %v1881 = vmul.f32 %v1780, 1.442695
      %v1882 = vpow.pop %v1881
      %v1883 = vmul.f32 %v1781, 1.442695
      %v1884 = vpow.pop %v1883
      %v1885 = vmul.f32 %v1782, 1.442695
      %v1886 = vpow.pop %v1885
      %v1887 = vmul.f32 %v1783, 1.442695
      %v1888 = vpow.pop %v1887
      %v1889 = vmul.f32 %v1784, 1.442695
      %v1890 = vpow.pop %v1889
      %v1891 = vmul.f32 %v1785, 1.442695
      %v1892 = vpow.pop %v1891
      %v1893 = vmul.f32 %v1786, 1.442695
      %v1894 = vpow.pop %v1893
      %v1895 = vmul.f32 %v1787, 1.442695
      %v1896 = vpow.pop %v1895
      %v1897 = vmul.f32 %v1788, 1.442695
      %v1898 = vpow.pop %v1897
      %v1899 = vmul.f32 %v1789, 1.442695
      %v1900 = vpow.pop %v1899
      %v1901 = vmul.f32 %v1790, 1.442695
      %v1902 = vpow.pop %v1901
      %v1903 = vmul.f32 %v1791, 1.442695
      %v1904 = vpow.pop %v1903
      %v1905 = vmul.f32 %v1792, 1.442695
      %v1906 = vpow.pop %v1905
      %v1907 = vmul.f32 %v1793, 1.442695
      %v1908 = vpow.pop %v1907
      %v1909 = vmul.f32 %v1794, 1.442695
      %v1910 = vpow.pop %v1909
      %v1911 = vmul.f32 %v1795, 1.442695
      %v1912 = vpow.pop %v1911
      %v1913 = vmul.f32 %v1796, 1.442695
      %v1914 = vpow.pop %v1913
      %v1915 = vmul.f32 %v1797, 1.442695
      %v1916 = vpow.pop %v1915
      %v1917 = vmul.f32 %v1798, 1.442695
      %v1918 = vpow.pop %v1917
      %v1919 = vmul.f32 %v1799, 1.442695
      %v1920 = vpow.pop %v1919
      %v1921 = vmul.f32 %v1800, 1.442695
      %v1922 = vpow.pop %v1921
      %v1923 = vmul.f32 %v1801, 1.442695
      %v1924 = vpow.pop %v1923
      %v1925 = vmul.f32 %v1802, 1.442695
      %v1926 = vpow.pop %v1925
      %v1927 = vmul.f32 %v1803, 1.442695
      %v1928 = vpow.pop %v1927
      %v1929 = vmul.f32 %v1804, 1.442695
      %v1930 = vpow.pop %v1929
      %v1931 = vmul.f32 %v1805, 1.442695
      %v1932 = vpow.pop %v1931
      %v1933 = vmul.f32 %v1806, 1.442695
      %v1934 = vpow.pop %v1933
      %v1935 = vmul.f32 %v1807, 1.442695
      %v1936 = vpow.pop %v1935
      %v1937 = vmul.f32 %v1808, 1.442695
      %v1938 = vpow.pop %v1937
      %v1939 = vmul.f32 %v1809, 1.442695
      %v1940 = vpow.pop %v1939
      %v1941 = vmul.f32 %v1810, 1.442695
      %v1942 = vpow.pop %v1941
      %v1943 = vmul.f32 %v1811, 1.442695
      %v1944 = vpow.pop %v1943
      %v1945 = vmul.f32 %v1812, 1.442695
      %v1946 = vpow.pop %v1945
      %v1947 = vmul.f32 %v1813, 1.442695
      %v1948 = vpow.pop %v1947
      %v1949 = vmul.f32 %v1814, 1.442695
      %v1950 = vpow.pop %v1949
      %v1951 = vmul.f32 %v1815, 1.442695
      %v1952 = vpow.pop %v1951
      %v1953 = vmul.f32 %v1816, 1.442695
      %v1954 = vpow.pop %v1953
      %v1955 = vmul.f32 %v1817, 1.442695
      %v1956 = vpow.pop %v1955
      %v1957 = vmul.f32 %v1818, 1.442695
      %v1958 = vpow.pop %v1957
      %v1959 = vmul.f32 %v1819, 1.442695
      %v1960 = vpow.pop %v1959
      %v1961 = vmul.f32 %v1820, 1.442695
      %v1962 = vpow.pop %v1961
      %v1963 = vmul.f32 %v1821, 1.442695
      %v1964 = vpow.pop %v1963
      %v1965 = vmul.f32 %v1822, 1.442695
      %v1966 = vpow.pop %v1965
      %v1967 = vsel %vm1614, %v1824, 0.0
      %v1968 = vsel %vm1614, %v1840, 0.0
      %v1969 = vadd.f32 %v1967, %v1968
      %v1970 = vsel %vm1614, %v1856, 0.0
      %v1971 = vadd.f32 %v1969, %v1970
      %v1972 = vsel %vm1614, %v1872, 0.0
      %v1973 = vadd.f32 %v1971, %v1972
      %v1974 = vsel %vm1614, %v1888, 0.0
      %v1975 = vadd.f32 %v1973, %v1974
      %v1976 = vsel %vm1614, %v1904, 0.0
      %v1977 = vadd.f32 %v1975, %v1976
      %v1978 = vsel %vm1614, %v1920, 0.0
      %v1979 = vadd.f32 %v1977, %v1978
      %v1980 = vsel %vm1614, %v1936, 0.0
      %v1981 = vadd.f32 %v1979, %v1980
      %v1982 = vsel %vm1614, %v1952, 0.0
      %v1983 = vadd.f32 %v1981, %v1982
      %v1984 = vsel %vm1614, %v1826, 0.0
      %v1985 = vsel %vm1614, %v1842, 0.0
      %v1986 = vadd.f32 %v1984, %v1985
      %v1987 = vsel %vm1614, %v1858, 0.0
      %v1988 = vadd.f32 %v1986, %v1987
      %v1989 = vsel %vm1614, %v1874, 0.0
      %v1990 = vadd.f32 %v1988, %v1989
      %v1991 = vsel %vm1614, %v1890, 0.0
      %v1992 = vadd.f32 %v1990, %v1991
      %v1993 = vsel %vm1614, %v1906, 0.0
      %v1994 = vadd.f32 %v1992, %v1993
      %v1995 = vsel %vm1614, %v1922, 0.0
      %v1996 = vadd.f32 %v1994, %v1995
      %v1997 = vsel %vm1614, %v1938, 0.0
      %v1998 = vadd.f32 %v1996, %v1997
      %v1999 = vsel %vm1614, %v1954, 0.0
      %v2000 = vadd.f32 %v1998, %v1999
      %v2001 = vsel %vm1614, %v1828, 0.0
      %v2002 = vsel %vm1614, %v1844, 0.0
      %v2003 = vadd.f32 %v2001, %v2002
      %v2004 = vsel %vm1614, %v1860, 0.0
      %v2005 = vadd.f32 %v2003, %v2004
      %v2006 = vsel %vm1614, %v1876, 0.0
      %v2007 = vadd.f32 %v2005, %v2006
      %v2008 = vsel %vm1614, %v1892, 0.0
      %v2009 = vadd.f32 %v2007, %v2008
      %v2010 = vsel %vm1614, %v1908, 0.0
      %v2011 = vadd.f32 %v2009, %v2010
      %v2012 = vsel %vm1614, %v1924, 0.0
      %v2013 = vadd.f32 %v2011, %v2012
      %v2014 = vsel %vm1614, %v1940, 0.0
      %v2015 = vadd.f32 %v2013, %v2014
      %v2016 = vsel %vm1614, %v1956, 0.0
      %v2017 = vadd.f32 %v2015, %v2016
      %v2018 = vsel %vm1614, %v1830, 0.0
      %v2019 = vsel %vm1614, %v1846, 0.0
      %v2020 = vadd.f32 %v2018, %v2019
      %v2021 = vsel %vm1614, %v1862, 0.0
      %v2022 = vadd.f32 %v2020, %v2021
      %v2023 = vsel %vm1614, %v1878, 0.0
      %v2024 = vadd.f32 %v2022, %v2023
      %v2025 = vsel %vm1614, %v1894, 0.0
      %v2026 = vadd.f32 %v2024, %v2025
      %v2027 = vsel %vm1614, %v1910, 0.0
      %v2028 = vadd.f32 %v2026, %v2027
      %v2029 = vsel %vm1614, %v1926, 0.0
      %v2030 = vadd.f32 %v2028, %v2029
      %v2031 = vsel %vm1614, %v1942, 0.0
      %v2032 = vadd.f32 %v2030, %v2031
      %v2033 = vsel %vm1614, %v1958, 0.0
      %v2034 = vadd.f32 %v2032, %v2033
      %v2035 = vsel %vm1614, %v1832, 0.0
      %v2036 = vsel %vm1614, %v1848, 0.0
      %v2037 = vadd.f32 %v2035, %v2036
      %v2038 = vsel %vm1614, %v1864, 0.0
      %v2039 = vadd.f32 %v2037, %v2038
      %v2040 = vsel %vm1614, %v1880, 0.0
      %v2041 = vadd.f32 %v2039, %v2040
      %v2042 = vsel %vm1614, %v1896, 0.0
      %v2043 = vadd.f32 %v2041, %v2042
      %v2044 = vsel %vm1614, %v1912, 0.0
      %v2045 = vadd.f32 %v2043, %v2044
      %v2046 = vsel %vm1614, %v1928, 0.0
      %v2047 = vadd.f32 %v2045, %v2046
      %v2048 = vsel %vm1614, %v1944, 0.0
      %v2049 = vadd.f32 %v2047, %v2048
      %v2050 = vsel %vm1614, %v1960, 0.0
      %v2051 = vadd.f32 %v2049, %v2050
      %v2052 = vsel %vm1614, %v1834, 0.0
      %v2053 = vsel %vm1614, %v1850, 0.0
      %v2054 = vadd.f32 %v2052, %v2053
      %v2055 = vsel %vm1614, %v1866, 0.0
      %v2056 = vadd.f32 %v2054, %v2055
      %v2057 = vsel %vm1614, %v1882, 0.0
      %v2058 = vadd.f32 %v2056, %v2057
      %v2059 = vsel %vm1614, %v1898, 0.0
      %v2060 = vadd.f32 %v2058, %v2059
      %v2061 = vsel %vm1614, %v1914, 0.0
      %v2062 = vadd.f32 %v2060, %v2061
      %v2063 = vsel %vm1614, %v1930, 0.0
      %v2064 = vadd.f32 %v2062, %v2063
      %v2065 = vsel %vm1614, %v1946, 0.0
      %v2066 = vadd.f32 %v2064, %v2065
      %v2067 = vsel %vm1614, %v1962, 0.0
      %v2068 = vadd.f32 %v2066, %v2067
      %v2069 = vsel %vm1614, %v1836, 0.0
      %v2070 = vsel %vm1614, %v1852, 0.0
      %v2071 = vadd.f32 %v2069, %v2070
      %v2072 = vsel %vm1614, %v1868, 0.0
      %v2073 = vadd.f32 %v2071, %v2072
      %v2074 = vsel %vm1614, %v1884, 0.0
      %v2075 = vadd.f32 %v2073, %v2074
      %v2076 = vsel %vm1614, %v1900, 0.0
      %v2077 = vadd.f32 %v2075, %v2076
      %v2078 = vsel %vm1614, %v1916, 0.0
      %v2079 = vadd.f32 %v2077, %v2078
      %v2080 = vsel %vm1614, %v1932, 0.0
      %v2081 = vadd.f32 %v2079, %v2080
      %v2082 = vsel %vm1614, %v1948, 0.0
      %v2083 = vadd.f32 %v2081, %v2082
      %v2084 = vsel %vm1614, %v1964, 0.0
      %v2085 = vadd.f32 %v2083, %v2084
      %v2086 = vsel %vm1614, %v1838, 0.0
      %v2087 = vsel %vm1614, %v1854, 0.0
      %v2088 = vadd.f32 %v2086, %v2087
      %v2089 = vsel %vm1614, %v1870, 0.0
      %v2090 = vadd.f32 %v2088, %v2089
      %v2091 = vsel %vm1614, %v1886, 0.0
      %v2092 = vadd.f32 %v2090, %v2091
      %v2093 = vsel %vm1614, %v1902, 0.0
      %v2094 = vadd.f32 %v2092, %v2093
      %v2095 = vsel %vm1614, %v1918, 0.0
      %v2096 = vadd.f32 %v2094, %v2095
      %v2097 = vsel %vm1614, %v1934, 0.0
      %v2098 = vadd.f32 %v2096, %v2097
      %v2099 = vsel %vm1614, %v1950, 0.0
      %v2100 = vadd.f32 %v2098, %v2099
      %v2101 = vsel %vm1614, %v1966, 0.0
      %v2102 = vadd.f32 %v2100, %v2101
      %v2103 = vpack.c.bf16 %v1826, %v1824
      %v2104 = vpack.c.bf16 %v1830, %v1828
      %v2105 = vpack.c.bf16 %v1834, %v1832
      %v2106 = vpack.c.bf16 %v1838, %v1836
      %v2107 = vpack.c.bf16 %v1842, %v1840
      %v2108 = vpack.c.bf16 %v1846, %v1844
      %v2109 = vpack.c.bf16 %v1850, %v1848
      %v2110 = vpack.c.bf16 %v1854, %v1852
      %v2111 = vpack.c.bf16 %v1858, %v1856
      %v2112 = vpack.c.bf16 %v1862, %v1860
      %v2113 = vpack.c.bf16 %v1866, %v1864
      %v2114 = vpack.c.bf16 %v1870, %v1868
      %v2115 = vpack.c.bf16 %v1874, %v1872
      %v2116 = vpack.c.bf16 %v1878, %v1876
      %v2117 = vpack.c.bf16 %v1882, %v1880
      %v2118 = vpack.c.bf16 %v1886, %v1884
      %v2119 = vpack.c.bf16 %v1890, %v1888
      %v2120 = vpack.c.bf16 %v1894, %v1892
      %v2121 = vpack.c.bf16 %v1898, %v1896
      %v2122 = vpack.c.bf16 %v1902, %v1900
      %v2123 = vpack.c.bf16 %v1906, %v1904
      %v2124 = vpack.c.bf16 %v1910, %v1908
      %v2125 = vpack.c.bf16 %v1914, %v1912
      %v2126 = vpack.c.bf16 %v1918, %v1916
      %v2127 = vpack.c.bf16 %v1922, %v1920
      %v2128 = vpack.c.bf16 %v1926, %v1924
      %v2129 = vpack.c.bf16 %v1930, %v1928
      %v2130 = vpack.c.bf16 %v1934, %v1932
      %v2131 = vpack.c.bf16 %v1938, %v1936
      %v2132 = vpack.c.bf16 %v1942, %v1940
      %v2133 = vpack.c.bf16 %v1946, %v1944
      %v2134 = vpack.c.bf16 %v1950, %v1948
      %v2135 = vpack.c.bf16 %v1954, %v1952
      %v2136 = vpack.c.bf16 %v1958, %v1956
      %v2137 = vpack.c.bf16 %v1962, %v1960
      %v2138 = vpack.c.bf16 %v1966, %v1964
      %v2139 = vld [vmem:[%s7] sm:$0x3]
      %v2141 = vsel %vm1614, %v2103, 0
      %v2144 = vsel %vm1614, %v2104, 0
      %v2147 = vsel %vm1614, %v2105, 0
      %v2150 = vsel %vm1614, %v2106, 0
      %v2153 = vsel %vm1614, %v2107, 0
      %v2156 = vsel %vm1614, %v2108, 0
      %v2159 = vsel %vm1614, %v2109, 0
      %v2162 = vsel %vm1614, %v2110, 0
      %v2165 = vsel %vm1614, %v2111, 0
      %v2168 = vsel %vm1614, %v2112, 0
      %v2171 = vsel %vm1614, %v2113, 0
      %v2174 = vsel %vm1614, %v2114, 0
      %v2177 = vsel %vm1614, %v2115, 0
      %v2180 = vsel %vm1614, %v2116, 0
      %v2183 = vsel %vm1614, %v2117, 0
      %v2186 = vsel %vm1614, %v2118, 0
      %v2189 = vsel %vm1614, %v2119, 0
      %v2192 = vsel %vm1614, %v2120, 0
      %v2195 = vsel %vm1614, %v2121, 0
      %v2198 = vsel %vm1614, %v2122, 0
      %v2201 = vsel %vm1614, %v2123, 0
      %v2204 = vsel %vm1614, %v2124, 0
      %v2207 = vsel %vm1614, %v2125, 0
      %v2210 = vsel %vm1614, %v2126, 0
      %v2213 = vsel %vm1614, %v2127, 0
      %v2216 = vsel %vm1614, %v2128, 0
      %v2219 = vsel %vm1614, %v2129, 0
      %v2222 = vsel %vm1614, %v2130, 0
      %v2225 = vsel %vm1614, %v2131, 0
      %v2228 = vsel %vm1614, %v2132, 0
      %v2231 = vsel %vm1614, %v2133, 0
      %v2234 = vsel %vm1614, %v2134, 0
      %v2237 = vsel %vm1614, %v2135, 0
      %v2240 = vsel %vm1614, %v2136, 0
      %v2243 = vsel %vm1614, %v2137, 0
      %v2246 = vsel %vm1614, %v2138, 0
      %vm2248 = vcmask 1041408
      %v2250 = vsel %vm2248, %v2139, 0
      %2252 = vmatprep.subr.bf16.mxu0 0
      %2253 = vmatpush1.bf16.msra.mxu0 %v2250
      %2254 = vmatprep.subr.bf16.mxu0 0
      %2255 = vmatpush1.bf16.msra.mxu0 0
      %2256 = vmatprep.subr.bf16.mxu0 0
      %2257 = vmatpush1.bf16.msra.mxu0 0
      %2258 = vmatprep.subr.bf16.mxu0 0
      %2259 = vmatpush1.bf16.msra.mxu0 0
      %2260 = vmatprep.subr.bf16.mxu0 0
      %2261 = vmatpush1.bf16.msra.mxu0 0
      %2262 = vmatprep.subr.bf16.mxu0 0
      %2263 = vmatpush1.bf16.msra.mxu0 0
      %2264 = vmatprep.subr.bf16.mxu0 0
      %2265 = vmatpush1.bf16.msra.mxu0 0
      %2266 = vmatprep.subr.bf16.mxu0 0
      %2267 = vmatpush1.bf16.msra.mxu0 0
      %2268 = vmatprep.subr.bf16.mxu0 0
      %2269 = vmatpush1.bf16.msra.mxu0 0
      %2270 = vmatprep.subr.bf16.mxu0 0
      %2271 = vmatpush1.bf16.msra.mxu0 0
      %2272 = vmatprep.subr.bf16.mxu0 0
      %2273 = vmatpush1.bf16.msra.mxu0 0
      %2274 = vmatprep.subr.bf16.mxu0 0
      %2275 = vmatpush1.bf16.msra.mxu0 0
      %2276 = vmatprep.subr.bf16.mxu0 0
      %2277 = vmatpush1.bf16.msra.mxu0 0
      %2278 = vmatprep.subr.bf16.mxu0 0
      %2279 = vmatpush1.bf16.msra.mxu0 0
      %2280 = vmatprep.subr.bf16.mxu0 0
      %2281 = vmatpush1.bf16.msra.mxu0 0
      %2282 = vmatprep.subr.bf16.mxu0 0
      %2283 = vmatpush1.bf16.msra.mxu0 0
      %2284 = vmatprep.mubr.bf16.mxu0 0
      %2285 = vmatmul.mubr.bf16.gmra.mrb[0].mxu0 %v2141
      %v2286 = vpop.f32.mrb[0].mxu0
      %v2287 = vadd.f32 0.0, %v2286
      %v2288 = vpop.f32.mrb[0].mxu0
      %v2289 = vpop.f32.mrb[0].mxu0
      %v2290 = vadd.f32 0.0, %v2289
      %v2291 = vpop.f32.mrb[0].mxu0
      %2292 = vmatprep.mubr.bf16.mxu0 0
      %2293 = vmatmul.mubr.bf16.gmra.mrb[0].mxu0 %v2144
      %v2294 = vpop.f32.mrb[0].mxu0
      %v2295 = vadd.f32 0.0, %v2294
      %v2296 = vpop.f32.mrb[0].mxu0
      %v2297 = vpop.f32.mrb[0].mxu0
      %v2298 = vadd.f32 0.0, %v2297
      %v2299 = vpop.f32.mrb[0].mxu0
      %2300 = vmatprep.mubr.bf16.mxu0 0
      %2301 = vmatmul.mubr.bf16.gmra.mrb[0].mxu0 %v2147
      %v2302 = vpop.f32.mrb[0].mxu0
      %v2303 = vadd.f32 0.0, %v2302
      %v2304 = vpop.f32.mrb[0].mxu0
      %v2305 = vpop.f32.mrb[0].mxu0
      %v2306 = vadd.f32 0.0, %v2305
      %v2307 = vpop.f32.mrb[0].mxu0
      %2308 = vmatprep.mubr.bf16.mxu0 0
      %2309 = vmatmul.mubr.bf16.gmra.mrb[0].mxu0 %v2150
      %v2310 = vpop.f32.mrb[0].mxu0
      %v2311 = vadd.f32 0.0, %v2310
      %v2312 = vpop.f32.mrb[0].mxu0
      %v2313 = vpop.f32.mrb[0].mxu0
      %v2314 = vadd.f32 0.0, %v2313
      %v2315 = vpop.f32.mrb[0].mxu0
      %2316 = vmatprep.mubr.bf16.mxu0 0
      %2317 = vmatmul.mubr.bf16.gmra.mrb[0].mxu0 %v2153
      %v2318 = vpop.f32.mrb[0].mxu0
      %v2319 = vadd.f32 0.0, %v2318
      %v2320 = vpop.f32.mrb[0].mxu0
      %v2321 = vpop.f32.mrb[0].mxu0
      %v2322 = vadd.f32 0.0, %v2321
      %v2323 = vpop.f32.mrb[0].mxu0
      %2324 = vmatprep.mubr.bf16.mxu0 0
      %2325 = vmatmul.mubr.bf16.gmra.mrb[0].mxu0 %v2156
      %v2326 = vpop.f32.mrb[0].mxu0
      %v2327 = vadd.f32 0.0, %v2326
      %v2328 = vpop.f32.mrb[0].mxu0
      %v2329 = vpop.f32.mrb[0].mxu0
      %v2330 = vadd.f32 0.0, %v2329
      %v2331 = vpop.f32.mrb[0].mxu0
      %2332 = vmatprep.mubr.bf16.mxu0 0
      %2333 = vmatmul.mubr.bf16.gmra.mrb[0].mxu0 %v2159
      %v2334 = vpop.f32.mrb[0].mxu0
      %v2335 = vadd.f32 0.0, %v2334
      %v2336 = vpop.f32.mrb[0].mxu0
      %v2337 = vpop.f32.mrb[0].mxu0
      %v2338 = vadd.f32 0.0, %v2337
      %v2339 = vpop.f32.mrb[0].mxu0
      %2340 = vmatprep.mubr.bf16.mxu0 0
      %2341 = vmatmul.mubr.bf16.gmra.mrb[0].mxu0 %v2162
      %v2342 = vpop.f32.mrb[0].mxu0
      %v2343 = vadd.f32 0.0, %v2342
      %v2344 = vpop.f32.mrb[0].mxu0
      %v2345 = vpop.f32.mrb[0].mxu0
      %v2346 = vadd.f32 0.0, %v2345
      %v2347 = vpop.f32.mrb[0].mxu0
      %2348 = vmatprep.mubr.bf16.mxu0 0
      %2349 = vmatmul.mubr.bf16.gmra.mrb[0].mxu0 %v2165
      %v2350 = vpop.f32.mrb[0].mxu0
      %v2351 = vadd.f32 0.0, %v2350
      %v2352 = vpop.f32.mrb[0].mxu0
      %v2353 = vpop.f32.mrb[0].mxu0
      %v2354 = vadd.f32 0.0, %v2353
      %v2355 = vpop.f32.mrb[0].mxu0
      %2356 = vmatprep.mubr.bf16.mxu0 0
      %2357 = vmatmul.mubr.bf16.gmra.mrb[0].mxu0 %v2168
      %v2358 = vpop.f32.mrb[0].mxu0
      %v2359 = vadd.f32 0.0, %v2358
      %v2360 = vpop.f32.mrb[0].mxu0
      %v2361 = vpop.f32.mrb[0].mxu0
      %v2362 = vadd.f32 0.0, %v2361
      %v2363 = vpop.f32.mrb[0].mxu0
      %2364 = vmatprep.mubr.bf16.mxu0 0
      %2365 = vmatmul.mubr.bf16.gmra.mrb[0].mxu0 %v2171
      %v2366 = vpop.f32.mrb[0].mxu0
      %v2367 = vadd.f32 0.0, %v2366
      %v2368 = vpop.f32.mrb[0].mxu0
      %v2369 = vpop.f32.mrb[0].mxu0
      %v2370 = vadd.f32 0.0, %v2369
      %v2371 = vpop.f32.mrb[0].mxu0
      %2372 = vmatprep.mubr.bf16.mxu0 0
      %2373 = vmatmul.mubr.bf16.gmra.mrb[0].mxu0 %v2174
      %v2374 = vpop.f32.mrb[0].mxu0
      %v2375 = vadd.f32 0.0, %v2374
      %v2376 = vpop.f32.mrb[0].mxu0
      %v2377 = vpop.f32.mrb[0].mxu0
      %v2378 = vadd.f32 0.0, %v2377
      %v2379 = vpop.f32.mrb[0].mxu0
      %2380 = vmatprep.mubr.bf16.mxu0 0
      %2381 = vmatmul.mubr.bf16.gmra.mrb[0].mxu0 %v2177
      %v2382 = vpop.f32.mrb[0].mxu0
      %v2383 = vadd.f32 0.0, %v2382
      %v2384 = vpop.f32.mrb[0].mxu0
      %v2385 = vpop.f32.mrb[0].mxu0
      %v2386 = vadd.f32 0.0, %v2385
      %v2387 = vpop.f32.mrb[0].mxu0
      %2388 = vmatprep.mubr.bf16.mxu0 0
      %2389 = vmatmul.mubr.bf16.gmra.mrb[0].mxu0 %v2180
      %v2390 = vpop.f32.mrb[0].mxu0
      %v2391 = vadd.f32 0.0, %v2390
      %v2392 = vpop.f32.mrb[0].mxu0
      %v2393 = vpop.f32.mrb[0].mxu0
      %v2394 = vadd.f32 0.0, %v2393
      %v2395 = vpop.f32.mrb[0].mxu0
      %2396 = vmatprep.mubr.bf16.mxu0 0
      %2397 = vmatmul.mubr.bf16.gmra.mrb[0].mxu0 %v2183
      %v2398 = vpop.f32.mrb[0].mxu0
      %v2399 = vadd.f32 0.0, %v2398
      %v2400 = vpop.f32.mrb[0].mxu0
      %v2401 = vpop.f32.mrb[0].mxu0
      %v2402 = vadd.f32 0.0, %v2401
      %v2403 = vpop.f32.mrb[0].mxu0
      %2404 = vmatprep.mubr.bf16.mxu0 0
      %2405 = vmatmul.mubr.bf16.gmra.mrb[0].mxu0 %v2186
      %v2406 = vpop.f32.mrb[0].mxu0
      %v2407 = vadd.f32 0.0, %v2406
      %v2408 = vpop.f32.mrb[0].mxu0
      %v2409 = vpop.f32.mrb[0].mxu0
      %v2410 = vadd.f32 0.0, %v2409
      %v2411 = vpop.f32.mrb[0].mxu0
      %2412 = vmatprep.mubr.bf16.mxu0 0
      %2413 = vmatmul.mubr.bf16.gmra.mrb[0].mxu0 %v2189
      %v2414 = vpop.f32.mrb[0].mxu0
      %v2415 = vadd.f32 0.0, %v2414
      %v2416 = vpop.f32.mrb[0].mxu0
      %v2417 = vpop.f32.mrb[0].mxu0
      %v2418 = vadd.f32 0.0, %v2417
      %v2419 = vpop.f32.mrb[0].mxu0
      %2420 = vmatprep.mubr.bf16.mxu0 0
      %2421 = vmatmul.mubr.bf16.gmra.mrb[0].mxu0 %v2192
      %v2422 = vpop.f32.mrb[0].mxu0
      %v2423 = vadd.f32 0.0, %v2422
      %v2424 = vpop.f32.mrb[0].mxu0
      %v2425 = vpop.f32.mrb[0].mxu0
      %v2426 = vadd.f32 0.0, %v2425
      %v2427 = vpop.f32.mrb[0].mxu0
      %2428 = vmatprep.mubr.bf16.mxu0 0
      %2429 = vmatmul.mubr.bf16.gmra.mrb[0].mxu0 %v2195
      %v2430 = vpop.f32.mrb[0].mxu0
      %v2431 = vadd.f32 0.0, %v2430
      %v2432 = vpop.f32.mrb[0].mxu0
      %v2433 = vpop.f32.mrb[0].mxu0
      %v2434 = vadd.f32 0.0, %v2433
      %v2435 = vpop.f32.mrb[0].mxu0
      %2436 = vmatprep.mubr.bf16.mxu0 0
      %2437 = vmatmul.mubr.bf16.gmra.mrb[0].mxu0 %v2198
      %v2438 = vpop.f32.mrb[0].mxu0
      %v2439 = vadd.f32 0.0, %v2438
      %v2440 = vpop.f32.mrb[0].mxu0
      %v2441 = vpop.f32.mrb[0].mxu0
      %v2442 = vadd.f32 0.0, %v2441
      %v2443 = vpop.f32.mrb[0].mxu0
      %2444 = vmatprep.mubr.bf16.mxu0 0
      %2445 = vmatmul.mubr.bf16.gmra.mrb[0].mxu0 %v2201
      %v2446 = vpop.f32.mrb[0].mxu0
      %v2447 = vadd.f32 0.0, %v2446
      %v2448 = vpop.f32.mrb[0].mxu0
      %v2449 = vpop.f32.mrb[0].mxu0
      %v2450 = vadd.f32 0.0, %v2449
      %v2451 = vpop.f32.mrb[0].mxu0
      %2452 = vmatprep.mubr.bf16.mxu0 0
      %2453 = vmatmul.mubr.bf16.gmra.mrb[0].mxu0 %v2204
      %v2454 = vpop.f32.mrb[0].mxu0
      %v2455 = vadd.f32 0.0, %v2454
      %v2456 = vpop.f32.mrb[0].mxu0
      %v2457 = vpop.f32.mrb[0].mxu0
      %v2458 = vadd.f32 0.0, %v2457
      %v2459 = vpop.f32.mrb[0].mxu0
      %2460 = vmatprep.mubr.bf16.mxu0 0
      %2461 = vmatmul.mubr.bf16.gmra.mrb[0].mxu0 %v2207
      %v2462 = vpop.f32.mrb[0].mxu0
      %v2463 = vadd.f32 0.0, %v2462
      %v2464 = vpop.f32.mrb[0].mxu0
      %v2465 = vpop.f32.mrb[0].mxu0
      %v2466 = vadd.f32 0.0, %v2465
      %v2467 = vpop.f32.mrb[0].mxu0
      %2468 = vmatprep.mubr.bf16.mxu0 0
      %2469 = vmatmul.mubr.bf16.gmra.mrb[0].mxu0 %v2210
      %v2470 = vpop.f32.mrb[0].mxu0
      %v2471 = vadd.f32 0.0, %v2470
      %v2472 = vpop.f32.mrb[0].mxu0
      %v2473 = vpop.f32.mrb[0].mxu0
      %v2474 = vadd.f32 0.0, %v2473
      %v2475 = vpop.f32.mrb[0].mxu0
      %2476 = vmatprep.mubr.bf16.mxu0 0
      %2477 = vmatmul.mubr.bf16.gmra.mrb[0].mxu0 %v2213
      %v2478 = vpop.f32.mrb[0].mxu0
      %v2479 = vadd.f32 0.0, %v2478
      %v2480 = vpop.f32.mrb[0].mxu0
      %v2481 = vpop.f32.mrb[0].mxu0
      %v2482 = vadd.f32 0.0, %v2481
      %v2483 = vpop.f32.mrb[0].mxu0
      %2484 = vmatprep.mubr.bf16.mxu0 0
      %2485 = vmatmul.mubr.bf16.gmra.mrb[0].mxu0 %v2216
      %v2486 = vpop.f32.mrb[0].mxu0
      %v2487 = vadd.f32 0.0, %v2486
      %v2488 = vpop.f32.mrb[0].mxu0
      %v2489 = vpop.f32.mrb[0].mxu0
      %v2490 = vadd.f32 0.0, %v2489
      %v2491 = vpop.f32.mrb[0].mxu0
      %2492 = vmatprep.mubr.bf16.mxu0 0
      %2493 = vmatmul.mubr.bf16.gmra.mrb[0].mxu0 %v2219
      %v2494 = vpop.f32.mrb[0].mxu0
      %v2495 = vadd.f32 0.0, %v2494
      %v2496 = vpop.f32.mrb[0].mxu0
      %v2497 = vpop.f32.mrb[0].mxu0
      %v2498 = vadd.f32 0.0, %v2497
      %v2499 = vpop.f32.mrb[0].mxu0
      %2500 = vmatprep.mubr.bf16.mxu0 0
      %2501 = vmatmul.mubr.bf16.gmra.mrb[0].mxu0 %v2222
      %v2502 = vpop.f32.mrb[0].mxu0
      %v2503 = vadd.f32 0.0, %v2502
      %v2504 = vpop.f32.mrb[0].mxu0
      %v2505 = vpop.f32.mrb[0].mxu0
      %v2506 = vadd.f32 0.0, %v2505
      %v2507 = vpop.f32.mrb[0].mxu0
      %2508 = vmatprep.mubr.bf16.mxu0 0
      %2509 = vmatmul.mubr.bf16.gmra.mrb[0].mxu0 %v2225
      %v2510 = vpop.f32.mrb[0].mxu0
      %v2511 = vadd.f32 0.0, %v2510
      %v2512 = vpop.f32.mrb[0].mxu0
      %v2513 = vpop.f32.mrb[0].mxu0
      %v2514 = vadd.f32 0.0, %v2513
      %v2515 = vpop.f32.mrb[0].mxu0
      %2516 = vmatprep.mubr.bf16.mxu0 0
      %2517 = vmatmul.mubr.bf16.gmra.mrb[0].mxu0 %v2228
      %v2518 = vpop.f32.mrb[0].mxu0
      %v2519 = vadd.f32 0.0, %v2518
      %v2520 = vpop.f32.mrb[0].mxu0
      %v2521 = vpop.f32.mrb[0].mxu0
      %v2522 = vadd.f32 0.0, %v2521
      %v2523 = vpop.f32.mrb[0].mxu0
      %2524 = vmatprep.mubr.bf16.mxu0 0
      %2525 = vmatmul.mubr.bf16.gmra.mrb[0].mxu0 %v2231
      %v2526 = vpop.f32.mrb[0].mxu0
      %v2527 = vadd.f32 0.0, %v2526
      %v2528 = vpop.f32.mrb[0].mxu0
      %v2529 = vpop.f32.mrb[0].mxu0
      %v2530 = vadd.f32 0.0, %v2529
      %v2531 = vpop.f32.mrb[0].mxu0
      %2532 = vmatprep.mubr.bf16.mxu0 0
      %2533 = vmatmul.mubr.bf16.gmra.mrb[0].mxu0 %v2234
      %v2534 = vpop.f32.mrb[0].mxu0
      %v2535 = vadd.f32 0.0, %v2534
      %v2536 = vpop.f32.mrb[0].mxu0
      %v2537 = vpop.f32.mrb[0].mxu0
      %v2538 = vadd.f32 0.0, %v2537
      %v2539 = vpop.f32.mrb[0].mxu0
      %2540 = vmatprep.mubr.bf16.mxu0 0
      %2541 = vmatmul.mubr.bf16.gmra.mrb[0].mxu0 %v2237
      %v2542 = vpop.f32.mrb[0].mxu0
      %v2543 = vadd.f32 0.0, %v2542
      %v2544 = vpop.f32.mrb[0].mxu0
      %v2545 = vpop.f32.mrb[0].mxu0
      %v2546 = vadd.f32 0.0, %v2545
      %v2547 = vpop.f32.mrb[0].mxu0
      %2548 = vmatprep.mubr.bf16.mxu0 0
      %2549 = vmatmul.mubr.bf16.gmra.mrb[0].mxu0 %v2240
      %v2550 = vpop.f32.mrb[0].mxu0
      %v2551 = vadd.f32 0.0, %v2550
      %v2552 = vpop.f32.mrb[0].mxu0
      %v2553 = vpop.f32.mrb[0].mxu0
      %v2554 = vadd.f32 0.0, %v2553
      %v2555 = vpop.f32.mrb[0].mxu0
      %2556 = vmatprep.mubr.bf16.mxu0 0
      %2557 = vmatmul.mubr.bf16.gmra.mrb[0].mxu0 %v2243
      %v2558 = vpop.f32.mrb[0].mxu0
      %v2559 = vadd.f32 0.0, %v2558
      %v2560 = vpop.f32.mrb[0].mxu0
      %v2561 = vpop.f32.mrb[0].mxu0
      %v2562 = vadd.f32 0.0, %v2561
      %v2563 = vpop.f32.mrb[0].mxu0
      %2564 = vmatprep.mubr.bf16.mxu0 0
      %2565 = vmatmul.mubr.bf16.gmra.mrb[0].mxu0 %v2246
      %v2566 = vpop.f32.mrb[0].mxu0
      %v2567 = vadd.f32 0.0, %v2566
      %v2568 = vpop.f32.mrb[0].mxu0
      %v2569 = vpop.f32.mrb[0].mxu0
      %v2570 = vadd.f32 0.0, %v2569
      %v2571 = vpop.f32.mrb[0].mxu0
      %2572 = vdwg.mxu0
      %2573 = vrot.lane.b32.xlu0 %v809, 64
      %v2574 = vpop.permute.xlu0 %2573
      %2575 = vrot.lane.b32.xlu0 %v810, 64
      %v2576 = vpop.permute.xlu0 %2575
      %2577 = vrot.lane.b32.xlu0 %v811, 64
      %v2578 = vpop.permute.xlu0 %2577
      %2579 = vrot.lane.b32.xlu0 %v812, 64
      %v2580 = vpop.permute.xlu0 %2579
      %2581 = vrot.lane.b32.xlu0 %v813, 64
      %v2582 = vpop.permute.xlu0 %2581
      %2583 = vrot.lane.b32.xlu0 %v814, 64
      %v2584 = vpop.permute.xlu0 %2583
      %2585 = vrot.lane.b32.xlu0 %v833, 64
      %v2586 = vpop.permute.xlu0 %2585
      %2587 = vrot.lane.b32.xlu0 %v834, 64
      %v2588 = vpop.permute.xlu0 %2587
      %2589 = vrot.lane.b32.xlu0 %v835, 64
      %v2590 = vpop.permute.xlu0 %2589
      %2591 = vrot.lane.b32.xlu0 %v836, 64
      %v2592 = vpop.permute.xlu0 %2591
      %2593 = vrot.lane.b32.xlu0 %v837, 64
      %v2594 = vpop.permute.xlu0 %2593
      %2595 = vrot.lane.b32.xlu0 %v838, 64
      %v2596 = vpop.permute.xlu0 %2595
      %2597 = vrot.lane.b32.xlu0 %v857, 64
      %v2598 = vpop.permute.xlu0 %2597
      %2599 = vrot.lane.b32.xlu0 %v858, 64
      %v2600 = vpop.permute.xlu0 %2599
      %2601 = vrot.lane.b32.xlu0 %v859, 64
      %v2602 = vpop.permute.xlu0 %2601
      %2603 = vrot.lane.b32.xlu0 %v860, 64
      %v2604 = vpop.permute.xlu0 %2603
      %2605 = vrot.lane.b32.xlu0 %v861, 64
      %v2606 = vpop.permute.xlu0 %2605
      %2607 = vrot.lane.b32.xlu0 %v862, 64
      %v2608 = vpop.permute.xlu0 %2607
      %2609 = vrot.lane.b32.xlu0 %v869, 64
      %v2610 = vpop.permute.xlu0 %2609
      %2611 = vrot.lane.b32.xlu0 %v873, 64
      %v2612 = vpop.permute.xlu0 %2611
      %2613 = vrot.lane.b32.xlu0 %v877, 64
      %v2614 = vpop.permute.xlu0 %2613
      %2615 = vrot.lane.b32.xlu0 %v884, 64
      %v2616 = vpop.permute.xlu0 %2615
      %2617 = vrot.lane.b32.xlu0 %v888, 64
      %v2618 = vpop.permute.xlu0 %2617
      %2619 = vrot.lane.b32.xlu0 %v892, 64
      %v2620 = vpop.permute.xlu0 %2619
      %v2645 = vmul.f32 %v2287, %v2574
      %v2646 = vmul.f32 %v2290, %v2574
      %v2647 = vmul.f32 %v2295, %v2576
      %v2648 = vmul.f32 %v2298, %v2578
      %v2649 = vmul.f32 %v2303, %v2580
      %v2650 = vmul.f32 %v2306, %v2582
      %v2651 = vmul.f32 %v2311, %v2584
      %v2652 = vmul.f32 %v2314, %v2584
      %v2653 = vmul.f32 %v2319, %v2586
      %v2654 = vmul.f32 %v2322, %v2586
      %v2655 = vmul.f32 %v2327, %v2588
      %v2656 = vmul.f32 %v2330, %v2590
      %v2657 = vmul.f32 %v2335, %v2592
      %v2658 = vmul.f32 %v2338, %v2594
      %v2659 = vmul.f32 %v2343, %v2596
      %v2660 = vmul.f32 %v2346, %v2596
      %v2661 = vmul.f32 %v2351, %v2598
      %v2662 = vmul.f32 %v2354, %v2598
      %v2663 = vmul.f32 %v2359, %v2600
      %v2664 = vmul.f32 %v2362, %v2602
      %v2665 = vmul.f32 %v2367, %v2604
      %v2666 = vmul.f32 %v2370, %v2606
      %v2667 = vmul.f32 %v2375, %v2608
      %v2668 = vmul.f32 %v2378, %v2608
      %v2669 = vmul.f32 %v2383, %v2576
      %v2670 = vmul.f32 %v2386, %v2576
      %v2671 = vmul.f32 %v2391, %v2578
      %v2672 = vmul.f32 %v2394, %v2580
      %v2673 = vmul.f32 %v2399, %v2582
      %v2674 = vmul.f32 %v2402, %v2584
      %v2675 = vmul.f32 %v2407, %v2610
      %v2676 = vmul.f32 %v2410, %v2610
      %v2677 = vmul.f32 %v2415, %v2588
      %v2678 = vmul.f32 %v2418, %v2588
      %v2679 = vmul.f32 %v2423, %v2590
      %v2680 = vmul.f32 %v2426, %v2592
      %v2681 = vmul.f32 %v2431, %v2594
      %v2682 = vmul.f32 %v2434, %v2596
      %v2683 = vmul.f32 %v2439, %v2612
      %v2684 = vmul.f32 %v2442, %v2612
      %v2685 = vmul.f32 %v2447, %v2600
      %v2686 = vmul.f32 %v2450, %v2600
      %v2687 = vmul.f32 %v2455, %v2602
      %v2688 = vmul.f32 %v2458, %v2604
      %v2689 = vmul.f32 %v2463, %v2606
      %v2690 = vmul.f32 %v2466, %v2608
      %v2691 = vmul.f32 %v2471, %v2614
      %v2692 = vmul.f32 %v2474, %v2614
      %v2693 = vmul.f32 %v2479, %v2578
      %v2694 = vmul.f32 %v2482, %v2578
      %v2695 = vmul.f32 %v2487, %v2580
      %v2696 = vmul.f32 %v2490, %v2582
      %v2697 = vmul.f32 %v2495, %v2584
      %v2698 = vmul.f32 %v2498, %v2610
      %v2699 = vmul.f32 %v2503, %v2616
      %v2700 = vmul.f32 %v2506, %v2616
      %v2701 = vmul.f32 %v2511, %v2590
      %v2702 = vmul.f32 %v2514, %v2590
      %v2703 = vmul.f32 %v2519, %v2592
      %v2704 = vmul.f32 %v2522, %v2594
      %v2705 = vmul.f32 %v2527, %v2596
      %v2706 = vmul.f32 %v2530, %v2612
      %v2707 = vmul.f32 %v2535, %v2618
      %v2708 = vmul.f32 %v2538, %v2618
      %v2709 = vmul.f32 %v2543, %v2602
      %v2710 = vmul.f32 %v2546, %v2602
      %v2711 = vmul.f32 %v2551, %v2604
      %v2712 = vmul.f32 %v2554, %v2606
      %v2713 = vmul.f32 %v2559, %v2608
      %v2714 = vmul.f32 %v2562, %v2614
      %v2715 = vmul.f32 %v2567, %v2620
      %v2716 = vmul.f32 %v2570, %v2620
      %v2717 = vsel %vm533, %v2645, 0.0
      %v2718 = vsel %vm533, %v2653, 0.0
      %v2719 = vadd.f32 %v2717, %v2718
      %v2720 = vsel %vm533, %v2661, 0.0
      %v2721 = vadd.f32 %v2719, %v2720
      %v2722 = vsel %vm533, %v2669, 0.0
      %v2723 = vadd.f32 %v2721, %v2722
      %v2724 = vsel %vm533, %v2677, 0.0
      %v2725 = vadd.f32 %v2723, %v2724
      %v2726 = vsel %vm533, %v2685, 0.0
      %v2727 = vadd.f32 %v2725, %v2726
      %v2728 = vsel %vm533, %v2693, 0.0
      %v2729 = vadd.f32 %v2727, %v2728
      %v2730 = vsel %vm533, %v2701, 0.0
      %v2731 = vadd.f32 %v2729, %v2730
      %v2732 = vsel %vm533, %v2709, 0.0
      %v2733 = vadd.f32 %v2731, %v2732
      %v2734 = vsel %vm533, %v2646, 0.0
      %v2735 = vsel %vm533, %v2654, 0.0
      %v2736 = vadd.f32 %v2734, %v2735
      %v2737 = vsel %vm533, %v2662, 0.0
      %v2738 = vadd.f32 %v2736, %v2737
      %v2739 = vsel %vm533, %v2670, 0.0
      %v2740 = vadd.f32 %v2738, %v2739
      %v2741 = vsel %vm533, %v2678, 0.0
      %v2742 = vadd.f32 %v2740, %v2741
      %v2743 = vsel %vm533, %v2686, 0.0
      %v2744 = vadd.f32 %v2742, %v2743
      %v2745 = vsel %vm533, %v2694, 0.0
      %v2746 = vadd.f32 %v2744, %v2745
      %v2747 = vsel %vm533, %v2702, 0.0
      %v2748 = vadd.f32 %v2746, %v2747
      %v2749 = vsel %vm533, %v2710, 0.0
      %v2750 = vadd.f32 %v2748, %v2749
      %v2751 = vsel %vm533, %v2647, 0.0
      %v2752 = vsel %vm533, %v2655, 0.0
      %v2753 = vadd.f32 %v2751, %v2752
      %v2754 = vsel %vm533, %v2663, 0.0
      %v2755 = vadd.f32 %v2753, %v2754
      %v2756 = vsel %vm533, %v2671, 0.0
      %v2757 = vadd.f32 %v2755, %v2756
      %v2758 = vsel %vm533, %v2679, 0.0
      %v2759 = vadd.f32 %v2757, %v2758
      %v2760 = vsel %vm533, %v2687, 0.0
      %v2761 = vadd.f32 %v2759, %v2760
      %v2762 = vsel %vm533, %v2695, 0.0
      %v2763 = vadd.f32 %v2761, %v2762
      %v2764 = vsel %vm533, %v2703, 0.0
      %v2765 = vadd.f32 %v2763, %v2764
      %v2766 = vsel %vm533, %v2711, 0.0
      %v2767 = vadd.f32 %v2765, %v2766
      %v2768 = vsel %vm533, %v2648, 0.0
      %v2769 = vsel %vm533, %v2656, 0.0
      %v2770 = vadd.f32 %v2768, %v2769
      %v2771 = vsel %vm533, %v2664, 0.0
      %v2772 = vadd.f32 %v2770, %v2771
      %v2773 = vsel %vm533, %v2672, 0.0
      %v2774 = vadd.f32 %v2772, %v2773
      %v2775 = vsel %vm533, %v2680, 0.0
      %v2776 = vadd.f32 %v2774, %v2775
      %v2777 = vsel %vm533, %v2688, 0.0
      %v2778 = vadd.f32 %v2776, %v2777
      %v2779 = vsel %vm533, %v2696, 0.0
      %v2780 = vadd.f32 %v2778, %v2779
      %v2781 = vsel %vm533, %v2704, 0.0
      %v2782 = vadd.f32 %v2780, %v2781
      %v2783 = vsel %vm533, %v2712, 0.0
      %v2784 = vadd.f32 %v2782, %v2783
      %v2785 = vsel %vm533, %v2649, 0.0
      %v2786 = vsel %vm533, %v2657, 0.0
      %v2787 = vadd.f32 %v2785, %v2786
      %v2788 = vsel %vm533, %v2665, 0.0
      %v2789 = vadd.f32 %v2787, %v2788
      %v2790 = vsel %vm533, %v2673, 0.0
      %v2791 = vadd.f32 %v2789, %v2790
      %v2792 = vsel %vm533, %v2681, 0.0
      %v2793 = vadd.f32 %v2791, %v2792
      %v2794 = vsel %vm533, %v2689, 0.0
      %v2795 = vadd.f32 %v2793, %v2794
      %v2796 = vsel %vm533, %v2697, 0.0
      %v2797 = vadd.f32 %v2795, %v2796
      %v2798 = vsel %vm533, %v2705, 0.0
      %v2799 = vadd.f32 %v2797, %v2798
      %v2800 = vsel %vm533, %v2713, 0.0
      %v2801 = vadd.f32 %v2799, %v2800
      %v2802 = vsel %vm533, %v2650, 0.0
      %v2803 = vsel %vm533, %v2658, 0.0
      %v2804 = vadd.f32 %v2802, %v2803
      %v2805 = vsel %vm533, %v2666, 0.0
      %v2806 = vadd.f32 %v2804, %v2805
      %v2807 = vsel %vm533, %v2674, 0.0
      %v2808 = vadd.f32 %v2806, %v2807
      %v2809 = vsel %vm533, %v2682, 0.0
      %v2810 = vadd.f32 %v2808, %v2809
      %v2811 = vsel %vm533, %v2690, 0.0
      %v2812 = vadd.f32 %v2810, %v2811
      %v2813 = vsel %vm533, %v2698, 0.0
      %v2814 = vadd.f32 %v2812, %v2813
      %v2815 = vsel %vm533, %v2706, 0.0
      %v2816 = vadd.f32 %v2814, %v2815
      %v2817 = vsel %vm533, %v2714, 0.0
      %v2818 = vadd.f32 %v2816, %v2817
      %v2819 = vsel %vm533, %v2651, 0.0
      %v2820 = vsel %vm533, %v2659, 0.0
      %v2821 = vadd.f32 %v2819, %v2820
      %v2822 = vsel %vm533, %v2667, 0.0
      %v2823 = vadd.f32 %v2821, %v2822
      %v2824 = vsel %vm533, %v2675, 0.0
      %v2825 = vadd.f32 %v2823, %v2824
      %v2826 = vsel %vm533, %v2683, 0.0
      %v2827 = vadd.f32 %v2825, %v2826
      %v2828 = vsel %vm533, %v2691, 0.0
      %v2829 = vadd.f32 %v2827, %v2828
      %v2830 = vsel %vm533, %v2699, 0.0
      %v2831 = vadd.f32 %v2829, %v2830
      %v2832 = vsel %vm533, %v2707, 0.0
      %v2833 = vadd.f32 %v2831, %v2832
      %v2834 = vsel %vm533, %v2715, 0.0
      %v2835 = vadd.f32 %v2833, %v2834
      %v2836 = vsel %vm533, %v2652, 0.0
      %v2837 = vsel %vm533, %v2660, 0.0
      %v2838 = vadd.f32 %v2836, %v2837
      %v2839 = vsel %vm533, %v2668, 0.0
      %v2840 = vadd.f32 %v2838, %v2839
      %v2841 = vsel %vm533, %v2676, 0.0
      %v2842 = vadd.f32 %v2840, %v2841
      %v2843 = vsel %vm533, %v2684, 0.0
      %v2844 = vadd.f32 %v2842, %v2843
      %v2845 = vsel %vm533, %v2692, 0.0
      %v2846 = vadd.f32 %v2844, %v2845
      %v2847 = vsel %vm533, %v2700, 0.0
      %v2848 = vadd.f32 %v2846, %v2847
      %v2849 = vsel %vm533, %v2708, 0.0
      %v2850 = vadd.f32 %v2848, %v2849
      %v2851 = vsel %vm533, %v2716, 0.0
      %v2852 = vadd.f32 %v2850, %v2851
      %v2853 = vrcp.pop %v1983
      %v2854 = vrcp.pop %v2000
      %v2855 = vrcp.pop %v2017
      %v2856 = vrcp.pop %v2034
      %v2857 = vrcp.pop %v2051
      %v2858 = vrcp.pop %v2068
      %v2859 = vrcp.pop %v2085
      %v2860 = vrcp.pop %v2102
      %v2861 = vpack.c.bf16 %v2854, %v2853
      %v2862 = vpack.c.bf16 %v2856, %v2855
      %v2863 = vpack.c.bf16 %v2858, %v2857
      %v2864 = vpack.c.bf16 %v2860, %v2859
      %v2866 = vsel %vm1614, %v2861, 0
      %v2869 = vsel %vm1614, %v2862, 0
      %v2872 = vsel %vm1614, %v2863, 0
      %v2875 = vsel %vm1614, %v2864, 0
      %2877 = vmatprep.subr.bf16.mxu0 0
      %2878 = vmatpush1.bf16.msra.mxu0 %v2250
      %2879 = vmatprep.subr.bf16.mxu0 0
      %2880 = vmatpush1.bf16.msra.mxu0 0
      %2881 = vmatprep.subr.bf16.mxu0 0
      %2882 = vmatpush1.bf16.msra.mxu0 0
      %2883 = vmatprep.subr.bf16.mxu0 0
      %2884 = vmatpush1.bf16.msra.mxu0 0
      %2885 = vmatprep.subr.bf16.mxu0 0
      %2886 = vmatpush1.bf16.msra.mxu0 0
      %2887 = vmatprep.subr.bf16.mxu0 0
      %2888 = vmatpush1.bf16.msra.mxu0 0
      %2889 = vmatprep.subr.bf16.mxu0 0
      %2890 = vmatpush1.bf16.msra.mxu0 0
      %2891 = vmatprep.subr.bf16.mxu0 0
      %2892 = vmatpush1.bf16.msra.mxu0 0
      %2893 = vmatprep.subr.bf16.mxu0 0
      %2894 = vmatpush1.bf16.msra.mxu0 0
      %2895 = vmatprep.subr.bf16.mxu0 0
      %2896 = vmatpush1.bf16.msra.mxu0 0
      %2897 = vmatprep.subr.bf16.mxu0 0
      %2898 = vmatpush1.bf16.msra.mxu0 0
      %2899 = vmatprep.subr.bf16.mxu0 0
      %2900 = vmatpush1.bf16.msra.mxu0 0
      %2901 = vmatprep.subr.bf16.mxu0 0
      %2902 = vmatpush1.bf16.msra.mxu0 0
      %2903 = vmatprep.subr.bf16.mxu0 0
      %2904 = vmatpush1.bf16.msra.mxu0 0
      %2905 = vmatprep.subr.bf16.mxu0 0
      %2906 = vmatpush1.bf16.msra.mxu0 0
      %2907 = vmatprep.subr.bf16.mxu0 0
      %2908 = vmatpush1.bf16.msra.mxu0 0
      %2909 = vmatprep.mubr.bf16.mxu0 0
      %2910 = vmatmul.mubr.bf16.gmra.mrb[0].mxu0 %v2866
      %v2911 = vpop.f32.mrb[0].mxu0
      %v2912 = vadd.f32 0.0, %v2911
      %v2913 = vpop.f32.mrb[0].mxu0
      %v2914 = vpop.f32.mrb[0].mxu0
      %v2915 = vadd.f32 0.0, %v2914
      %v2916 = vpop.f32.mrb[0].mxu0
      %2917 = vmatprep.mubr.bf16.mxu0 0
      %2918 = vmatmul.mubr.bf16.gmra.mrb[0].mxu0 %v2869
      %v2919 = vpop.f32.mrb[0].mxu0
      %v2920 = vadd.f32 0.0, %v2919
      %v2921 = vpop.f32.mrb[0].mxu0
      %v2922 = vpop.f32.mrb[0].mxu0
      %v2923 = vadd.f32 0.0, %v2922
      %v2924 = vpop.f32.mrb[0].mxu0
      %2925 = vmatprep.mubr.bf16.mxu0 0
      %2926 = vmatmul.mubr.bf16.gmra.mrb[0].mxu0 %v2872
      %v2927 = vpop.f32.mrb[0].mxu0
      %v2928 = vadd.f32 0.0, %v2927
      %v2929 = vpop.f32.mrb[0].mxu0
      %v2930 = vpop.f32.mrb[0].mxu0
      %v2931 = vadd.f32 0.0, %v2930
      %v2932 = vpop.f32.mrb[0].mxu0
      %2933 = vmatprep.mubr.bf16.mxu0 0
      %2934 = vmatmul.mubr.bf16.gmra.mrb[0].mxu0 %v2875
      %v2935 = vpop.f32.mrb[0].mxu0
      %v2936 = vadd.f32 0.0, %v2935
      %v2937 = vpop.f32.mrb[0].mxu0
      %v2938 = vpop.f32.mrb[0].mxu0
      %v2939 = vadd.f32 0.0, %v2938
      %v2940 = vpop.f32.mrb[0].mxu0
      %2941 = vdwg.mxu0
      %v2942 = vmul.f32 %v2733, %v2912
      %v2943 = vmul.f32 %v2750, %v2915
      %v2944 = vmul.f32 %v2767, %v2920
      %v2945 = vmul.f32 %v2784, %v2923
      %v2946 = vmul.f32 %v2801, %v2928
      %v2947 = vmul.f32 %v2818, %v2931
      %v2948 = vmul.f32 %v2835, %v2936
      %v2949 = vmul.f32 %v2852, %v2939
      %v2950 = vpack.c.bf16 %v2943, %v2942
      %v2951 = vpack.c.bf16 %v2945, %v2944
      %v2952 = vpack.c.bf16 %v2947, %v2946
      %v2953 = vpack.c.bf16 %v2949, %v2948
      %v2954 = vld [vmem:[%s8] sm:$0xf]
      %v2955 = vld [vmem:[%s8 + $0x4] sm:$0xf]
      %v2956 = vld [vmem:[%s8 + $0x8] sm:$0xf]
      %v2957 = vld [vmem:[%s8 + $0xc] sm:$0xf]
      %v2958 = vld [vmem:[%s9] sm:$0x1]
      %v2960 = vlaneseq
      %v2961 = vshrl.u32 %v2960, 7
      %v2962 = vsub.s32 0, %v2961
      %v2963 = vrot.slane %v2958, %v2962
      %v2969 = vunpack.c.l.b16 %v2954
      %v2970 = vunpack.c.l.b16 %v2955
      %v2971 = vunpack.c.l.b16 %v2956
      %v2972 = vunpack.c.l.b16 %v2957
      %v2973 = vpack.c.b16 %v2970, %v2969
      %v2974 = vpack.c.b16 %v2972, %v2971
      %v2978 = vsel %vm533, %v2950, 0
      %v2981 = vsel %vm533, %v2951, 0
      %v2984 = vsel %vm533, %v2952, 0
      %v2987 = vsel %vm533, %v2953, 0
      %2989 = vmatprep.subr.bf16.mxu0 0
      %2990 = vmatpush1.bf16.msra.mxu0 %v2973
      %2991 = vmatprep.subr.bf16.mxu0 0
      %2992 = vmatpush1.bf16.msra.mxu0 %v2974
      %2993 = vmatprep.subr.bf16.mxu0 0
      %2994 = vmatpush1.bf16.msra.mxu0 0
      %2995 = vmatprep.subr.bf16.mxu0 0
      %2996 = vmatpush1.bf16.msra.mxu0 0
      %2997 = vmatprep.subr.bf16.mxu0 0
      %2998 = vmatpush1.bf16.msra.mxu0 0
      %2999 = vmatprep.subr.bf16.mxu0 0
      %3000 = vmatpush1.bf16.msra.mxu0 0
      %3001 = vmatprep.subr.bf16.mxu0 0
      %3002 = vmatpush1.bf16.msra.mxu0 0
      %3003 = vmatprep.subr.bf16.mxu0 0
      %3004 = vmatpush1.bf16.msra.mxu0 0
      %3005 = vmatprep.subr.bf16.mxu0 0
      %3006 = vmatpush1.bf16.msra.mxu0 0
      %3007 = vmatprep.subr.bf16.mxu0 0
      %3008 = vmatpush1.bf16.msra.mxu0 0
      %3009 = vmatprep.subr.bf16.mxu0 0
      %3010 = vmatpush1.bf16.msra.mxu0 0
      %3011 = vmatprep.subr.bf16.mxu0 0
      %3012 = vmatpush1.bf16.msra.mxu0 0
      %3013 = vmatprep.subr.bf16.mxu0 0
      %3014 = vmatpush1.bf16.msra.mxu0 0
      %3015 = vmatprep.subr.bf16.mxu0 0
      %3016 = vmatpush1.bf16.msra.mxu0 0
      %3017 = vmatprep.subr.bf16.mxu0 0
      %3018 = vmatpush1.bf16.msra.mxu0 0
      %3019 = vmatprep.subr.bf16.mxu0 0
      %3020 = vmatpush1.bf16.msra.mxu0 0
      %3021 = vmatprep.mubr.bf16.mxu0 0
      %3022 = vmatmul.mubr.bf16.gmra.mrb[0].mxu0 %v2978
      %v3023 = vpop.f32.mrb[0].mxu0
      %v3024 = vadd.f32 %v2963, %v3023
      %v3025 = vpop.f32.mrb[0].mxu0
      %v3026 = vpop.f32.mrb[0].mxu0
      %v3027 = vadd.f32 %v2963, %v3026
      %v3028 = vpop.f32.mrb[0].mxu0
      %3029 = vmatprep.mubr.bf16.mxu0 0
      %3030 = vmatmul.mubr.bf16.gmra.mrb[0].mxu0 %v2981
      %v3031 = vpop.f32.mrb[0].mxu0
      %v3032 = vadd.f32 %v2963, %v3031
      %v3033 = vpop.f32.mrb[0].mxu0
      %v3034 = vpop.f32.mrb[0].mxu0
      %v3035 = vadd.f32 %v2963, %v3034
      %v3036 = vpop.f32.mrb[0].mxu0
      %3037 = vmatprep.mubr.bf16.mxu0 0
      %3038 = vmatmul.mubr.bf16.gmra.mrb[0].mxu0 %v2984
      %v3039 = vpop.f32.mrb[0].mxu0
      %v3040 = vadd.f32 %v2963, %v3039
      %v3041 = vpop.f32.mrb[0].mxu0
      %v3042 = vpop.f32.mrb[0].mxu0
      %v3043 = vadd.f32 %v2963, %v3042
      %v3044 = vpop.f32.mrb[0].mxu0
      %3045 = vmatprep.mubr.bf16.mxu0 0
      %3046 = vmatmul.mubr.bf16.gmra.mrb[0].mxu0 %v2987
      %v3047 = vpop.f32.mrb[0].mxu0
      %v3048 = vadd.f32 %v2963, %v3047
      %v3049 = vpop.f32.mrb[0].mxu0
      %v3050 = vpop.f32.mrb[0].mxu0
      %v3051 = vadd.f32 %v2963, %v3050
      %v3052 = vpop.f32.mrb[0].mxu0
      %3053 = vdwg.mxu0
      %v3054 = vadd.f32 %v523, %v3024
      %v3055 = vadd.f32 %v524, %v3027
      %v3056 = vadd.f32 %v525, %v3032
      %v3057 = vadd.f32 %v526, %v3035
      %v3058 = vadd.f32 %v527, %v3040
      %v3059 = vadd.f32 %v528, %v3043
      %v3060 = vadd.f32 %v529, %v3048
      %v3061 = vadd.f32 %v530, %v3051
      %v3062 = vld [vmem:[%s10] sm:$0x1]
      %v3063 = vld [vmem:[%s11] sm:$0x1]
      %v3064 = vsel %vm533, %v3054, 0.0
      %3065 = vadd.xlane.f32.xlu0 %v3064
      %v3066 = vpop.xlane.xlu0 %3065
      %v3067 = vsel %vm533, %v3055, 0.0
      %3068 = vadd.xlane.f32.xlu0 %v3067
      %v3069 = vpop.xlane.xlu0 %3068
      %v3070 = vsel %vm533, %v3056, 0.0
      %3071 = vadd.xlane.f32.xlu0 %v3070
      %v3072 = vpop.xlane.xlu0 %3071
      %v3073 = vsel %vm533, %v3057, 0.0
      %3074 = vadd.xlane.f32.xlu0 %v3073
      %v3075 = vpop.xlane.xlu0 %3074
      %v3076 = vsel %vm533, %v3058, 0.0
      %3077 = vadd.xlane.f32.xlu0 %v3076
      %v3078 = vpop.xlane.xlu0 %3077
      %v3079 = vsel %vm533, %v3059, 0.0
      %3080 = vadd.xlane.f32.xlu0 %v3079
      %v3081 = vpop.xlane.xlu0 %3080
      %v3082 = vsel %vm533, %v3060, 0.0
      %3083 = vadd.xlane.f32.xlu0 %v3082
      %v3084 = vpop.xlane.xlu0 %3083
      %v3085 = vsel %vm533, %v3061, 0.0
      %3086 = vadd.xlane.f32.xlu0 %v3085
      %v3087 = vpop.xlane.xlu0 %3086
      %v3088 = vmul.f32 %v3066, %v558
      %v3089 = vmul.f32 %v3069, %v558
      %v3090 = vmul.f32 %v3072, %v558
      %v3091 = vmul.f32 %v3075, %v558
      %v3092 = vmul.f32 %v3078, %v558
      %v3093 = vmul.f32 %v3081, %v558
      %v3094 = vmul.f32 %v3084, %v558
      %v3095 = vmul.f32 %v3087, %v558
      %v3096 = vsub.f32 %v3054, %v3088
      %v3097 = vsub.f32 %v3055, %v3089
      %v3098 = vsub.f32 %v3056, %v3090
      %v3099 = vsub.f32 %v3057, %v3091
      %v3100 = vsub.f32 %v3058, %v3092
      %v3101 = vsub.f32 %v3059, %v3093
      %v3102 = vsub.f32 %v3060, %v3094
      %v3103 = vsub.f32 %v3061, %v3095
      %v3104 = vmul.f32 %v3096, %v3096
      %v3105 = vmul.f32 %v3097, %v3097
      %v3106 = vmul.f32 %v3098, %v3098
      %v3107 = vmul.f32 %v3099, %v3099
      %v3108 = vmul.f32 %v3100, %v3100
      %v3109 = vmul.f32 %v3101, %v3101
      %v3110 = vmul.f32 %v3102, %v3102
      %v3111 = vmul.f32 %v3103, %v3103
      %v3112 = vsel %vm533, %v3104, 0.0
      %3113 = vadd.xlane.f32.xlu0 %v3112
      %v3114 = vpop.xlane.xlu0 %3113
      %v3115 = vsel %vm533, %v3105, 0.0
      %3116 = vadd.xlane.f32.xlu0 %v3115
      %v3117 = vpop.xlane.xlu0 %3116
      %v3118 = vsel %vm533, %v3106, 0.0
      %3119 = vadd.xlane.f32.xlu0 %v3118
      %v3120 = vpop.xlane.xlu0 %3119
      %v3121 = vsel %vm533, %v3107, 0.0
      %3122 = vadd.xlane.f32.xlu0 %v3121
      %v3123 = vpop.xlane.xlu0 %3122
      %v3124 = vsel %vm533, %v3108, 0.0
      %3125 = vadd.xlane.f32.xlu0 %v3124
      %v3126 = vpop.xlane.xlu0 %3125
      %v3127 = vsel %vm533, %v3109, 0.0
      %3128 = vadd.xlane.f32.xlu0 %v3127
      %v3129 = vpop.xlane.xlu0 %3128
      %v3130 = vsel %vm533, %v3110, 0.0
      %3131 = vadd.xlane.f32.xlu0 %v3130
      %v3132 = vpop.xlane.xlu0 %3131
      %v3133 = vsel %vm533, %v3111, 0.0
      %3134 = vadd.xlane.f32.xlu0 %v3133
      %v3135 = vpop.xlane.xlu0 %3134
      %v3136 = vmul.f32 %v3114, %v558
      %v3137 = vmul.f32 %v3117, %v558
      %v3138 = vmul.f32 %v3120, %v558
      %v3139 = vmul.f32 %v3123, %v558
      %v3140 = vmul.f32 %v3126, %v558
      %v3141 = vmul.f32 %v3129, %v558
      %v3142 = vmul.f32 %v3132, %v558
      %v3143 = vmul.f32 %v3135, %v558
      %v3144 = vadd.f32 %v3136, 1e-05
      %v3145 = vadd.f32 %v3137, 1e-05
      %v3146 = vadd.f32 %v3138, 1e-05
      %v3147 = vadd.f32 %v3139, 1e-05
      %v3148 = vadd.f32 %v3140, 1e-05
      %v3149 = vadd.f32 %v3141, 1e-05
      %v3150 = vadd.f32 %v3142, 1e-05
      %v3151 = vadd.f32 %v3143, 1e-05
      %v3152 = vrsqrt.pop %v3144
      %v3153 = vrsqrt.pop %v3145
      %v3154 = vrsqrt.pop %v3146
      %v3155 = vrsqrt.pop %v3147
      %v3156 = vrsqrt.pop %v3148
      %v3157 = vrsqrt.pop %v3149
      %v3158 = vrsqrt.pop %v3150
      %v3159 = vrsqrt.pop %v3151
      %v3160 = vmul.f32 %v3096, %v3152
      %v3161 = vmul.f32 %v3097, %v3153
      %v3162 = vmul.f32 %v3098, %v3154
      %v3163 = vmul.f32 %v3099, %v3155
      %v3164 = vmul.f32 %v3100, %v3156
      %v3165 = vmul.f32 %v3101, %v3157
      %v3166 = vmul.f32 %v3102, %v3158
      %v3167 = vmul.f32 %v3103, %v3159
      %v3169 = vlaneseq
      %v3170 = vshrl.u32 %v3169, 7
      %v3171 = vsub.s32 0, %v3170
      %v3172 = vrot.slane %v3062, %v3171
      %v3174 = vmul.f32 %v3160, %v3172
      %v3175 = vmul.f32 %v3161, %v3172
      %v3176 = vmul.f32 %v3162, %v3172
      %v3177 = vmul.f32 %v3163, %v3172
      %v3178 = vmul.f32 %v3164, %v3172
      %v3179 = vmul.f32 %v3165, %v3172
      %v3180 = vmul.f32 %v3166, %v3172
      %v3181 = vmul.f32 %v3167, %v3172
      %v3183 = vlaneseq
      %v3184 = vshrl.u32 %v3183, 7
      %v3185 = vsub.s32 0, %v3184
      %v3186 = vrot.slane %v3063, %v3185
      %v3188 = vadd.f32 %v3174, %v3186
      %v3189 = vadd.f32 %v3175, %v3186
      %v3190 = vadd.f32 %v3176, %v3186
      %v3191 = vadd.f32 %v3177, %v3186
      %v3192 = vadd.f32 %v3178, %v3186
      %v3193 = vadd.f32 %v3179, %v3186
      %v3194 = vadd.f32 %v3180, %v3186
      %v3195 = vadd.f32 %v3181, %v3186
      %v3196 = vpack.c.bf16 %v3189, %v3188
      %v3197 = vpack.c.bf16 %v3191, %v3190
      %v3198 = vpack.c.bf16 %v3193, %v3192
      %v3199 = vpack.c.bf16 %v3195, %v3194
      %v3200 = vld [vmem:[%s12] sm:$0xf]
      %v3201 = vld [vmem:[%s12 + $0x4] sm:$0xf]
      %v3202 = vld [vmem:[%s12 + $0x8] sm:$0xf]
      %v3203 = vld [vmem:[%s12 + $0xc] sm:$0xf]
      %v3204 = vld [vmem:[%s13] sm:$0x1]
      %v3206 = vlaneseq
      %v3207 = vshrl.u32 %v3206, 7
      %v3208 = vsub.s32 0, %v3207
      %v3209 = vrot.slane %v3204, %v3208
      %v3215 = vunpack.c.l.b16 %v3200
      %v3216 = vunpack.c.l.b16 %v3201
      %v3217 = vunpack.c.l.b16 %v3202
      %v3218 = vunpack.c.l.b16 %v3203
      %v3219 = vpack.c.b16 %v3216, %v3215
      %v3220 = vpack.c.b16 %v3218, %v3217
      %v3224 = vsel %vm533, %v3196, 0
      %v3227 = vsel %vm533, %v3197, 0
      %v3230 = vsel %vm533, %v3198, 0
      %v3233 = vsel %vm533, %v3199, 0
      %3235 = vmatprep.subr.bf16.mxu0 0
      %3236 = vmatpush1.bf16.msra.mxu0 %v3219
      %3237 = vmatprep.subr.bf16.mxu0 0
      %3238 = vmatpush1.bf16.msra.mxu0 %v3220
      %3239 = vmatprep.subr.bf16.mxu0 0
      %3240 = vmatpush1.bf16.msra.mxu0 0
      %3241 = vmatprep.subr.bf16.mxu0 0
      %3242 = vmatpush1.bf16.msra.mxu0 0
      %3243 = vmatprep.subr.bf16.mxu0 0
      %3244 = vmatpush1.bf16.msra.mxu0 0
      %3245 = vmatprep.subr.bf16.mxu0 0
      %3246 = vmatpush1.bf16.msra.mxu0 0
      %3247 = vmatprep.subr.bf16.mxu0 0
      %3248 = vmatpush1.bf16.msra.mxu0 0
      %3249 = vmatprep.subr.bf16.mxu0 0
      %3250 = vmatpush1.bf16.msra.mxu0 0
      %3251 = vmatprep.subr.bf16.mxu0 0
      %3252 = vmatpush1.bf16.msra.mxu0 0
      %3253 = vmatprep.subr.bf16.mxu0 0
      %3254 = vmatpush1.bf16.msra.mxu0 0
      %3255 = vmatprep.subr.bf16.mxu0 0
      %3256 = vmatpush1.bf16.msra.mxu0 0
      %3257 = vmatprep.subr.bf16.mxu0 0
      %3258 = vmatpush1.bf16.msra.mxu0 0
      %3259 = vmatprep.subr.bf16.mxu0 0
      %3260 = vmatpush1.bf16.msra.mxu0 0
      %3261 = vmatprep.subr.bf16.mxu0 0
      %3262 = vmatpush1.bf16.msra.mxu0 0
      %3263 = vmatprep.subr.bf16.mxu0 0
      %3264 = vmatpush1.bf16.msra.mxu0 0
      %3265 = vmatprep.subr.bf16.mxu0 0
      %3266 = vmatpush1.bf16.msra.mxu0 0
      %3267 = vmatprep.mubr.bf16.mxu0 0
      %3268 = vmatmul.mubr.bf16.gmra.mrb[0].mxu0 %v3224
      %v3269 = vpop.f32.mrb[0].mxu0
      %v3270 = vadd.f32 %v3209, %v3269
      %v3271 = vpop.f32.mrb[0].mxu0
      %v3272 = vpop.f32.mrb[0].mxu0
      %v3273 = vadd.f32 %v3209, %v3272
      %v3274 = vpop.f32.mrb[0].mxu0
      %3275 = vmatprep.mubr.bf16.mxu0 0
      %3276 = vmatmul.mubr.bf16.gmra.mrb[0].mxu0 %v3227
      %v3277 = vpop.f32.mrb[0].mxu0
      %v3278 = vadd.f32 %v3209, %v3277
      %v3279 = vpop.f32.mrb[0].mxu0
      %v3280 = vpop.f32.mrb[0].mxu0
      %v3281 = vadd.f32 %v3209, %v3280
      %v3282 = vpop.f32.mrb[0].mxu0
      %3283 = vmatprep.mubr.bf16.mxu0 0
      %3284 = vmatmul.mubr.bf16.gmra.mrb[0].mxu0 %v3230
      %v3285 = vpop.f32.mrb[0].mxu0
      %v3286 = vadd.f32 %v3209, %v3285
      %v3287 = vpop.f32.mrb[0].mxu0
      %v3288 = vpop.f32.mrb[0].mxu0
      %v3289 = vadd.f32 %v3209, %v3288
      %v3290 = vpop.f32.mrb[0].mxu0
      %3291 = vmatprep.mubr.bf16.mxu0 0
      %3292 = vmatmul.mubr.bf16.gmra.mrb[0].mxu0 %v3233
      %v3293 = vpop.f32.mrb[0].mxu0
      %v3294 = vadd.f32 %v3209, %v3293
      %v3295 = vpop.f32.mrb[0].mxu0
      %v3296 = vpop.f32.mrb[0].mxu0
      %v3297 = vadd.f32 %v3209, %v3296
      %v3298 = vpop.f32.mrb[0].mxu0
      %3299 = vdwg.mxu0
      %v3300 = vmul.f32 %v3270, 0.5
      %v3301 = vmul.f32 %v3273, 0.5
      %v3302 = vmul.f32 %v3278, 0.5
      %v3303 = vmul.f32 %v3281, 0.5
      %v3304 = vmul.f32 %v3286, 0.5
      %v3305 = vmul.f32 %v3289, 0.5
      %v3306 = vmul.f32 %v3294, 0.5
      %v3307 = vmul.f32 %v3297, 0.5
      %v3308 = vmul.f32 %v3270, 0.044715
      %v3309 = vmul.f32 %v3273, 0.044715
      %v3310 = vmul.f32 %v3278, 0.044715
      %v3311 = vmul.f32 %v3281, 0.044715
      %v3312 = vmul.f32 %v3286, 0.044715
      %v3313 = vmul.f32 %v3289, 0.044715
      %v3314 = vmul.f32 %v3294, 0.044715
      %v3315 = vmul.f32 %v3297, 0.044715
      %v3316 = vmul.f32 %v3308, %v3270
      %v3317 = vmul.f32 %v3309, %v3273
      %v3318 = vmul.f32 %v3310, %v3278
      %v3319 = vmul.f32 %v3311, %v3281
      %v3320 = vmul.f32 %v3312, %v3286
      %v3321 = vmul.f32 %v3313, %v3289
      %v3322 = vmul.f32 %v3314, %v3294
      %v3323 = vmul.f32 %v3315, %v3297
      %v3324 = vmul.f32 %v3316, %v3270
      %v3325 = vmul.f32 %v3317, %v3273
      %v3326 = vmul.f32 %v3318, %v3278
      %v3327 = vmul.f32 %v3319, %v3281
      %v3328 = vmul.f32 %v3320, %v3286
      %v3329 = vmul.f32 %v3321, %v3289
      %v3330 = vmul.f32 %v3322, %v3294
      %v3331 = vmul.f32 %v3323, %v3297
      %v3332 = vadd.f32 %v3270, %v3324
      %v3333 = vadd.f32 %v3273, %v3325
      %v3334 = vadd.f32 %v3278, %v3326
      %v3335 = vadd.f32 %v3281, %v3327
      %v3336 = vadd.f32 %v3286, %v3328
      %v3337 = vadd.f32 %v3289, %v3329
      %v3338 = vadd.f32 %v3294, %v3330
      %v3339 = vadd.f32 %v3297, %v3331
      %v3340 = vmul.f32 %v3332, 0.7978846
      %v3341 = vmul.f32 %v3333, 0.7978846
      %v3342 = vmul.f32 %v3334, 0.7978846
      %v3343 = vmul.f32 %v3335, 0.7978846
      %v3344 = vmul.f32 %v3336, 0.7978846
      %v3345 = vmul.f32 %v3337, 0.7978846
      %v3346 = vmul.f32 %v3338, 0.7978846
      %v3347 = vmul.f32 %v3339, 0.7978846
      %v3348 = vtanh.pop %v3340
      %v3349 = vtanh.pop %v3341
      %v3350 = vtanh.pop %v3342
      %v3351 = vtanh.pop %v3343
      %v3352 = vtanh.pop %v3344
      %v3353 = vtanh.pop %v3345
      %v3354 = vtanh.pop %v3346
      %v3355 = vtanh.pop %v3347
      %v3356 = vadd.f32 %v3348, 1.0
      %v3357 = vadd.f32 %v3349, 1.0
      %v3358 = vadd.f32 %v3350, 1.0
      %v3359 = vadd.f32 %v3351, 1.0
      %v3360 = vadd.f32 %v3352, 1.0
      %v3361 = vadd.f32 %v3353, 1.0
      %v3362 = vadd.f32 %v3354, 1.0
      %v3363 = vadd.f32 %v3355, 1.0
      %v3364 = vmul.f32 %v3300, %v3356
      %v3365 = vmul.f32 %v3301, %v3357
      %v3366 = vmul.f32 %v3302, %v3358
      %v3367 = vmul.f32 %v3303, %v3359
      %v3368 = vmul.f32 %v3304, %v3360
      %v3369 = vmul.f32 %v3305, %v3361
      %v3370 = vmul.f32 %v3306, %v3362
      %v3371 = vmul.f32 %v3307, %v3363
      %v3372 = vpack.c.bf16 %v3365, %v3364
      %v3373 = vpack.c.bf16 %v3367, %v3366
      %v3374 = vpack.c.bf16 %v3369, %v3368
      %v3375 = vpack.c.bf16 %v3371, %v3370
      %v3376 = vld [vmem:[%s14] sm:$0xf]
      %v3377 = vld [vmem:[%s14 + $0x4] sm:$0xf]
      %v3378 = vld [vmem:[%s14 + $0x8] sm:$0xf]
      %v3379 = vld [vmem:[%s14 + $0xc] sm:$0xf]
      %v3380 = vld [vmem:[%s14 + $0x10] sm:$0xf]
      %v3381 = vld [vmem:[%s14 + $0x14] sm:$0xf]
      %v3382 = vld [vmem:[%s14 + $0x18] sm:$0xf]
      %v3383 = vld [vmem:[%s14 + $0x1c] sm:$0xf]
      %v3384 = vld [vmem:[%s14 + $0x20] sm:$0xf]
      %v3385 = vld [vmem:[%s14 + $0x24] sm:$0xf]
      %v3386 = vld [vmem:[%s14 + $0x28] sm:$0xf]
      %v3387 = vld [vmem:[%s14 + $0x2c] sm:$0xf]
      %v3388 = vld [vmem:[%s14 + $0x30] sm:$0xf]
      %v3389 = vld [vmem:[%s14 + $0x34] sm:$0xf]
      %v3390 = vld [vmem:[%s14 + $0x38] sm:$0xf]
      %v3391 = vld [vmem:[%s14 + $0x3c] sm:$0xf]
      %v3392 = vld [vmem:[%s15] sm:$0x1]
      %v3394 = vlaneseq
      %v3395 = vshrl.u32 %v3394, 7
      %v3396 = vsub.s32 0, %v3395
      %v3397 = vrot.slane %v3392, %v3396
      %v3415 = vunpack.c.l.b16 %v3376
      %v3416 = vunpack.c.l.b16 %v3377
      %v3417 = vunpack.c.l.b16 %v3378
      %v3418 = vunpack.c.l.b16 %v3379
      %v3419 = vunpack.c.l.b16 %v3380
      %v3420 = vunpack.c.l.b16 %v3381
      %v3421 = vunpack.c.l.b16 %v3382
      %v3422 = vunpack.c.l.b16 %v3383
      %v3423 = vunpack.c.l.b16 %v3384
      %v3424 = vunpack.c.l.b16 %v3385
      %v3425 = vunpack.c.l.b16 %v3386
      %v3426 = vunpack.c.l.b16 %v3387
      %v3427 = vunpack.c.l.b16 %v3388
      %v3428 = vunpack.c.l.b16 %v3389
      %v3429 = vunpack.c.l.b16 %v3390
      %v3430 = vunpack.c.l.b16 %v3391
      %v3431 = vpack.c.b16 %v3416, %v3415
      %v3432 = vpack.c.b16 %v3418, %v3417
      %v3433 = vpack.c.b16 %v3420, %v3419
      %v3434 = vpack.c.b16 %v3422, %v3421
      %v3435 = vpack.c.b16 %v3424, %v3423
      %v3436 = vpack.c.b16 %v3426, %v3425
      %v3437 = vpack.c.b16 %v3428, %v3427
      %v3438 = vpack.c.b16 %v3430, %v3429
      %3447 = vmatprep.subr.bf16.mxu0 0
      %3448 = vmatpush1.bf16.msra.mxu0 %v3431
      %3449 = vmatprep.subr.bf16.mxu0 0
      %3450 = vmatpush1.bf16.msra.mxu0 %v3432
      %3451 = vmatprep.subr.bf16.mxu0 0
      %3452 = vmatpush1.bf16.msra.mxu0 %v3433
      %3453 = vmatprep.subr.bf16.mxu0 0
      %3454 = vmatpush1.bf16.msra.mxu0 %v3434
      %3455 = vmatprep.subr.bf16.mxu0 0
      %3456 = vmatpush1.bf16.msra.mxu0 %v3435
      %3457 = vmatprep.subr.bf16.mxu0 0
      %3458 = vmatpush1.bf16.msra.mxu0 %v3436
      %3459 = vmatprep.subr.bf16.mxu0 0
      %3460 = vmatpush1.bf16.msra.mxu0 %v3437
      %3461 = vmatprep.subr.bf16.mxu0 0
      %3462 = vmatpush1.bf16.msra.mxu0 %v3438
      %3463 = vmatprep.subr.bf16.mxu0 0
      %3464 = vmatpush1.bf16.msra.mxu0 0
      %3465 = vmatprep.subr.bf16.mxu0 0
      %3466 = vmatpush1.bf16.msra.mxu0 0
      %3467 = vmatprep.subr.bf16.mxu0 0
      %3468 = vmatpush1.bf16.msra.mxu0 0
      %3469 = vmatprep.subr.bf16.mxu0 0
      %3470 = vmatpush1.bf16.msra.mxu0 0
      %3471 = vmatprep.subr.bf16.mxu0 0
      %3472 = vmatpush1.bf16.msra.mxu0 0
      %3473 = vmatprep.subr.bf16.mxu0 0
      %3474 = vmatpush1.bf16.msra.mxu0 0
      %3475 = vmatprep.subr.bf16.mxu0 0
      %3476 = vmatpush1.bf16.msra.mxu0 0
      %3477 = vmatprep.subr.bf16.mxu0 0
      %3478 = vmatpush1.bf16.msra.mxu0 0
      %3479 = vmatprep.mubr.bf16.mxu0 0
      %3480 = vmatmul.mubr.bf16.gmra.mrb[0].mxu0 %v3372
      %v3481 = vpop.f32.mrb[0].mxu0
      %v3482 = vadd.f32 %v3397, %v3481
      %v3483 = vpop.f32.mrb[0].mxu0
      %v3484 = vpop.f32.mrb[0].mxu0
      %v3485 = vadd.f32 %v3397, %v3484
      %v3486 = vpop.f32.mrb[0].mxu0
      %3487 = vmatprep.mubr.bf16.mxu0 0
      %3488 = vmatmul.mubr.bf16.gmra.mrb[0].mxu0 %v3373
      %v3489 = vpop.f32.mrb[0].mxu0
      %v3490 = vadd.f32 %v3397, %v3489
      %v3491 = vpop.f32.mrb[0].mxu0
      %v3492 = vpop.f32.mrb[0].mxu0
      %v3493 = vadd.f32 %v3397, %v3492
      %v3494 = vpop.f32.mrb[0].mxu0
      %3495 = vmatprep.mubr.bf16.mxu0 0
      %3496 = vmatmul.mubr.bf16.gmra.mrb[0].mxu0 %v3374
      %v3497 = vpop.f32.mrb[0].mxu0
      %v3498 = vadd.f32 %v3397, %v3497
      %v3499 = vpop.f32.mrb[0].mxu0
      %v3500 = vpop.f32.mrb[0].mxu0
      %v3501 = vadd.f32 %v3397, %v3500
      %v3502 = vpop.f32.mrb[0].mxu0
      %3503 = vmatprep.mubr.bf16.mxu0 0
      %3504 = vmatmul.mubr.bf16.gmra.mrb[0].mxu0 %v3375
      %v3505 = vpop.f32.mrb[0].mxu0
      %v3506 = vadd.f32 %v3397, %v3505
      %v3507 = vpop.f32.mrb[0].mxu0
      %v3508 = vpop.f32.mrb[0].mxu0
      %v3509 = vadd.f32 %v3397, %v3508
      %v3510 = vpop.f32.mrb[0].mxu0
      %3511 = vdwg.mxu0
      %v3512 = vadd.f32 %v3054, %v3482
      %v3513 = vadd.f32 %v3055, %v3485
      %v3514 = vadd.f32 %v3056, %v3490
      %v3515 = vadd.f32 %v3057, %v3493
      %v3516 = vadd.f32 %v3058, %v3498
      %v3517 = vadd.f32 %v3059, %v3501
      %v3518 = vadd.f32 %v3060, %v3506
      %v3519 = vadd.f32 %v3061, %v3509
      %3520 = vst.msk [vmem:[%s521] sm:$0xff] %vm533, %v3512
      %3521 = vst.msk [vmem:[%s521 + $0x8] sm:$0xff] %vm533, %v3513
      %3522 = vst.msk [vmem:[%s521 + $0x10] sm:$0xff] %vm533, %v3514
      %3523 = vst.msk [vmem:[%s521 + $0x18] sm:$0xff] %vm533, %v3515
      %3524 = vst.msk [vmem:[%s521 + $0x20] sm:$0xff] %vm533, %v3516
      %3525 = vst.msk [vmem:[%s521 + $0x28] sm:$0xff] %vm533, %v3517
      %3526 = vst.msk [vmem:[%s521 + $0x30] sm:$0xff] %vm533, %v3518
      %3527 = vst.msk [vmem:[%s521 + $0x38] sm:$0xff] %vm533, %v3519
      %p3528 = scmp.lt.s32.totalorder %s27, 1
      %s3529 = scalar_select %p3528, %s27, 1
      %s3530 = smul.addr %s3529, 8
      %s3531 = smul.addr %s3530, 8
      %s3532 = scalar_lea.vmem %s16, %s3531
      // Predicated region
      $region85: #{tpu_custom_call.1} parent=83 // pred_check
        %p3533 = pneg %p386
      $region86: #{tpu_custom_call.1} parent=83 // pred_check_branch
        %3535 = sbr.rel (%p3533) target = $region88
      $region87: #{tpu_custom_call.1} parent=83 // pred_region
        _
      $region88: #{tpu_custom_call.1} parent=83 // pred_fallthru
        _
    $region84: #{tpu_custom_call.1} parent=5 // pred_fallthru
      _
    %p3536 = scmp.le.s32.totalorder 2, %s22
    // Predicated region
    $region89: #{tpu_custom_call.1} parent=5 // pred_check
      %p3537 = pneg %p3536
    $region90: #{tpu_custom_call.1} parent=5 // pred_check_branch
      %3539 = sbr.rel (%p3537) target = $region92
    $region91: #{tpu_custom_call.1} parent=5 // pred_region
      %s3540 = ssub.s32 %s22, 2
      // Predicated region
      $region93: #{tpu_custom_call.1} parent=91 // pred_check
        %p3541 = pneg %p392
      $region94: #{tpu_custom_call.1} parent=91 // pred_check_branch
        %3543 = sbr.rel (%p3541) target = $region96
      $region95: #{tpu_custom_call.1} parent=91 // pred_region
        %p3544 = scmp.lt.s32.totalorder %s28, 1
        %s3545 = scalar_select %p3544, %s28, 1
        %s3546 = smul.addr %s3545, 8
        %s3547 = smul.addr %s3546, 8
        %s3548 = scalar_lea.vmem %s16, %s3547
      $region96: #{tpu_custom_call.1} parent=91 // pred_fallthru
        _
    $region92: #{tpu_custom_call.1} parent=5 // pred_fallthru
      _
  $region6: #{tpu_custom_call.1} parent=0 // loop_footer
    %s26 = sadd.s32 1, %s22
  $region7: #{tpu_custom_call.1} parent=0 // loop_footer_branch
    %21 = sbr.rel target = $region3
  $region8: #{tpu_custom_call.1} parent=0 // loop_exit
    _

</llo_original>
